<compile_context>
chip_gen: v7x
topology: tpu7x:2x2x1
jax: 0.10.0
libtpu: 0.0.40
codegen_flags: <defaults>
</compile_context>

<pallas_src>
import functools

import jax
import jax.numpy as jnp
from jax import lax
from jax.experimental import pallas as pl
from jax.experimental.pallas import tpu as pltpu

_LANES = 128


def _leaky(x, slope=0.1):
    return jnp.where(x >= 0, x, slope * x)


def _round_up(x, m):
    return (x + m - 1) // m * m


def residual_block_kernel(x_ref, w1_ref, b1_ref, w2s_ref, b2s_ref, o_ref,
                          xpad, h1pad):
    # x_ref  : (1, H, W, Cin)         f32 input image (unpadded channels)
    # w1_ref : (9*CI, CO)             conv1 weights, BN1 scale folded, lane-padded
    # b1_ref : (1, CO)                BN1 shift (lane-padded)
    # w2s_ref: (9*CO + CI, CO)        [conv2 | 1x1 shortcut] weights, scales folded
    # b2s_ref: (1, CO)                BN2 shift + shortcut-BN shift
    # o_ref  : (1, H, W, CO)          lane-dense output (padded channels are 0)
    # xpad   : VMEM (H+2, W+2, CI)    input, 1-px halo + channel padding (mxu dtype)
    # h1pad  : VMEM (H+2, W+2, CO)    conv1 activation with 1-px halo (mxu dtype)
    H, W, Cin = x_ref.shape[1], x_ref.shape[2], x_ref.shape[3]
    CI = xpad.shape[-1]
    CO = h1pad.shape[-1]

    # xpad: zero everything (halo ring + padded channel lanes) then write the
    # Cin real channels of the interior.  Re-zeroed every grid step so the
    # batch axis can stay "parallel" (scratch is per-TensorCore).
    xpad[...] = jnp.zeros_like(xpad)
    xpad[pl.ds(1, H), pl.ds(1, W), pl.ds(0, Cin)] = x_ref[0].astype(xpad.dtype)

    # h1pad: the interior is fully overwritten below (all CO lanes), so only
    # the 1-px halo ring needs zeroing.
    zrow = jnp.zeros((1, W + 2, CO), h1pad.dtype)
    zcol = jnp.zeros((H + 2, 1, CO), h1pad.dtype)
    h1pad[pl.ds(0, 1), :, :] = zrow
    h1pad[pl.ds(H + 1, 1), :, :] = zrow
    h1pad[:, pl.ds(0, 1), :] = zcol
    h1pad[:, pl.ds(W + 1, 1), :] = zcol

    # ---- conv1 as ONE im2col MXU matmul: (H*W, 9*CI) x (9*CI, CO) ----
    # Every tap block is CI (=128k) lanes wide, so the concatenate is free
    # tile-aligned placement and the matmul K/N are multiples of 128.
    xp = xpad[...]
    p1 = jnp.concatenate(
        [xp[ky:ky + H, kx:kx + W, :].reshape(H * W, CI)
         for ky in range(3) for kx in range(3)], axis=1)
    h1 = jnp.dot(p1, w1_ref[...], preferred_element_type=jnp.float32)
    h1 = _leaky(h1 + b1_ref[0])                       # BN1 shift + LeakyReLU (f32 VPU)

    h1pad[pl.ds(1, H), pl.ds(1, W), :] = h1.reshape(H, W, CO).astype(h1pad.dtype)

    # ---- conv2 + 1x1 shortcut fused into ONE matmul ----
    # columns: 9 taps of h1 (9*CO) followed by the centre tap of xpad (CI).
    hp = h1pad[...]
    p2 = jnp.concatenate(
        [hp[ky:ky + H, kx:kx + W, :].reshape(H * W, CO)
         for ky in range(3) for kx in range(3)]
        + [xp[1:1 + H, 1:1 + W, :].reshape(H * W, CI)], axis=1)
    h2 = jnp.dot(p2, w2s_ref[...], preferred_element_type=jnp.float32)

    # Dropout(p=0.1) is identity in inference mode.
    out = _leaky(h2 + b2s_ref[0])                     # combined BN2+shortcut shift (f32)
    # Minor dim stays CO (=128k) -> free reshape, unmasked lane-dense store.
    o_ref[0] = out.reshape(H, W, CO).astype(o_ref.dtype)


@functools.partial(jax.jit, static_argnames=("use_bf16",))
def residual_block(x, w1, s1, b1, w2, s2, b2, ws, ss, bs, *, use_bf16=False):
    """x: (N, H, W, Cin) f32 NHWC.  Returns (N, H, W, Cout) f32.

    w1: (3,3,Cin,Cout) HWIO, w2: (3,3,Cout,Cout) HWIO, ws: (Cin,Cout);
    s*/b* are eval-mode BatchNorm scale/shift vectors of length Cout.
    """
    N, H, W, Cin = x.shape
    Cout = w1.shape[3]
    CI = _round_up(Cin, _LANES)      # lane-padded input channels
    CO = _round_up(Cout, _LANES)     # lane-padded output channels
    mxu_dtype = jnp.bfloat16 if use_bf16 else jnp.float32

    s1 = s1.reshape(-1); b1 = b1.reshape(-1)
    s2 = s2.reshape(-1); b2 = b2.reshape(-1)
    ss = ss.reshape(-1); bs = bs.reshape(-1)

    # Fold eval-mode BN scales into the conv weights (BN == per-channel affine),
    # then zero-pad in/out channels to the 128-lane width so every im2col
    # column block, both matmul K/N dims and the output are lane-tile aligned.
    w1f = jnp.zeros((9, CI, CO), jnp.float32)
    w1f = w1f.at[:, :Cin, :Cout].set(
        (w1 * s1[None, None, None, :]).reshape(9, Cin, Cout))
    w1f = w1f.reshape(9 * CI, CO).astype(mxu_dtype)                # (9*CI, CO)

    w2f = jnp.zeros((9, CO, CO), jnp.float32)
    w2f = w2f.at[:, :Cout, :Cout].set(
        (w2 * s2[None, None, None, :]).reshape(9, Cout, Cout))
    w2f = w2f.reshape(9 * CO, CO)
    wsf = jnp.zeros((CI, CO), jnp.float32).at[:Cin, :Cout].set(ws * ss[None, :])
    w2s = jnp.concatenate([w2f, wsf], axis=0).astype(mxu_dtype)    # (9*CO+CI, CO)

    b1v = jnp.zeros((1, CO), jnp.float32).at[0, :Cout].set(b1)
    b2sv = jnp.zeros((1, CO), jnp.float32).at[0, :Cout].set(b2 + bs)

    wbytes = 2 if use_bf16 else 4
    cost = pl.CostEstimate(
        flops=2 * N * H * W * CO * (9 * CI + 9 * CO + CI),
        transcendentals=0,
        bytes_accessed=(x.size * 4 + N * H * W * CO * 4
                        + (w1f.size + w2s.size) * wbytes
                        + (b1v.size + b2sv.size) * 4),
    )

    grid_spec = pltpu.PrefetchScalarGridSpec(
        num_scalar_prefetch=0,
        grid=(N,),
        in_specs=[
            pl.BlockSpec((1, H, W, Cin), lambda n: (n, 0, 0, 0)),
            pl.BlockSpec((9 * CI, CO), lambda n: (0, 0)),
            pl.BlockSpec((1, CO), lambda n: (0, 0)),
            pl.BlockSpec((9 * CO + CI, CO), lambda n: (0, 0)),
            pl.BlockSpec((1, CO), lambda n: (0, 0)),
        ],
        out_specs=pl.BlockSpec((1, H, W, CO), lambda n: (n, 0, 0, 0)),
        scratch_shapes=[
            pltpu.VMEM((H + 2, W + 2, CI), mxu_dtype),   # bf16 scratch on v6e/v7x
            pltpu.VMEM((H + 2, W + 2, CO), mxu_dtype),
        ],
    )
    out = pl.pallas_call(
        residual_block_kernel,
        out_shape=jax.ShapeDtypeStruct((N, H, W, CO), jnp.float32),
        grid_spec=grid_spec,
        compiler_params=pltpu.CompilerParams(
            dimension_semantics=("parallel",),
            vmem_limit_bytes=32 * 1024 * 1024),
        cost_estimate=cost,
    )(x, w1f, b1v, w2s, b2sv)
    return out[..., :Cout]                    # drop the lane-padding channels


def _bn_scale_shift(gamma, beta, mean, var, eps=1e-5):
    scale = gamma / jnp.sqrt(var + eps)
    shift = beta - mean * scale
    return scale, shift


def _ref_forward(x, w1, s1, b1, w2, s2, b2, ws, ss, bs):
    """Pure-JAX reference (NHWC) for validation."""
    def conv2d(x, w, pad):
        return lax.conv_general_dilated(
            x, w, (1, 1), [(pad, pad), (pad, pad)],
            dimension_numbers=("NHWC", "HWIO", "NHWC"))
    h = conv2d(x, w1, 1) * s1 + b1
    h = _leaky(h)
    h = conv2d(h, w2, 1) * s2 + b2
    sc = conv2d(x, ws.reshape(1, 1, *ws.shape), 0) * ss + bs
    return _leaky(h + sc)


if __name__ == "__main__":
    # Small shapes: batch=2, in_planes=4, out_planes=8, spatial=16, stride=1.
    N, H, W, Cin, Cout = 2, 16, 16, 4, 8

    keys = jax.random.split(jax.random.PRNGKey(0), 8)
    x = jax.random.normal(keys[0], (N, H, W, Cin), jnp.float32)

    w1 = 0.1 * jax.random.normal(keys[1], (3, 3, Cin, Cout), jnp.float32)
    w2 = 0.1 * jax.random.normal(keys[2], (3, 3, Cout, Cout), jnp.float32)
    ws = 0.1 * jax.random.normal(keys[3], (Cin, Cout), jnp.float32)

    def bn_params(k):
        ka, kb, kc, kd = jax.random.split(k, 4)
        gamma = jax.random.uniform(ka, (Cout,), minval=0.5, maxval=1.5)
        beta = 0.1 * jax.random.normal(kb, (Cout,))
        mean = 0.1 * jax.random.normal(kc, (Cout,))
        var = jax.random.uniform(kd, (Cout,), minval=0.5, maxval=1.5)
        return gamma, beta, mean, var

    s1, b1 = _bn_scale_shift(*bn_params(keys[4]))
    s2, b2 = _bn_scale_shift(*bn_params(keys[5]))
    ss, bs = _bn_scale_shift(*bn_params(keys[6]))

    ref = _ref_forward(x, w1, s1, b1, w2, s2, b2, ws, ss, bs)

    # f32 MXU path (tight tolerance).
    out = jax.block_until_ready(
        residual_block(x, w1, s1, b1, w2, s2, b2, ws, ss, bs))
    assert out.shape == (N, H, W, Cout)
    err = float(jnp.max(jnp.abs(out - ref)))
    assert jnp.allclose(out, ref, atol=1e-4, rtol=1e-4), err

    # bf16 MXU-input path (f32 accumulation, bf16 scratch) for v6e/v7x.
    out_bf16 = jax.block_until_ready(
        residual_block(x, w1, s1, b1, w2, s2, b2, ws, ss, bs, use_bf16=True))
    err_bf16 = float(jnp.max(jnp.abs(out_bf16 - ref)))
    assert jnp.allclose(out_bf16, ref, atol=5e-2, rtol=5e-2), err_bf16

    print("KERNEL_OK")
</pallas_src>

<mosaic_0001>
module attributes {stable_mosaic.version = 11 : i64} {
  func.func @residual_block_kernel(%arg0: i32, %arg1: memref<1x16x16x4xf32, #tpu.memory_space<vmem>>, %arg2: memref<1152x128xf32, #tpu.memory_space<vmem>>, %arg3: memref<1x128xf32, #tpu.memory_space<vmem>>, %arg4: memref<1280x128xf32, #tpu.memory_space<vmem>>, %arg5: memref<1x128xf32, #tpu.memory_space<vmem>>, %arg6: memref<1x16x16x128xf32, #tpu.memory_space<vmem>>, %arg7: memref<18x18x128xf32, #tpu.memory_space<vmem>>, %arg8: memref<18x18x128xf32, #tpu.memory_space<vmem>>) attributes {dimension_semantics = [#tpu.dimension_semantics<parallel>], iteration_bounds = array<i64: 2>, scalar_prefetch = 0 : i64, scratch_operands = 2 : i64, tpu.core_type = #tpu.core_type<tc>, window_params = [{transform_indices = @transform_0, window_bounds = array<i64: 1, 16, 16, 4>}, {pipeline_mode = #tpu.pipeline_mode<synchronous>, transform_indices = @transform_1, window_bounds = array<i64: 1152, 128>}, {pipeline_mode = #tpu.pipeline_mode<synchronous>, transform_indices = @transform_2, window_bounds = array<i64: 1, 128>}, {pipeline_mode = #tpu.pipeline_mode<synchronous>, transform_indices = @transform_3, window_bounds = array<i64: 1280, 128>}, {pipeline_mode = #tpu.pipeline_mode<synchronous>, transform_indices = @transform_4, window_bounds = array<i64: 1, 128>}, {transform_indices = @transform_5, window_bounds = array<i64: 1, 16, 16, 128>}]} {
    %cst = arith.constant 0.000000e+00 : f32
    %0 = vector.broadcast %cst : f32 to vector<18x18x128xf32>
    %c0 = arith.constant 0 : index
    %c0_0 = arith.constant 0 : index
    %c0_1 = arith.constant 0 : index
    %1 = vector.load %arg7[%c0, %c0_0, %c0_1] : memref<18x18x128xf32, #tpu.memory_space<vmem>>, vector<18x18x128xf32>
    tpu.vector_store %arg7[%c0, %c0_0, %c0_1], %0 {strides = array<i32>} : memref<18x18x128xf32, #tpu.memory_space<vmem>>, vector<18x18x128xf32>,
    %c0_2 = arith.constant 0 : index
    %c0_3 = arith.constant 0 : index
    %c0_4 = arith.constant 0 : index
    %c0_5 = arith.constant 0 : index
    %2 = vector.load %arg1[%c0_2, %c0_3, %c0_4, %c0_5] : memref<1x16x16x4xf32, #tpu.memory_space<vmem>>, vector<1x16x16x4xf32>
    %3 = vector.shape_cast %2 : vector<1x16x16x4xf32> to vector<16x16x4xf32>
    %c1 = arith.constant 1 : index
    %c1_6 = arith.constant 1 : index
    %c0_7 = arith.constant 0 : index
    %4 = vector.load %arg7[%c1, %c1_6, %c0_7] : memref<18x18x128xf32, #tpu.memory_space<vmem>>, vector<16x16x4xf32>
    tpu.vector_store %arg7[%c1, %c1_6, %c0_7], %3 {strides = array<i32>} : memref<18x18x128xf32, #tpu.memory_space<vmem>>, vector<16x16x4xf32>,
    %cst_8 = arith.constant 0.000000e+00 : f32
    %5 = vector.broadcast %cst_8 : f32 to vector<1x18x128xf32>
    %cst_9 = arith.constant 0.000000e+00 : f32
    %6 = vector.broadcast %cst_9 : f32 to vector<18x1x128xf32>
    %c0_10 = arith.constant 0 : index
    %c0_11 = arith.constant 0 : index
    %c0_12 = arith.constant 0 : index
    %7 = vector.load %arg8[%c0_10, %c0_11, %c0_12] : memref<18x18x128xf32, #tpu.memory_space<vmem>>, vector<1x18x128xf32>
    tpu.vector_store %arg8[%c0_10, %c0_11, %c0_12], %5 {strides = array<i32>} : memref<18x18x128xf32, #tpu.memory_space<vmem>>, vector<1x18x128xf32>,
    %c17 = arith.constant 17 : index
    %c0_13 = arith.constant 0 : index
    %c0_14 = arith.constant 0 : index
    %8 = vector.load %arg8[%c17, %c0_13, %c0_14] : memref<18x18x128xf32, #tpu.memory_space<vmem>>, vector<1x18x128xf32>
    tpu.vector_store %arg8[%c17, %c0_13, %c0_14], %5 {strides = array<i32>} : memref<18x18x128xf32, #tpu.memory_space<vmem>>, vector<1x18x128xf32>,
    %c0_15 = arith.constant 0 : index
    %c0_16 = arith.constant 0 : index
    %c0_17 = arith.constant 0 : index
    %9 = vector.load %arg8[%c0_15, %c0_16, %c0_17] : memref<18x18x128xf32, #tpu.memory_space<vmem>>, vector<18x1x128xf32>
    tpu.vector_store %arg8[%c0_15, %c0_16, %c0_17], %6 {strides = array<i32>} : memref<18x18x128xf32, #tpu.memory_space<vmem>>, vector<18x1x128xf32>,
    %c0_18 = arith.constant 0 : index
    %c17_19 = arith.constant 17 : index
    %c0_20 = arith.constant 0 : index
    %10 = vector.load %arg8[%c0_18, %c17_19, %c0_20] : memref<18x18x128xf32, #tpu.memory_space<vmem>>, vector<18x1x128xf32>
    tpu.vector_store %arg8[%c0_18, %c17_19, %c0_20], %6 {strides = array<i32>} : memref<18x18x128xf32, #tpu.memory_space<vmem>>, vector<18x1x128xf32>,
    %c0_21 = arith.constant 0 : index
    %c0_22 = arith.constant 0 : index
    %c0_23 = arith.constant 0 : index
    %11 = vector.load %arg7[%c0_21, %c0_22, %c0_23] : memref<18x18x128xf32, #tpu.memory_space<vmem>>, vector<18x18x128xf32>
    %12 = vector.extract_strided_slice %11 {offsets = [0, 0, 0], sizes = [16, 16, 128], strides = [1, 1, 1]} : vector<18x18x128xf32> to vector<16x16x128xf32>
    %13 = vector.shape_cast %12 : vector<16x16x128xf32> to vector<256x128xf32>
    %14 = vector.extract_strided_slice %11 {offsets = [0, 1, 0], sizes = [16, 16, 128], strides = [1, 1, 1]} : vector<18x18x128xf32> to vector<16x16x128xf32>
    %15 = vector.shape_cast %14 : vector<16x16x128xf32> to vector<256x128xf32>
    %16 = vector.extract_strided_slice %11 {offsets = [0, 2, 0], sizes = [16, 16, 128], strides = [1, 1, 1]} : vector<18x18x128xf32> to vector<16x16x128xf32>
    %17 = vector.shape_cast %16 : vector<16x16x128xf32> to vector<256x128xf32>
    %18 = vector.extract_strided_slice %11 {offsets = [1, 0, 0], sizes = [16, 16, 128], strides = [1, 1, 1]} : vector<18x18x128xf32> to vector<16x16x128xf32>
    %19 = vector.shape_cast %18 : vector<16x16x128xf32> to vector<256x128xf32>
    %20 = vector.extract_strided_slice %11 {offsets = [1, 1, 0], sizes = [16, 16, 128], strides = [1, 1, 1]} : vector<18x18x128xf32> to vector<16x16x128xf32>
    %21 = vector.shape_cast %20 : vector<16x16x128xf32> to vector<256x128xf32>
    %22 = vector.extract_strided_slice %11 {offsets = [1, 2, 0], sizes = [16, 16, 128], strides = [1, 1, 1]} : vector<18x18x128xf32> to vector<16x16x128xf32>
    %23 = vector.shape_cast %22 : vector<16x16x128xf32> to vector<256x128xf32>
    %24 = vector.extract_strided_slice %11 {offsets = [2, 0, 0], sizes = [16, 16, 128], strides = [1, 1, 1]} : vector<18x18x128xf32> to vector<16x16x128xf32>
    %25 = vector.shape_cast %24 : vector<16x16x128xf32> to vector<256x128xf32>
    %26 = vector.extract_strided_slice %11 {offsets = [2, 1, 0], sizes = [16, 16, 128], strides = [1, 1, 1]} : vector<18x18x128xf32> to vector<16x16x128xf32>
    %27 = vector.shape_cast %26 : vector<16x16x128xf32> to vector<256x128xf32>
    %28 = vector.extract_strided_slice %11 {offsets = [2, 2, 0], sizes = [16, 16, 128], strides = [1, 1, 1]} : vector<18x18x128xf32> to vector<16x16x128xf32>
    %29 = vector.shape_cast %28 : vector<16x16x128xf32> to vector<256x128xf32>
    %30 = tpu.concatenate %13, %15, %17, %19, %21, %23, %25, %27, %29 in 1 : vector<256x128xf32>, vector<256x128xf32>, vector<256x128xf32>, vector<256x128xf32>, vector<256x128xf32>, vector<256x128xf32>, vector<256x128xf32>, vector<256x128xf32>, vector<256x128xf32> -> vector<256x1152xf32>
    %c0_24 = arith.constant 0 : index
    %c0_25 = arith.constant 0 : index
    %31 = vector.load %arg2[%c0_24, %c0_25] : memref<1152x128xf32, #tpu.memory_space<vmem>>, vector<1152x128xf32>
    %cst_26 = arith.constant dense<0.000000e+00> : vector<256x128xf32>
    %32 = tpu.matmul %30, %31, %cst_26 {dimension_numbers = #tpu.dot_dimension_numbers<[1], [0], [0], [1], [0, 0, 1, 1], [], []>} : vector<256x1152xf32>, vector<1152x128xf32>, vector<256x128xf32> -> vector<256x128xf32>
    %c0_27 = arith.constant 0 : index
    %c0_28 = arith.constant 0 : index
    %33 = vector.load %arg3[%c0_27, %c0_28] : memref<1x128xf32, #tpu.memory_space<vmem>>, vector<1x128xf32>
    %34 = vector.shape_cast %33 : vector<1x128xf32> to vector<128xf32>
    %35 = vector.shape_cast %34 : vector<128xf32> to vector<1x128xf32>
    %36 = vector.broadcast %35 : vector<1x128xf32> to vector<256x128xf32>
    %37 = arith.addf %32, %36 : vector<256x128xf32>
    %cst_29 = arith.constant 0.000000e+00 : f32
    %38 = vector.broadcast %cst_29 : f32 to vector<256x128xf32>
    %39 = arith.cmpf oge, %37, %38 : vector<256x128xf32>
    %cst_30 = arith.constant 1.000000e-01 : f32
    %40 = vector.broadcast %cst_30 : f32 to vector<256x128xf32>
    %41 = arith.mulf %40, %37 : vector<256x128xf32>
    %42 = arith.select %39, %37, %41 : vector<256x128xi1>, vector<256x128xf32>
    %43 = vector.shape_cast %42 : vector<256x128xf32> to vector<16x16x128xf32>
    %c1_31 = arith.constant 1 : index
    %c1_32 = arith.constant 1 : index
    %c0_33 = arith.constant 0 : index
    %44 = vector.load %arg8[%c1_31, %c1_32, %c0_33] : memref<18x18x128xf32, #tpu.memory_space<vmem>>, vector<16x16x128xf32>
    tpu.vector_store %arg8[%c1_31, %c1_32, %c0_33], %43 {strides = array<i32>} : memref<18x18x128xf32, #tpu.memory_space<vmem>>, vector<16x16x128xf32>,
    %c0_34 = arith.constant 0 : index
    %c0_35 = arith.constant 0 : index
    %c0_36 = arith.constant 0 : index
    %45 = vector.load %arg8[%c0_34, %c0_35, %c0_36] : memref<18x18x128xf32, #tpu.memory_space<vmem>>, vector<18x18x128xf32>
    %46 = vector.extract_strided_slice %45 {offsets = [0, 0, 0], sizes = [16, 16, 128], strides = [1, 1, 1]} : vector<18x18x128xf32> to vector<16x16x128xf32>
    %47 = vector.shape_cast %46 : vector<16x16x128xf32> to vector<256x128xf32>
    %48 = vector.extract_strided_slice %45 {offsets = [0, 1, 0], sizes = [16, 16, 128], strides = [1, 1, 1]} : vector<18x18x128xf32> to vector<16x16x128xf32>
    %49 = vector.shape_cast %48 : vector<16x16x128xf32> to vector<256x128xf32>
    %50 = vector.extract_strided_slice %45 {offsets = [0, 2, 0], sizes = [16, 16, 128], strides = [1, 1, 1]} : vector<18x18x128xf32> to vector<16x16x128xf32>
    %51 = vector.shape_cast %50 : vector<16x16x128xf32> to vector<256x128xf32>
    %52 = vector.extract_strided_slice %45 {offsets = [1, 0, 0], sizes = [16, 16, 128], strides = [1, 1, 1]} : vector<18x18x128xf32> to vector<16x16x128xf32>
    %53 = vector.shape_cast %52 : vector<16x16x128xf32> to vector<256x128xf32>
    %54 = vector.extract_strided_slice %45 {offsets = [1, 1, 0], sizes = [16, 16, 128], strides = [1, 1, 1]} : vector<18x18x128xf32> to vector<16x16x128xf32>
    %55 = vector.shape_cast %54 : vector<16x16x128xf32> to vector<256x128xf32>
    %56 = vector.extract_strided_slice %45 {offsets = [1, 2, 0], sizes = [16, 16, 128], strides = [1, 1, 1]} : vector<18x18x128xf32> to vector<16x16x128xf32>
    %57 = vector.shape_cast %56 : vector<16x16x128xf32> to vector<256x128xf32>
    %58 = vector.extract_strided_slice %45 {offsets = [2, 0, 0], sizes = [16, 16, 128], strides = [1, 1, 1]} : vector<18x18x128xf32> to vector<16x16x128xf32>
    %59 = vector.shape_cast %58 : vector<16x16x128xf32> to vector<256x128xf32>
    %60 = vector.extract_strided_slice %45 {offsets = [2, 1, 0], sizes = [16, 16, 128], strides = [1, 1, 1]} : vector<18x18x128xf32> to vector<16x16x128xf32>
    %61 = vector.shape_cast %60 : vector<16x16x128xf32> to vector<256x128xf32>
    %62 = vector.extract_strided_slice %45 {offsets = [2, 2, 0], sizes = [16, 16, 128], strides = [1, 1, 1]} : vector<18x18x128xf32> to vector<16x16x128xf32>
    %63 = vector.shape_cast %62 : vector<16x16x128xf32> to vector<256x128xf32>
    %64 = vector.extract_strided_slice %11 {offsets = [1, 1, 0], sizes = [16, 16, 128], strides = [1, 1, 1]} : vector<18x18x128xf32> to vector<16x16x128xf32>
    %65 = vector.shape_cast %64 : vector<16x16x128xf32> to vector<256x128xf32>
    %66 = tpu.concatenate %47, %49, %51, %53, %55, %57, %59, %61, %63, %65 in 1 : vector<256x128xf32>, vector<256x128xf32>, vector<256x128xf32>, vector<256x128xf32>, vector<256x128xf32>, vector<256x128xf32>, vector<256x128xf32>, vector<256x128xf32>, vector<256x128xf32>, vector<256x128xf32> -> vector<256x1280xf32>
    %c0_37 = arith.constant 0 : index
    %c0_38 = arith.constant 0 : index
    %67 = vector.load %arg4[%c0_37, %c0_38] : memref<1280x128xf32, #tpu.memory_space<vmem>>, vector<1280x128xf32>
    %cst_39 = arith.constant dense<0.000000e+00> : vector<256x128xf32>
    %68 = tpu.matmul %66, %67, %cst_39 {dimension_numbers = #tpu.dot_dimension_numbers<[1], [0], [0], [1], [0, 0, 1, 1], [], []>} : vector<256x1280xf32>, vector<1280x128xf32>, vector<256x128xf32> -> vector<256x128xf32>
    %c0_40 = arith.constant 0 : index
    %c0_41 = arith.constant 0 : index
    %69 = vector.load %arg5[%c0_40, %c0_41] : memref<1x128xf32, #tpu.memory_space<vmem>>, vector<1x128xf32>
    %70 = vector.shape_cast %69 : vector<1x128xf32> to vector<128xf32>
    %71 = vector.shape_cast %70 : vector<128xf32> to vector<1x128xf32>
    %72 = vector.broadcast %71 : vector<1x128xf32> to vector<256x128xf32>
    %73 = arith.addf %68, %72 : vector<256x128xf32>
    %cst_42 = arith.constant 0.000000e+00 : f32
    %74 = vector.broadcast %cst_42 : f32 to vector<256x128xf32>
    %75 = arith.cmpf oge, %73, %74 : vector<256x128xf32>
    %cst_43 = arith.constant 1.000000e-01 : f32
    %76 = vector.broadcast %cst_43 : f32 to vector<256x128xf32>
    %77 = arith.mulf %76, %73 : vector<256x128xf32>
    %78 = arith.select %75, %73, %77 : vector<256x128xi1>, vector<256x128xf32>
    %79 = vector.shape_cast %78 : vector<256x128xf32> to vector<16x16x128xf32>
    %c0_44 = arith.constant 0 : index
    %c0_45 = arith.constant 0 : index
    %c0_46 = arith.constant 0 : index
    %c0_47 = arith.constant 0 : index
    %80 = vector.load %arg6[%c0_44, %c0_45, %c0_46, %c0_47] : memref<1x16x16x128xf32, #tpu.memory_space<vmem>>, vector<1x16x16x128xf32>
    %81 = vector.shape_cast %80 : vector<1x16x16x128xf32> to vector<16x16x128xf32>
    %82 = vector.shape_cast %79 : vector<16x16x128xf32> to vector<1x16x16x128xf32>
    tpu.vector_store %arg6[%c0_44, %c0_45, %c0_46, %c0_47], %82 {strides = array<i32>} : memref<1x16x16x128xf32, #tpu.memory_space<vmem>>, vector<1x16x16x128xf32>,
    return
  }
  func.func @transform_0(%arg0: i32) -> (i32, i32, i32, i32) {
    %c0_i32 = arith.constant 0 : i32
    %c0_i32_0 = arith.constant 0 : i32
    %c0_i32_1 = arith.constant 0 : i32
    %c0_i32_2 = arith.constant 0 : i32
    return %arg0, %c0_i32, %c0_i32_0, %c0_i32_1 : i32, i32, i32, i32
  }
  func.func @transform_1(%arg0: i32) -> (i32, i32) {
    %c0_i32 = arith.constant 0 : i32
    %c0_i32_0 = arith.constant 0 : i32
    %c0_i32_1 = arith.constant 0 : i32
    return %c0_i32, %c0_i32_0 : i32, i32
  }
  func.func @transform_2(%arg0: i32) -> (i32, i32) {
    %c0_i32 = arith.constant 0 : i32
    %c0_i32_0 = arith.constant 0 : i32
    %c0_i32_1 = arith.constant 0 : i32
    return %c0_i32, %c0_i32_0 : i32, i32
  }
  func.func @transform_3(%arg0: i32) -> (i32, i32) {
    %c0_i32 = arith.constant 0 : i32
    %c0_i32_0 = arith.constant 0 : i32
    %c0_i32_1 = arith.constant 0 : i32
    return %c0_i32, %c0_i32_0 : i32, i32
  }
  func.func @transform_4(%arg0: i32) -> (i32, i32) {
    %c0_i32 = arith.constant 0 : i32
    %c0_i32_0 = arith.constant 0 : i32
    %c0_i32_1 = arith.constant 0 : i32
    return %c0_i32, %c0_i32_0 : i32, i32
  }
  func.func @transform_5(%arg0: i32) -> (i32, i32, i32, i32) {
    %c0_i32 = arith.constant 0 : i32
    %c0_i32_0 = arith.constant 0 : i32
    %c0_i32_1 = arith.constant 0 : i32
    %c0_i32_2 = arith.constant 0 : i32
    return %arg0, %c0_i32, %c0_i32_0, %c0_i32_1 : i32, i32, i32, i32
  }
}

</mosaic_0001>

<llo_original>
// kernel: residual_block.1
$region0: #{residual_block.1}
  #allocation0 [shape = 'u32[]', space=smem, size = 0x4, offset = 0x4, fixed_abs, tag = 'smem constant byte address 0x4 - core index']
  #allocation1 [shape = 'u32[144,128]{1,0:T(1,128)}', space=vmem, size = 0x12000, scoped, tag = 'internal scratch']
  #allocation2 [shape = 'f32[18,18,128]{2,1,0:T(8,128)}', space=vmem, size = 0x36000, scoped, tag = 'scratch operand']
  #allocation3 [shape = 'f32[18,18,128]{2,1,0:T(8,128)}', space=vmem, size = 0x36000, scoped, tag = 'scratch operand']
  %s0 = inlined_call_operand.vmem [shape: f32[2,16,16,4], index: 0, kind: input, shape index: {}]
  %s1 = inlined_call_operand.vmem [shape: f32[1152,128], index: 1, kind: input, shape index: {}]
  %s2 = inlined_call_operand.vmem [shape: f32[1,128], index: 2, kind: input, shape index: {}]
  %s3 = inlined_call_operand.vmem [shape: f32[1280,128], index: 3, kind: input, shape index: {}]
  %s4 = inlined_call_operand.vmem [shape: f32[1,128], index: 4, kind: input, shape index: {}]
  %s5 = inlined_call_operand.vmem [shape: f32[2,16,16,128], index: 5, kind: output, shape index: {}]
  %s6 = sld [smem:[#allocation0]]
  $region53: #{residual_block.1} parent=0
    _
  %s8 = ssub.s32 1, %s6
  %s9 = scalar_select 0, %s8, %s6
  loop: start=0, step=1, limit=4
  $region2: #{residual_block.1} parent=0 // loop_pre_header
    _
  $region3: #{residual_block.1} parent=0 // loop_header
    %s11 = sphi 0, %s15
    %p12 = scmp.ge.s32.totalorder %s11, 4
    %s21 = sphi 0, %s23
    %s24 = sphi 0, %s21
    %s25 = sphi 0, %s24
    %s41 = sphi 0, %s25
    %s45 = sphi 0, %s45
    %s47 = sphi 0, %s45
    %s48 = sphi 0, %s47
    %s62 = sphi 0, %s48
    %s66 = sphi 0, %s66
    %s68 = sphi 0, %s66
    %s69 = sphi 0, %s68
    %s83 = sphi 0, %s69
    %s87 = sphi 0, %s87
    %s89 = sphi 0, %s87
    %s90 = sphi 0, %s89
    %s104 = sphi 0, %s90
    %s108 = sphi 0, %s108
    %s110 = sphi 0, %s108
    %s111 = sphi 0, %s110
    %s125 = sphi 0, %s111
    %s131 = sphi 0, %s133
    %s134 = sphi 0, %s131
    %s135 = sphi 0, %s134
    %s151 = sphi 0, %s135
  $region4: #{residual_block.1} parent=0 // loop_header_branch
    %14 = sbr.rel (%p12) target = $region8
  $region5: #{residual_block.1} parent=0 // loop_body
    %s16 = ssub.s32 %s11, 1
    %s17 = ssub.s32 %s11, 2
    %s18 = sadd.s32 %s11, 1
    %s19 = ssub.s32 %s11, %s18
    %p20 = scmp.eq.s32.totalorder %s19, 0
    %s22 = sadd.s32 %s21, 1
    %s23 = scalar_select %p20, %s21, %s22
    %p26 = pneg %p20
    %p27 = scmp.eq.s32.totalorder %s11, 1
    %p28 = por %p26, %p27
    %p29 = scmp.ne.s32.totalorder %s21, %s24
    %p30 = scmp.eq.s32.totalorder %s11, 0
    %p31 = por %p29, %p30
    %p32 = scmp.ne.s32.totalorder %s21, %s24
    %p33 = scmp.eq.s32.totalorder %s16, 1
    %p34 = por %p32, %p33
    %p35 = scmp.ne.s32.totalorder %s24, %s25
    %p36 = scmp.eq.s32.totalorder %s16, 0
    %p37 = por %p35, %p36
    %p38 = scmp.ne.s32.totalorder %s24, %s25
    %p39 = scmp.eq.s32.totalorder %s17, 1
    %p40 = por %p38, %p39
    %p42 = scmp.ne.s32.totalorder %s25, %s41
    %p43 = scmp.eq.s32.totalorder %s17, 0
    %p44 = por %p42, %p43
    %s46 = sadd.s32 %s45, 1
    %p49 = scmp.eq.s32.totalorder %s11, 1
    %p50 = scmp.ne.s32.totalorder %s45, %s47
    %p51 = scmp.eq.s32.totalorder %s11, 0
    %p52 = por %p50, %p51
    %p53 = scmp.ne.s32.totalorder %s45, %s47
    %p54 = scmp.eq.s32.totalorder %s16, 1
    %p55 = por %p53, %p54
    %p56 = scmp.ne.s32.totalorder %s47, %s48
    %p57 = scmp.eq.s32.totalorder %s16, 0
    %p58 = por %p56, %p57
    %p59 = scmp.ne.s32.totalorder %s47, %s48
    %p60 = scmp.eq.s32.totalorder %s17, 1
    %p61 = por %p59, %p60
    %p63 = scmp.ne.s32.totalorder %s48, %s62
    %p64 = scmp.eq.s32.totalorder %s17, 0
    %p65 = por %p63, %p64
    %s67 = sadd.s32 %s66, 1
    %p70 = scmp.eq.s32.totalorder %s11, 1
    %p71 = scmp.ne.s32.totalorder %s66, %s68
    %p72 = scmp.eq.s32.totalorder %s11, 0
    %p73 = por %p71, %p72
    %p74 = scmp.ne.s32.totalorder %s66, %s68
    %p75 = scmp.eq.s32.totalorder %s16, 1
    %p76 = por %p74, %p75
    %p77 = scmp.ne.s32.totalorder %s68, %s69
    %p78 = scmp.eq.s32.totalorder %s16, 0
    %p79 = por %p77, %p78
    %p80 = scmp.ne.s32.totalorder %s68, %s69
    %p81 = scmp.eq.s32.totalorder %s17, 1
    %p82 = por %p80, %p81
    %p84 = scmp.ne.s32.totalorder %s69, %s83
    %p85 = scmp.eq.s32.totalorder %s17, 0
    %p86 = por %p84, %p85
    %s88 = sadd.s32 %s87, 1
    %p91 = scmp.eq.s32.totalorder %s11, 1
    %p92 = scmp.ne.s32.totalorder %s87, %s89
    %p93 = scmp.eq.s32.totalorder %s11, 0
    %p94 = por %p92, %p93
    %p95 = scmp.ne.s32.totalorder %s87, %s89
    %p96 = scmp.eq.s32.totalorder %s16, 1
    %p97 = por %p95, %p96
    %p98 = scmp.ne.s32.totalorder %s89, %s90
    %p99 = scmp.eq.s32.totalorder %s16, 0
    %p100 = por %p98, %p99
    %p101 = scmp.ne.s32.totalorder %s89, %s90
    %p102 = scmp.eq.s32.totalorder %s17, 1
    %p103 = por %p101, %p102
    %p105 = scmp.ne.s32.totalorder %s90, %s104
    %p106 = scmp.eq.s32.totalorder %s17, 0
    %p107 = por %p105, %p106
    %s109 = sadd.s32 %s108, 1
    %p112 = scmp.eq.s32.totalorder %s11, 1
    %p113 = scmp.ne.s32.totalorder %s108, %s110
    %p114 = scmp.eq.s32.totalorder %s11, 0
    %p115 = por %p113, %p114
    %p116 = scmp.ne.s32.totalorder %s108, %s110
    %p117 = scmp.eq.s32.totalorder %s16, 1
    %p118 = por %p116, %p117
    %p119 = scmp.ne.s32.totalorder %s110, %s111
    %p120 = scmp.eq.s32.totalorder %s16, 0
    %p121 = por %p119, %p120
    %p122 = scmp.ne.s32.totalorder %s110, %s111
    %p123 = scmp.eq.s32.totalorder %s17, 1
    %p124 = por %p122, %p123
    %p126 = scmp.ne.s32.totalorder %s111, %s125
    %p127 = scmp.eq.s32.totalorder %s17, 0
    %p128 = por %p126, %p127
    %s129 = ssub.s32 %s11, %s18
    %p130 = scmp.eq.s32.totalorder %s129, 0
    %s132 = sadd.s32 %s131, 1
    %s133 = scalar_select %p130, %s131, %s132
    %p136 = pneg %p130
    %p137 = scmp.eq.s32.totalorder %s11, 1
    %p138 = por %p136, %p137
    %p139 = scmp.ne.s32.totalorder %s131, %s134
    %p140 = scmp.eq.s32.totalorder %s11, 0
    %p141 = por %p139, %p140
    %p142 = scmp.ne.s32.totalorder %s131, %s134
    %p143 = scmp.eq.s32.totalorder %s16, 1
    %p144 = por %p142, %p143
    %p145 = scmp.ne.s32.totalorder %s134, %s135
    %p146 = scmp.eq.s32.totalorder %s16, 0
    %p147 = por %p145, %p146
    %p148 = scmp.ne.s32.totalorder %s134, %s135
    %p149 = scmp.eq.s32.totalorder %s17, 1
    %p150 = por %p148, %p149
    %p152 = scmp.ne.s32.totalorder %s135, %s151
    %p153 = scmp.eq.s32.totalorder %s17, 0
    %p154 = por %p152, %p153
    %p155 = scmp.le.s32.totalorder 1, %s11
    %p156 = scmp.lt.s32.totalorder %s11, 3
    %p157 = pnand %p155, %p156
    %p158 = pneg %p157
    // Predicated region
    $region9: #{residual_block.1} parent=5 // pred_check
      _
    $region10: #{residual_block.1} parent=5 // pred_check_branch
      %160 = sbr.rel (%p157) target = $region12
    $region11: #{residual_block.1} parent=5 // pred_region
      %s161 = ssub.s32 %s11, 1
      // Predicated region
      $region13: #{residual_block.1} parent=11 // pred_check
        %p162 = pneg %p58
      $region14: #{residual_block.1} parent=11 // pred_check_branch
        %164 = sbr.rel (%p162) target = $region16
      $region15: #{residual_block.1} parent=11 // pred_region
        _
      $region16: #{residual_block.1} parent=11 // pred_fallthru
        _
      // Predicated region
      $region17: #{residual_block.1} parent=11 // pred_check
        %p165 = pneg %p79
      $region18: #{residual_block.1} parent=11 // pred_check_branch
        %167 = sbr.rel (%p165) target = $region20
      $region19: #{residual_block.1} parent=11 // pred_region
        _
      $region20: #{residual_block.1} parent=11 // pred_fallthru
        _
      // Predicated region
      $region21: #{residual_block.1} parent=11 // pred_check
        %p168 = pneg %p100
      $region22: #{residual_block.1} parent=11 // pred_check_branch
        %170 = sbr.rel (%p168) target = $region24
      $region23: #{residual_block.1} parent=11 // pred_region
        _
      $region24: #{residual_block.1} parent=11 // pred_fallthru
        _
      // Predicated region
      $region25: #{residual_block.1} parent=11 // pred_check
        %p171 = pneg %p121
      $region26: #{residual_block.1} parent=11 // pred_check_branch
        %173 = sbr.rel (%p171) target = $region28
      $region27: #{residual_block.1} parent=11 // pred_region
        _
      $region28: #{residual_block.1} parent=11 // pred_fallthru
        _
    $region12: #{residual_block.1} parent=5 // pred_fallthru
      _
    %p174 = scmp.lt.s32.totalorder %s11, 2
    // Predicated region
    $region29: #{residual_block.1} parent=5 // pred_check
      %p175 = pneg %p174
    $region30: #{residual_block.1} parent=5 // pred_check_branch
      %177 = sbr.rel (%p175) target = $region32
    $region31: #{residual_block.1} parent=5 // pred_region
      // Predicated region
      $region33: #{residual_block.1} parent=31 // pred_check
        %p178 = pneg %p31
      $region34: #{residual_block.1} parent=31 // pred_check_branch
        %180 = sbr.rel (%p178) target = $region36
      $region35: #{residual_block.1} parent=31 // pred_region
        %p181 = scmp.lt.s32.totalorder %s11, 1
        %s182 = scalar_select %p181, %s11, 1
        %s183 = smul.addr %s182, 32
        %s184 = smul.addr %s183, 8
        %s185 = scalar_lea.vmem %s0, %s184
      $region36: #{residual_block.1} parent=31 // pred_fallthru
        _
    $region32: #{residual_block.1} parent=5 // pred_fallthru
      _
    %p186 = scmp.le.s32.totalorder 1, %s11
    %p187 = scmp.lt.s32.totalorder %s11, 3
    %p188 = pnand %p186, %p187
    %p189 = pneg %p188
    // Predicated region
    $region37: #{residual_block.1} parent=5 // pred_check
      _
    $region38: #{residual_block.1} parent=5 // pred_check_branch
      %191 = sbr.rel (%p188) target = $region40
    $region39: #{residual_block.1} parent=5 // pred_region
      %s192 = ssub.s32 %s11, 1
      %p193 = scmp.lt.s32.totalorder %s16, 1
      %s194 = scalar_select %p193, %s16, 1
      %s195 = smul.addr %s194, 32
      %s196 = smul.addr %s195, 8
      %s197 = scalar_lea.vmem %s0, %s196
      %p198 = pneg %p37
      %p199 = pneg %p34
      %p200 = pneg %p58
      %p201 = pneg %p55
      %p202 = pneg %p79
      %p203 = pneg %p76
      %p204 = pneg %p100
      %p205 = pneg %p97
      %p206 = pneg %p121
      %p207 = pneg %p118
      %p208 = pneg %p147
      %p209 = pneg %p144
      %p210 = scmp.lt.s32.totalorder %s16, 1
      %s211 = scalar_select %p210, %s16, 1
      %s212 = smul.addr %s211, 32
      %s213 = smul.addr %s212, 8
      %s214 = scalar_lea.vmem %s5, %s213
      %p215 = scmp.lt.s32.totalorder %s16, 1
      %s216 = scalar_select %p215, %s16, 1
      %s217 = smul.addr %s216, 32
      %s218 = smul.addr %s217, 8
      %s219 = scalar_lea.vmem %s0, %s218
      %p220 = scmp.lt.s32.totalorder %s16, 1
      %s221 = scalar_select %p220, %s16, 1
      %s222 = smul.addr %s221, 32
      %s223 = smul.addr %s222, 8
      %s224 = scalar_lea.vmem %s5, %s223
      %225 = vst [vmem:[#allocation2] sm:$0xff] 0.0
      %226 = vst [vmem:[#allocation2 + $0x8] sm:$0xff] 0.0
      %227 = vst [vmem:[#allocation2 + $0x10] sm:$0x3] 0.0
      %228 = vst [vmem:[#allocation2 + $0x18] sm:$0xff] 0.0
      %229 = vst [vmem:[#allocation2 + $0x20] sm:$0xff] 0.0
      %230 = vst [vmem:[#allocation2 + $0x28] sm:$0x3] 0.0
      %231 = vst [vmem:[#allocation2 + $0x30] sm:$0xff] 0.0
      %232 = vst [vmem:[#allocation2 + $0x38] sm:$0xff] 0.0
      %233 = vst [vmem:[#allocation2 + $0x40] sm:$0x3] 0.0
      %234 = vst [vmem:[#allocation2 + $0x48] sm:$0xff] 0.0
      %235 = vst [vmem:[#allocation2 + $0x50] sm:$0xff] 0.0
      %236 = vst [vmem:[#allocation2 + $0x58] sm:$0x3] 0.0
      %237 = vst [vmem:[#allocation2 + $0x60] sm:$0xff] 0.0
      %238 = vst [vmem:[#allocation2 + $0x68] sm:$0xff] 0.0
      %239 = vst [vmem:[#allocation2 + $0x70] sm:$0x3] 0.0
      %240 = vst [vmem:[#allocation2 + $0x78] sm:$0xff] 0.0
      %241 = vst [vmem:[#allocation2 + $0x80] sm:$0xff] 0.0
      %242 = vst [vmem:[#allocation2 + $0x88] sm:$0x3] 0.0
      %243 = vst [vmem:[#allocation2 + $0x90] sm:$0xff] 0.0
      %244 = vst [vmem:[#allocation2 + $0x98] sm:$0xff] 0.0
      %245 = vst [vmem:[#allocation2 + $0xa0] sm:$0x3] 0.0
      %246 = vst [vmem:[#allocation2 + $0xa8] sm:$0xff] 0.0
      %247 = vst [vmem:[#allocation2 + $0xb0] sm:$0xff] 0.0
      %248 = vst [vmem:[#allocation2 + $0xb8] sm:$0x3] 0.0
      %249 = vst [vmem:[#allocation2 + $0xc0] sm:$0xff] 0.0
      %250 = vst [vmem:[#allocation2 + $0xc8] sm:$0xff] 0.0
      %251 = vst [vmem:[#allocation2 + $0xd0] sm:$0x3] 0.0
      %252 = vst [vmem:[#allocation2 + $0xd8] sm:$0xff] 0.0
      %253 = vst [vmem:[#allocation2 + $0xe0] sm:$0xff] 0.0
      %254 = vst [vmem:[#allocation2 + $0xe8] sm:$0x3] 0.0
      %255 = vst [vmem:[#allocation2 + $0xf0] sm:$0xff] 0.0
      %256 = vst [vmem:[#allocation2 + $0xf8] sm:$0xff] 0.0
      %257 = vst [vmem:[#allocation2 + $0x100] sm:$0x3] 0.0
      %258 = vst [vmem:[#allocation2 + $0x108] sm:$0xff] 0.0
      %259 = vst [vmem:[#allocation2 + $0x110] sm:$0xff] 0.0
      %260 = vst [vmem:[#allocation2 + $0x118] sm:$0x3] 0.0
      %261 = vst [vmem:[#allocation2 + $0x120] sm:$0xff] 0.0
      %262 = vst [vmem:[#allocation2 + $0x128] sm:$0xff] 0.0
      %263 = vst [vmem:[#allocation2 + $0x130] sm:$0x3] 0.0
      %264 = vst [vmem:[#allocation2 + $0x138] sm:$0xff] 0.0
      %265 = vst [vmem:[#allocation2 + $0x140] sm:$0xff] 0.0
      %266 = vst [vmem:[#allocation2 + $0x148] sm:$0x3] 0.0
      %267 = vst [vmem:[#allocation2 + $0x150] sm:$0xff] 0.0
      %268 = vst [vmem:[#allocation2 + $0x158] sm:$0xff] 0.0
      %269 = vst [vmem:[#allocation2 + $0x160] sm:$0x3] 0.0
      %270 = vst [vmem:[#allocation2 + $0x168] sm:$0xff] 0.0
      %271 = vst [vmem:[#allocation2 + $0x170] sm:$0xff] 0.0
      %272 = vst [vmem:[#allocation2 + $0x178] sm:$0x3] 0.0
      %273 = vst [vmem:[#allocation2 + $0x180] sm:$0xff] 0.0
      %274 = vst [vmem:[#allocation2 + $0x188] sm:$0xff] 0.0
      %275 = vst [vmem:[#allocation2 + $0x190] sm:$0x3] 0.0
      %276 = vst [vmem:[#allocation2 + $0x198] sm:$0xff] 0.0
      %277 = vst [vmem:[#allocation2 + $0x1a0] sm:$0xff] 0.0
      %278 = vst [vmem:[#allocation2 + $0x1a8] sm:$0x3] 0.0
      %v279 = vld [vmem:[%s219] sm:$0xff]
      %v280 = vld [vmem:[%s219 + $0x8] sm:$0xff]
      %v281 = vld [vmem:[%s219 + $0x10] sm:$0xff]
      %v282 = vld [vmem:[%s219 + $0x18] sm:$0xff]
      %v283 = vld [vmem:[%s219 + $0x20] sm:$0xff]
      %v284 = vld [vmem:[%s219 + $0x28] sm:$0xff]
      %v285 = vld [vmem:[%s219 + $0x30] sm:$0xff]
      %v286 = vld [vmem:[%s219 + $0x38] sm:$0xff]
      %v287 = vld [vmem:[%s219 + $0x40] sm:$0xff]
      %v288 = vld [vmem:[%s219 + $0x48] sm:$0xff]
      %v289 = vld [vmem:[%s219 + $0x50] sm:$0xff]
      %v290 = vld [vmem:[%s219 + $0x58] sm:$0xff]
      %v291 = vld [vmem:[%s219 + $0x60] sm:$0xff]
      %v292 = vld [vmem:[%s219 + $0x68] sm:$0xff]
      %v293 = vld [vmem:[%s219 + $0x70] sm:$0xff]
      %v294 = vld [vmem:[%s219 + $0x78] sm:$0xff]
      %v295 = vld [vmem:[%s219 + $0x80] sm:$0xff]
      %v296 = vld [vmem:[%s219 + $0x88] sm:$0xff]
      %v297 = vld [vmem:[%s219 + $0x90] sm:$0xff]
      %v298 = vld [vmem:[%s219 + $0x98] sm:$0xff]
      %v299 = vld [vmem:[%s219 + $0xa0] sm:$0xff]
      %v300 = vld [vmem:[%s219 + $0xa8] sm:$0xff]
      %v301 = vld [vmem:[%s219 + $0xb0] sm:$0xff]
      %v302 = vld [vmem:[%s219 + $0xb8] sm:$0xff]
      %v303 = vld [vmem:[%s219 + $0xc0] sm:$0xff]
      %v304 = vld [vmem:[%s219 + $0xc8] sm:$0xff]
      %v305 = vld [vmem:[%s219 + $0xd0] sm:$0xff]
      %v306 = vld [vmem:[%s219 + $0xd8] sm:$0xff]
      %v307 = vld [vmem:[%s219 + $0xe0] sm:$0xff]
      %v308 = vld [vmem:[%s219 + $0xe8] sm:$0xff]
      %v309 = vld [vmem:[%s219 + $0xf0] sm:$0xff]
      %v310 = vld [vmem:[%s219 + $0xf8] sm:$0xff]
      %s311 = scalar_lea.vmem [#allocation2], 24
      %vm312 = vcmask 31744
      %313 = vst.msk [vmem:[%s311 + $0x1] sm:$0xff] %vm312, %v279
      %314 = vst.msk [vmem:[%s311 + $0x9] sm:$0xff] %vm312, %v280
      %315 = vst.msk [vmem:[%s311 + $0x19] sm:$0xff] %vm312, %v281
      %316 = vst.msk [vmem:[%s311 + $0x21] sm:$0xff] %vm312, %v282
      %317 = vst.msk [vmem:[%s311 + $0x31] sm:$0xff] %vm312, %v283
      %318 = vst.msk [vmem:[%s311 + $0x39] sm:$0xff] %vm312, %v284
      %319 = vst.msk [vmem:[%s311 + $0x49] sm:$0xff] %vm312, %v285
      %320 = vst.msk [vmem:[%s311 + $0x51] sm:$0xff] %vm312, %v286
      %321 = vst.msk [vmem:[%s311 + $0x61] sm:$0xff] %vm312, %v287
      %322 = vst.msk [vmem:[%s311 + $0x69] sm:$0xff] %vm312, %v288
      %323 = vst.msk [vmem:[%s311 + $0x79] sm:$0xff] %vm312, %v289
      %324 = vst.msk [vmem:[%s311 + $0x81] sm:$0xff] %vm312, %v290
      %325 = vst.msk [vmem:[%s311 + $0x91] sm:$0xff] %vm312, %v291
      %326 = vst.msk [vmem:[%s311 + $0x99] sm:$0xff] %vm312, %v292
      %327 = vst.msk [vmem:[%s311 + $0xa9] sm:$0xff] %vm312, %v293
      %328 = vst.msk [vmem:[%s311 + $0xb1] sm:$0xff] %vm312, %v294
      %329 = vst.msk [vmem:[%s311 + $0xc1] sm:$0xff] %vm312, %v295
      %330 = vst.msk [vmem:[%s311 + $0xc9] sm:$0xff] %vm312, %v296
      %331 = vst.msk [vmem:[%s311 + $0xd9] sm:$0xff] %vm312, %v297
      %332 = vst.msk [vmem:[%s311 + $0xe1] sm:$0xff] %vm312, %v298
      %333 = vst.msk [vmem:[%s311 + $0xf1] sm:$0xff] %vm312, %v299
      %334 = vst.msk [vmem:[%s311 + $0xf9] sm:$0xff] %vm312, %v300
      %335 = vst.msk [vmem:[%s311 + $0x109] sm:$0xff] %vm312, %v301
      %336 = vst.msk [vmem:[%s311 + $0x111] sm:$0xff] %vm312, %v302
      %337 = vst.msk [vmem:[%s311 + $0x121] sm:$0xff] %vm312, %v303
      %338 = vst.msk [vmem:[%s311 + $0x129] sm:$0xff] %vm312, %v304
      %339 = vst.msk [vmem:[%s311 + $0x139] sm:$0xff] %vm312, %v305
      %340 = vst.msk [vmem:[%s311 + $0x141] sm:$0xff] %vm312, %v306
      %341 = vst.msk [vmem:[%s311 + $0x151] sm:$0xff] %vm312, %v307
      %342 = vst.msk [vmem:[%s311 + $0x159] sm:$0xff] %vm312, %v308
      %343 = vst.msk [vmem:[%s311 + $0x169] sm:$0xff] %vm312, %v309
      %344 = vst.msk [vmem:[%s311 + $0x171] sm:$0xff] %vm312, %v310
      %345 = vst [vmem:[#allocation3] sm:$0xff] 0.0
      %346 = vst [vmem:[#allocation3 + $0x8] sm:$0xff] 0.0
      %347 = vst [vmem:[#allocation3 + $0x10] sm:$0x3] 0.0
      %s348 = scalar_lea.vmem [#allocation3], 408
      %349 = vst [vmem:[%s348] sm:$0xff] 0.0
      %350 = vst [vmem:[%s348 + $0x8] sm:$0xff] 0.0
      %351 = vst [vmem:[%s348 + $0x10] sm:$0x3] 0.0
      %352 = vst [vmem:[#allocation3] sm:$0x1] 0.0
      %353 = vst [vmem:[#allocation3 + $0x18] sm:$0x1] 0.0
      %354 = vst [vmem:[#allocation3 + $0x30] sm:$0x1] 0.0
      %355 = vst [vmem:[#allocation3 + $0x48] sm:$0x1] 0.0
      %356 = vst [vmem:[#allocation3 + $0x60] sm:$0x1] 0.0
      %357 = vst [vmem:[#allocation3 + $0x78] sm:$0x1] 0.0
      %358 = vst [vmem:[#allocation3 + $0x90] sm:$0x1] 0.0
      %359 = vst [vmem:[#allocation3 + $0xa8] sm:$0x1] 0.0
      %360 = vst [vmem:[#allocation3 + $0xc0] sm:$0x1] 0.0
      %361 = vst [vmem:[#allocation3 + $0xd8] sm:$0x1] 0.0
      %362 = vst [vmem:[#allocation3 + $0xf0] sm:$0x1] 0.0
      %363 = vst [vmem:[#allocation3 + $0x108] sm:$0x1] 0.0
      %364 = vst [vmem:[#allocation3 + $0x120] sm:$0x1] 0.0
      %365 = vst [vmem:[#allocation3 + $0x138] sm:$0x1] 0.0
      %366 = vst [vmem:[#allocation3 + $0x150] sm:$0x1] 0.0
      %367 = vst [vmem:[#allocation3 + $0x168] sm:$0x1] 0.0
      %368 = vst [vmem:[#allocation3 + $0x180] sm:$0x1] 0.0
      %369 = vst [vmem:[#allocation3 + $0x198] sm:$0x1] 0.0
      %370 = vst [vmem:[#allocation3 + $0x11] sm:$0x1] 0.0
      %371 = vst [vmem:[#allocation3 + $0x29] sm:$0x1] 0.0
      %372 = vst [vmem:[#allocation3 + $0x41] sm:$0x1] 0.0
      %373 = vst [vmem:[#allocation3 + $0x59] sm:$0x1] 0.0
      %374 = vst [vmem:[#allocation3 + $0x71] sm:$0x1] 0.0
      %375 = vst [vmem:[#allocation3 + $0x89] sm:$0x1] 0.0
      %376 = vst [vmem:[#allocation3 + $0xa1] sm:$0x1] 0.0
      %377 = vst [vmem:[#allocation3 + $0xb9] sm:$0x1] 0.0
      %378 = vst [vmem:[#allocation3 + $0xd1] sm:$0x1] 0.0
      %379 = vst [vmem:[#allocation3 + $0xe9] sm:$0x1] 0.0
      %380 = vst [vmem:[#allocation3 + $0x101] sm:$0x1] 0.0
      %381 = vst [vmem:[#allocation3 + $0x119] sm:$0x1] 0.0
      %382 = vst [vmem:[#allocation3 + $0x131] sm:$0x1] 0.0
      %383 = vst [vmem:[#allocation3 + $0x149] sm:$0x1] 0.0
      %384 = vst [vmem:[#allocation3 + $0x161] sm:$0x1] 0.0
      %385 = vst [vmem:[#allocation3 + $0x179] sm:$0x1] 0.0
      %386 = vst [vmem:[#allocation3 + $0x191] sm:$0x1] 0.0
      %387 = vst [vmem:[#allocation3 + $0x1a9] sm:$0x1] 0.0
      %v388 = vld [vmem:[#allocation2] sm:$0xff]
      %v389 = vld [vmem:[#allocation2 + $0x8] sm:$0xff]
      %v390 = vld [vmem:[#allocation2 + $0x10] sm:$0x3]
      %v391 = vld [vmem:[#allocation2 + $0x18] sm:$0xff]
      %v392 = vld [vmem:[#allocation2 + $0x20] sm:$0xff]
      %v393 = vld [vmem:[#allocation2 + $0x28] sm:$0x3]
      %v394 = vld [vmem:[#allocation2 + $0x30] sm:$0xff]
      %v395 = vld [vmem:[#allocation2 + $0x38] sm:$0xff]
      %v396 = vld [vmem:[#allocation2 + $0x40] sm:$0x3]
      %v397 = vld [vmem:[#allocation2 + $0x48] sm:$0xff]
      %v398 = vld [vmem:[#allocation2 + $0x50] sm:$0xff]
      %v399 = vld [vmem:[#allocation2 + $0x58] sm:$0x3]
      %v400 = vld [vmem:[#allocation2 + $0x60] sm:$0xff]
      %v401 = vld [vmem:[#allocation2 + $0x68] sm:$0xff]
      %v402 = vld [vmem:[#allocation2 + $0x70] sm:$0x3]
      %v403 = vld [vmem:[#allocation2 + $0x78] sm:$0xff]
      %v404 = vld [vmem:[#allocation2 + $0x80] sm:$0xff]
      %v405 = vld [vmem:[#allocation2 + $0x88] sm:$0x3]
      %v406 = vld [vmem:[#allocation2 + $0x90] sm:$0xff]
      %v407 = vld [vmem:[#allocation2 + $0x98] sm:$0xff]
      %v408 = vld [vmem:[#allocation2 + $0xa0] sm:$0x3]
      %v409 = vld [vmem:[#allocation2 + $0xa8] sm:$0xff]
      %v410 = vld [vmem:[#allocation2 + $0xb0] sm:$0xff]
      %v411 = vld [vmem:[#allocation2 + $0xb8] sm:$0x3]
      %v412 = vld [vmem:[#allocation2 + $0xc0] sm:$0xff]
      %v413 = vld [vmem:[#allocation2 + $0xc8] sm:$0xff]
      %v414 = vld [vmem:[#allocation2 + $0xd0] sm:$0x3]
      %v415 = vld [vmem:[#allocation2 + $0xd8] sm:$0xff]
      %v416 = vld [vmem:[#allocation2 + $0xe0] sm:$0xff]
      %v417 = vld [vmem:[#allocation2 + $0xe8] sm:$0x3]
      %v418 = vld [vmem:[#allocation2 + $0xf0] sm:$0xff]
      %v419 = vld [vmem:[#allocation2 + $0xf8] sm:$0xff]
      %v420 = vld [vmem:[#allocation2 + $0x100] sm:$0x3]
      %v421 = vld [vmem:[#allocation2 + $0x108] sm:$0xff]
      %v422 = vld [vmem:[#allocation2 + $0x110] sm:$0xff]
      %v423 = vld [vmem:[#allocation2 + $0x118] sm:$0x3]
      %v424 = vld [vmem:[#allocation2 + $0x120] sm:$0xff]
      %v425 = vld [vmem:[#allocation2 + $0x128] sm:$0xff]
      %v426 = vld [vmem:[#allocation2 + $0x130] sm:$0x3]
      %v427 = vld [vmem:[#allocation2 + $0x138] sm:$0xff]
      %v428 = vld [vmem:[#allocation2 + $0x140] sm:$0xff]
      %v429 = vld [vmem:[#allocation2 + $0x148] sm:$0x3]
      %v430 = vld [vmem:[#allocation2 + $0x150] sm:$0xff]
      %v431 = vld [vmem:[#allocation2 + $0x158] sm:$0xff]
      %v432 = vld [vmem:[#allocation2 + $0x160] sm:$0x3]
      %v433 = vld [vmem:[#allocation2 + $0x168] sm:$0xff]
      %v434 = vld [vmem:[#allocation2 + $0x170] sm:$0xff]
      %v435 = vld [vmem:[#allocation2 + $0x178] sm:$0x3]
      %v436 = vld [vmem:[#allocation2 + $0x180] sm:$0xff]
      %v437 = vld [vmem:[#allocation2 + $0x188] sm:$0xff]
      %v438 = vld [vmem:[#allocation2 + $0x190] sm:$0x3]
      %v439 = vld [vmem:[#allocation2 + $0x198] sm:$0xff]
      %v440 = vld [vmem:[#allocation2 + $0x1a0] sm:$0xff]
      %v441 = vld [vmem:[#allocation2 + $0x1a8] sm:$0x3]
      %vm490 = vcmask 1046528
      %v491 = vrot.slane %v388, 1
      %v492 = vrot.slane %v389, 1
      %v493 = vsel %vm490, %v491, %v492
      %v494 = vrot.slane %v390, 1
      %v495 = vsel %vm490, %v492, %v494
      %v496 = vrot.slane %v391, 1
      %v497 = vrot.slane %v392, 1
      %v498 = vsel %vm490, %v496, %v497
      %v499 = vrot.slane %v393, 1
      %v500 = vsel %vm490, %v497, %v499
      %v501 = vrot.slane %v394, 1
      %v502 = vrot.slane %v395, 1
      %v503 = vsel %vm490, %v501, %v502
      %v504 = vrot.slane %v396, 1
      %v505 = vsel %vm490, %v502, %v504
      %v506 = vrot.slane %v397, 1
      %v507 = vrot.slane %v398, 1
      %v508 = vsel %vm490, %v506, %v507
      %v509 = vrot.slane %v399, 1
      %v510 = vsel %vm490, %v507, %v509
      %v511 = vrot.slane %v400, 1
      %v512 = vrot.slane %v401, 1
      %v513 = vsel %vm490, %v511, %v512
      %v514 = vrot.slane %v402, 1
      %v515 = vsel %vm490, %v512, %v514
      %v516 = vrot.slane %v403, 1
      %v517 = vrot.slane %v404, 1
      %v518 = vsel %vm490, %v516, %v517
      %v519 = vrot.slane %v405, 1
      %v520 = vsel %vm490, %v517, %v519
      %v521 = vrot.slane %v406, 1
      %v522 = vrot.slane %v407, 1
      %v523 = vsel %vm490, %v521, %v522
      %v524 = vrot.slane %v408, 1
      %v525 = vsel %vm490, %v522, %v524
      %v526 = vrot.slane %v409, 1
      %v527 = vrot.slane %v410, 1
      %v528 = vsel %vm490, %v526, %v527
      %v529 = vrot.slane %v411, 1
      %v530 = vsel %vm490, %v527, %v529
      %v531 = vrot.slane %v412, 1
      %v532 = vrot.slane %v413, 1
      %v533 = vsel %vm490, %v531, %v532
      %v534 = vrot.slane %v414, 1
      %v535 = vsel %vm490, %v532, %v534
      %v536 = vrot.slane %v415, 1
      %v537 = vrot.slane %v416, 1
      %v538 = vsel %vm490, %v536, %v537
      %v539 = vrot.slane %v417, 1
      %v540 = vsel %vm490, %v537, %v539
      %v541 = vrot.slane %v418, 1
      %v542 = vrot.slane %v419, 1
      %v543 = vsel %vm490, %v541, %v542
      %v544 = vrot.slane %v420, 1
      %v545 = vsel %vm490, %v542, %v544
      %v546 = vrot.slane %v421, 1
      %v547 = vrot.slane %v422, 1
      %v548 = vsel %vm490, %v546, %v547
      %v549 = vrot.slane %v423, 1
      %v550 = vsel %vm490, %v547, %v549
      %v551 = vrot.slane %v424, 1
      %v552 = vrot.slane %v425, 1
      %v553 = vsel %vm490, %v551, %v552
      %v554 = vrot.slane %v426, 1
      %v555 = vsel %vm490, %v552, %v554
      %v556 = vrot.slane %v427, 1
      %v557 = vrot.slane %v428, 1
      %v558 = vsel %vm490, %v556, %v557
      %v559 = vrot.slane %v429, 1
      %v560 = vsel %vm490, %v557, %v559
      %v561 = vrot.slane %v430, 1
      %v562 = vrot.slane %v431, 1
      %v563 = vsel %vm490, %v561, %v562
      %v564 = vrot.slane %v432, 1
      %v565 = vsel %vm490, %v562, %v564
      %v566 = vrot.slane %v433, 1
      %v567 = vrot.slane %v434, 1
      %v568 = vsel %vm490, %v566, %v567
      %v569 = vrot.slane %v435, 1
      %v570 = vsel %vm490, %v567, %v569
      %vm603 = vcmask 1045504
      %v604 = vrot.slane %v388, 2
      %v605 = vrot.slane %v389, 2
      %v606 = vsel %vm603, %v604, %v605
      %v607 = vrot.slane %v390, 2
      %v608 = vsel %vm603, %v605, %v607
      %v609 = vrot.slane %v391, 2
      %v610 = vrot.slane %v392, 2
      %v611 = vsel %vm603, %v609, %v610
      %v612 = vrot.slane %v393, 2
      %v613 = vsel %vm603, %v610, %v612
      %v614 = vrot.slane %v394, 2
      %v615 = vrot.slane %v395, 2
      %v616 = vsel %vm603, %v614, %v615
      %v617 = vrot.slane %v396, 2
      %v618 = vsel %vm603, %v615, %v617
      %v619 = vrot.slane %v397, 2
      %v620 = vrot.slane %v398, 2
      %v621 = vsel %vm603, %v619, %v620
      %v622 = vrot.slane %v399, 2
      %v623 = vsel %vm603, %v620, %v622
      %v624 = vrot.slane %v400, 2
      %v625 = vrot.slane %v401, 2
      %v626 = vsel %vm603, %v624, %v625
      %v627 = vrot.slane %v402, 2
      %v628 = vsel %vm603, %v625, %v627
      %v629 = vrot.slane %v403, 2
      %v630 = vrot.slane %v404, 2
      %v631 = vsel %vm603, %v629, %v630
      %v632 = vrot.slane %v405, 2
      %v633 = vsel %vm603, %v630, %v632
      %v634 = vrot.slane %v406, 2
      %v635 = vrot.slane %v407, 2
      %v636 = vsel %vm603, %v634, %v635
      %v637 = vrot.slane %v408, 2
      %v638 = vsel %vm603, %v635, %v637
      %v639 = vrot.slane %v409, 2
      %v640 = vrot.slane %v410, 2
      %v641 = vsel %vm603, %v639, %v640
      %v642 = vrot.slane %v411, 2
      %v643 = vsel %vm603, %v640, %v642
      %v644 = vrot.slane %v412, 2
      %v645 = vrot.slane %v413, 2
      %v646 = vsel %vm603, %v644, %v645
      %v647 = vrot.slane %v414, 2
      %v648 = vsel %vm603, %v645, %v647
      %v649 = vrot.slane %v415, 2
      %v650 = vrot.slane %v416, 2
      %v651 = vsel %vm603, %v649, %v650
      %v652 = vrot.slane %v417, 2
      %v653 = vsel %vm603, %v650, %v652
      %v654 = vrot.slane %v418, 2
      %v655 = vrot.slane %v419, 2
      %v656 = vsel %vm603, %v654, %v655
      %v657 = vrot.slane %v420, 2
      %v658 = vsel %vm603, %v655, %v657
      %v659 = vrot.slane %v421, 2
      %v660 = vrot.slane %v422, 2
      %v661 = vsel %vm603, %v659, %v660
      %v662 = vrot.slane %v423, 2
      %v663 = vsel %vm603, %v660, %v662
      %v664 = vrot.slane %v424, 2
      %v665 = vrot.slane %v425, 2
      %v666 = vsel %vm603, %v664, %v665
      %v667 = vrot.slane %v426, 2
      %v668 = vsel %vm603, %v665, %v667
      %v669 = vrot.slane %v427, 2
      %v670 = vrot.slane %v428, 2
      %v671 = vsel %vm603, %v669, %v670
      %v672 = vrot.slane %v429, 2
      %v673 = vsel %vm603, %v670, %v672
      %v674 = vrot.slane %v430, 2
      %v675 = vrot.slane %v431, 2
      %v676 = vsel %vm603, %v674, %v675
      %v677 = vrot.slane %v432, 2
      %v678 = vsel %vm603, %v675, %v677
      %v679 = vrot.slane %v433, 2
      %v680 = vrot.slane %v434, 2
      %v681 = vsel %vm603, %v679, %v680
      %v682 = vrot.slane %v435, 2
      %v683 = vsel %vm603, %v680, %v682
      %v719 = vrot.slane %v436, 1
      %v720 = vrot.slane %v437, 1
      %v721 = vsel %vm490, %v719, %v720
      %v722 = vrot.slane %v438, 1
      %v723 = vsel %vm490, %v720, %v722
      %v726 = vrot.slane %v436, 2
      %v727 = vrot.slane %v437, 2
      %v728 = vsel %vm603, %v726, %v727
      %v729 = vrot.slane %v438, 2
      %v730 = vsel %vm603, %v727, %v729
      %v736 = vrot.slane %v439, 1
      %v737 = vrot.slane %v440, 1
      %v738 = vsel %vm490, %v736, %v737
      %v739 = vrot.slane %v441, 1
      %v740 = vsel %vm490, %v737, %v739
      %v743 = vrot.slane %v439, 2
      %v744 = vrot.slane %v440, 2
      %v745 = vsel %vm603, %v743, %v744
      %v746 = vrot.slane %v441, 2
      %v747 = vsel %vm603, %v744, %v746
      %v750 = vld [vmem:[%s1] sm:$0xff]
      %v751 = vld [vmem:[%s1 + $0x8] sm:$0xff]
      %v752 = vld [vmem:[%s1 + $0x10] sm:$0xff]
      %v753 = vld [vmem:[%s1 + $0x18] sm:$0xff]
      %v754 = vld [vmem:[%s1 + $0x20] sm:$0xff]
      %v755 = vld [vmem:[%s1 + $0x28] sm:$0xff]
      %v756 = vld [vmem:[%s1 + $0x30] sm:$0xff]
      %v757 = vld [vmem:[%s1 + $0x38] sm:$0xff]
      %v758 = vld [vmem:[%s1 + $0x40] sm:$0xff]
      %v759 = vld [vmem:[%s1 + $0x48] sm:$0xff]
      %v760 = vld [vmem:[%s1 + $0x50] sm:$0xff]
      %v761 = vld [vmem:[%s1 + $0x58] sm:$0xff]
      %v762 = vld [vmem:[%s1 + $0x60] sm:$0xff]
      %v763 = vld [vmem:[%s1 + $0x68] sm:$0xff]
      %v764 = vld [vmem:[%s1 + $0x70] sm:$0xff]
      %v765 = vld [vmem:[%s1 + $0x78] sm:$0xff]
      %v766 = vld [vmem:[%s1 + $0x80] sm:$0xff]
      %v767 = vld [vmem:[%s1 + $0x88] sm:$0xff]
      %v768 = vld [vmem:[%s1 + $0x90] sm:$0xff]
      %v769 = vld [vmem:[%s1 + $0x98] sm:$0xff]
      %v770 = vld [vmem:[%s1 + $0xa0] sm:$0xff]
      %v771 = vld [vmem:[%s1 + $0xa8] sm:$0xff]
      %v772 = vld [vmem:[%s1 + $0xb0] sm:$0xff]
      %v773 = vld [vmem:[%s1 + $0xb8] sm:$0xff]
      %v774 = vld [vmem:[%s1 + $0xc0] sm:$0xff]
      %v775 = vld [vmem:[%s1 + $0xc8] sm:$0xff]
      %v776 = vld [vmem:[%s1 + $0xd0] sm:$0xff]
      %v777 = vld [vmem:[%s1 + $0xd8] sm:$0xff]
      %v778 = vld [vmem:[%s1 + $0xe0] sm:$0xff]
      %v779 = vld [vmem:[%s1 + $0xe8] sm:$0xff]
      %v780 = vld [vmem:[%s1 + $0xf0] sm:$0xff]
      %v781 = vld [vmem:[%s1 + $0xf8] sm:$0xff]
      %v782 = vld [vmem:[%s1 + $0x100] sm:$0xff]
      %v783 = vld [vmem:[%s1 + $0x108] sm:$0xff]
      %v784 = vld [vmem:[%s1 + $0x110] sm:$0xff]
      %v785 = vld [vmem:[%s1 + $0x118] sm:$0xff]
      %v786 = vld [vmem:[%s1 + $0x120] sm:$0xff]
      %v787 = vld [vmem:[%s1 + $0x128] sm:$0xff]
      %v788 = vld [vmem:[%s1 + $0x130] sm:$0xff]
      %v789 = vld [vmem:[%s1 + $0x138] sm:$0xff]
      %v790 = vld [vmem:[%s1 + $0x140] sm:$0xff]
      %v791 = vld [vmem:[%s1 + $0x148] sm:$0xff]
      %v792 = vld [vmem:[%s1 + $0x150] sm:$0xff]
      %v793 = vld [vmem:[%s1 + $0x158] sm:$0xff]
      %v794 = vld [vmem:[%s1 + $0x160] sm:$0xff]
      %v795 = vld [vmem:[%s1 + $0x168] sm:$0xff]
      %v796 = vld [vmem:[%s1 + $0x170] sm:$0xff]
      %v797 = vld [vmem:[%s1 + $0x178] sm:$0xff]
      %v798 = vld [vmem:[%s1 + $0x180] sm:$0xff]
      %v799 = vld [vmem:[%s1 + $0x188] sm:$0xff]
      %v800 = vld [vmem:[%s1 + $0x190] sm:$0xff]
      %v801 = vld [vmem:[%s1 + $0x198] sm:$0xff]
      %v802 = vld [vmem:[%s1 + $0x1a0] sm:$0xff]
      %v803 = vld [vmem:[%s1 + $0x1a8] sm:$0xff]
      %v804 = vld [vmem:[%s1 + $0x1b0] sm:$0xff]
      %v805 = vld [vmem:[%s1 + $0x1b8] sm:$0xff]
      %v806 = vld [vmem:[%s1 + $0x1c0] sm:$0xff]
      %v807 = vld [vmem:[%s1 + $0x1c8] sm:$0xff]
      %v808 = vld [vmem:[%s1 + $0x1d0] sm:$0xff]
      %v809 = vld [vmem:[%s1 + $0x1d8] sm:$0xff]
      %v810 = vld [vmem:[%s1 + $0x1e0] sm:$0xff]
      %v811 = vld [vmem:[%s1 + $0x1e8] sm:$0xff]
      %v812 = vld [vmem:[%s1 + $0x1f0] sm:$0xff]
      %v813 = vld [vmem:[%s1 + $0x1f8] sm:$0xff]
      %v814 = vld [vmem:[%s1 + $0x200] sm:$0xff]
      %v815 = vld [vmem:[%s1 + $0x208] sm:$0xff]
      %v816 = vld [vmem:[%s1 + $0x210] sm:$0xff]
      %v817 = vld [vmem:[%s1 + $0x218] sm:$0xff]
      %v818 = vld [vmem:[%s1 + $0x220] sm:$0xff]
      %v819 = vld [vmem:[%s1 + $0x228] sm:$0xff]
      %v820 = vld [vmem:[%s1 + $0x230] sm:$0xff]
      %v821 = vld [vmem:[%s1 + $0x238] sm:$0xff]
      %v822 = vld [vmem:[%s1 + $0x240] sm:$0xff]
      %v823 = vld [vmem:[%s1 + $0x248] sm:$0xff]
      %v824 = vld [vmem:[%s1 + $0x250] sm:$0xff]
      %v825 = vld [vmem:[%s1 + $0x258] sm:$0xff]
      %v826 = vld [vmem:[%s1 + $0x260] sm:$0xff]
      %v827 = vld [vmem:[%s1 + $0x268] sm:$0xff]
      %v828 = vld [vmem:[%s1 + $0x270] sm:$0xff]
      %v829 = vld [vmem:[%s1 + $0x278] sm:$0xff]
      %v830 = vld [vmem:[%s1 + $0x280] sm:$0xff]
      %v831 = vld [vmem:[%s1 + $0x288] sm:$0xff]
      %v832 = vld [vmem:[%s1 + $0x290] sm:$0xff]
      %v833 = vld [vmem:[%s1 + $0x298] sm:$0xff]
      %v834 = vld [vmem:[%s1 + $0x2a0] sm:$0xff]
      %v835 = vld [vmem:[%s1 + $0x2a8] sm:$0xff]
      %v836 = vld [vmem:[%s1 + $0x2b0] sm:$0xff]
      %v837 = vld [vmem:[%s1 + $0x2b8] sm:$0xff]
      %v838 = vld [vmem:[%s1 + $0x2c0] sm:$0xff]
      %v839 = vld [vmem:[%s1 + $0x2c8] sm:$0xff]
      %v840 = vld [vmem:[%s1 + $0x2d0] sm:$0xff]
      %v841 = vld [vmem:[%s1 + $0x2d8] sm:$0xff]
      %v842 = vld [vmem:[%s1 + $0x2e0] sm:$0xff]
      %v843 = vld [vmem:[%s1 + $0x2e8] sm:$0xff]
      %v844 = vld [vmem:[%s1 + $0x2f0] sm:$0xff]
      %v845 = vld [vmem:[%s1 + $0x2f8] sm:$0xff]
      %v846 = vld [vmem:[%s1 + $0x300] sm:$0xff]
      %v847 = vld [vmem:[%s1 + $0x308] sm:$0xff]
      %v848 = vld [vmem:[%s1 + $0x310] sm:$0xff]
      %v849 = vld [vmem:[%s1 + $0x318] sm:$0xff]
      %v850 = vld [vmem:[%s1 + $0x320] sm:$0xff]
      %v851 = vld [vmem:[%s1 + $0x328] sm:$0xff]
      %v852 = vld [vmem:[%s1 + $0x330] sm:$0xff]
      %v853 = vld [vmem:[%s1 + $0x338] sm:$0xff]
      %v854 = vld [vmem:[%s1 + $0x340] sm:$0xff]
      %v855 = vld [vmem:[%s1 + $0x348] sm:$0xff]
      %v856 = vld [vmem:[%s1 + $0x350] sm:$0xff]
      %v857 = vld [vmem:[%s1 + $0x358] sm:$0xff]
      %v858 = vld [vmem:[%s1 + $0x360] sm:$0xff]
      %v859 = vld [vmem:[%s1 + $0x368] sm:$0xff]
      %v860 = vld [vmem:[%s1 + $0x370] sm:$0xff]
      %v861 = vld [vmem:[%s1 + $0x378] sm:$0xff]
      %v862 = vld [vmem:[%s1 + $0x380] sm:$0xff]
      %v863 = vld [vmem:[%s1 + $0x388] sm:$0xff]
      %v864 = vld [vmem:[%s1 + $0x390] sm:$0xff]
      %v865 = vld [vmem:[%s1 + $0x398] sm:$0xff]
      %v866 = vld [vmem:[%s1 + $0x3a0] sm:$0xff]
      %v867 = vld [vmem:[%s1 + $0x3a8] sm:$0xff]
      %v868 = vld [vmem:[%s1 + $0x3b0] sm:$0xff]
      %v869 = vld [vmem:[%s1 + $0x3b8] sm:$0xff]
      %v870 = vld [vmem:[%s1 + $0x3c0] sm:$0xff]
      %v871 = vld [vmem:[%s1 + $0x3c8] sm:$0xff]
      %v872 = vld [vmem:[%s1 + $0x3d0] sm:$0xff]
      %v873 = vld [vmem:[%s1 + $0x3d8] sm:$0xff]
      %v874 = vld [vmem:[%s1 + $0x3e0] sm:$0xff]
      %v875 = vld [vmem:[%s1 + $0x3e8] sm:$0xff]
      %v876 = vld [vmem:[%s1 + $0x3f0] sm:$0xff]
      %v877 = vld [vmem:[%s1 + $0x3f8] sm:$0xff]
      %v878 = vld [vmem:[%s1 + $0x400] sm:$0xff]
      %v879 = vld [vmem:[%s1 + $0x408] sm:$0xff]
      %v880 = vld [vmem:[%s1 + $0x410] sm:$0xff]
      %v881 = vld [vmem:[%s1 + $0x418] sm:$0xff]
      %v882 = vld [vmem:[%s1 + $0x420] sm:$0xff]
      %v883 = vld [vmem:[%s1 + $0x428] sm:$0xff]
      %v884 = vld [vmem:[%s1 + $0x430] sm:$0xff]
      %v885 = vld [vmem:[%s1 + $0x438] sm:$0xff]
      %v886 = vld [vmem:[%s1 + $0x440] sm:$0xff]
      %v887 = vld [vmem:[%s1 + $0x448] sm:$0xff]
      %v888 = vld [vmem:[%s1 + $0x450] sm:$0xff]
      %v889 = vld [vmem:[%s1 + $0x458] sm:$0xff]
      %v890 = vld [vmem:[%s1 + $0x460] sm:$0xff]
      %v891 = vld [vmem:[%s1 + $0x468] sm:$0xff]
      %v892 = vld [vmem:[%s1 + $0x470] sm:$0xff]
      %v893 = vld [vmem:[%s1 + $0x478] sm:$0xff]
      %v894 = vld [vmem:[%s2] sm:$0x1]
      %v896 = vlaneseq
      %v897 = vshrl.u32 %v896, 7
      %v898 = vsub.s32 0, %v897
      %v899 = vrot.slane %v894, %v898
      %901 = vmatprep.subr.mxu0 0.0
      %902 = vmatpush1.msra.mxu0 %v750
      %903 = vmatprep.subr.mxu0 0.0
      %904 = vmatpush1.msra.mxu0 %v751
      %905 = vmatprep.subr.mxu0 0.0
      %906 = vmatpush1.msra.mxu0 %v752
      %907 = vmatprep.subr.mxu0 0.0
      %908 = vmatpush1.msra.mxu0 %v753
      %909 = vmatprep.subr.mxu0 0.0
      %910 = vmatpush1.msra.mxu0 %v754
      %911 = vmatprep.subr.mxu0 0.0
      %912 = vmatpush1.msra.mxu0 %v755
      %913 = vmatprep.subr.mxu0 0.0
      %914 = vmatpush1.msra.mxu0 %v756
      %915 = vmatprep.subr.mxu0 0.0
      %916 = vmatpush1.msra.mxu0 %v757
      %917 = vmatprep.subr.mxu0 0.0
      %918 = vmatpush1.msra.mxu0 %v758
      %919 = vmatprep.subr.mxu0 0.0
      %920 = vmatpush1.msra.mxu0 %v759
      %921 = vmatprep.subr.mxu0 0.0
      %922 = vmatpush1.msra.mxu0 %v760
      %923 = vmatprep.subr.mxu0 0.0
      %924 = vmatpush1.msra.mxu0 %v761
      %925 = vmatprep.subr.mxu0 0.0
      %926 = vmatpush1.msra.mxu0 %v762
      %927 = vmatprep.subr.mxu0 0.0
      %928 = vmatpush1.msra.mxu0 %v763
      %929 = vmatprep.subr.mxu0 0.0
      %930 = vmatpush1.msra.mxu0 %v764
      %931 = vmatprep.subr.mxu0 0.0
      %932 = vmatpush1.msra.mxu0 %v765
      %933 = vmatprep.subr.mxu0 0.0
      %934 = vmatpush1.msra.mxu0 %v766
      %935 = vmatprep.subr.mxu0 0.0
      %936 = vmatpush1.msra.mxu0 %v767
      %937 = vmatprep.subr.mxu0 0.0
      %938 = vmatpush1.msra.mxu0 %v768
      %939 = vmatprep.subr.mxu0 0.0
      %940 = vmatpush1.msra.mxu0 %v769
      %941 = vmatprep.subr.mxu0 0.0
      %942 = vmatpush1.msra.mxu0 %v770
      %943 = vmatprep.subr.mxu0 0.0
      %944 = vmatpush1.msra.mxu0 %v771
      %945 = vmatprep.subr.mxu0 0.0
      %946 = vmatpush1.msra.mxu0 %v772
      %947 = vmatprep.subr.mxu0 0.0
      %948 = vmatpush1.msra.mxu0 %v773
      %949 = vmatprep.subr.mxu0 0.0
      %950 = vmatpush1.msra.mxu0 %v774
      %951 = vmatprep.subr.mxu0 0.0
      %952 = vmatpush1.msra.mxu0 %v775
      %953 = vmatprep.subr.mxu0 0.0
      %954 = vmatpush1.msra.mxu0 %v776
      %955 = vmatprep.subr.mxu0 0.0
      %956 = vmatpush1.msra.mxu0 %v777
      %957 = vmatprep.subr.mxu0 0.0
      %958 = vmatpush1.msra.mxu0 %v778
      %959 = vmatprep.subr.mxu0 0.0
      %960 = vmatpush1.msra.mxu0 %v779
      %961 = vmatprep.subr.mxu0 0.0
      %962 = vmatpush1.msra.mxu0 %v780
      %963 = vmatprep.subr.mxu0 0.0
      %964 = vmatpush1.msra.mxu0 %v781
      %965 = vmatprep.mubr.f32.mxu0 %v493
      %966 = vmatmul.mubr.f32.gmra.mrb[0].mxu0 %v388
      %v967 = vpop.f32.mrb[0].mxu0
      %v968 = vadd.f32 %v899, %v967
      %v969 = vpop.f32.mrb[0].mxu0
      %970 = vmatprep.mubr.f32.mxu0 %v495
      %971 = vmatmul.mubr.f32.gmra.mrb[0].mxu0 %v389
      %v972 = vpop.f32.mrb[0].mxu0
      %v973 = vadd.f32 %v899, %v972
      %v974 = vpop.f32.mrb[0].mxu0
      %975 = vmatprep.mubr.f32.mxu0 %v498
      %976 = vmatmul.mubr.f32.gmra.mrb[0].mxu0 %v391
      %v977 = vpop.f32.mrb[0].mxu0
      %v978 = vadd.f32 %v899, %v977
      %v979 = vpop.f32.mrb[0].mxu0
      %980 = vmatprep.mubr.f32.mxu0 %v500
      %981 = vmatmul.mubr.f32.gmra.mrb[0].mxu0 %v392
      %v982 = vpop.f32.mrb[0].mxu0
      %v983 = vadd.f32 %v899, %v982
      %v984 = vpop.f32.mrb[0].mxu0
      %985 = vmatprep.mubr.f32.mxu0 %v503
      %986 = vmatmul.mubr.f32.gmra.mrb[0].mxu0 %v394
      %v987 = vpop.f32.mrb[0].mxu0
      %v988 = vadd.f32 %v899, %v987
      %v989 = vpop.f32.mrb[0].mxu0
      %990 = vmatprep.mubr.f32.mxu0 %v505
      %991 = vmatmul.mubr.f32.gmra.mrb[0].mxu0 %v395
      %v992 = vpop.f32.mrb[0].mxu0
      %v993 = vadd.f32 %v899, %v992
      %v994 = vpop.f32.mrb[0].mxu0
      %995 = vmatprep.mubr.f32.mxu0 %v508
      %996 = vmatmul.mubr.f32.gmra.mrb[0].mxu0 %v397
      %v997 = vpop.f32.mrb[0].mxu0
      %v998 = vadd.f32 %v899, %v997
      %v999 = vpop.f32.mrb[0].mxu0
      %1000 = vmatprep.mubr.f32.mxu0 %v510
      %1001 = vmatmul.mubr.f32.gmra.mrb[0].mxu0 %v398
      %v1002 = vpop.f32.mrb[0].mxu0
      %v1003 = vadd.f32 %v899, %v1002
      %v1004 = vpop.f32.mrb[0].mxu0
      %1005 = vmatprep.mubr.f32.mxu0 %v513
      %1006 = vmatmul.mubr.f32.gmra.mrb[0].mxu0 %v400
      %v1007 = vpop.f32.mrb[0].mxu0
      %v1008 = vadd.f32 %v899, %v1007
      %v1009 = vpop.f32.mrb[0].mxu0
      %1010 = vmatprep.mubr.f32.mxu0 %v515
      %1011 = vmatmul.mubr.f32.gmra.mrb[0].mxu0 %v401
      %v1012 = vpop.f32.mrb[0].mxu0
      %v1013 = vadd.f32 %v899, %v1012
      %v1014 = vpop.f32.mrb[0].mxu0
      %1015 = vmatprep.mubr.f32.mxu0 %v518
      %1016 = vmatmul.mubr.f32.gmra.mrb[0].mxu0 %v403
      %v1017 = vpop.f32.mrb[0].mxu0
      %v1018 = vadd.f32 %v899, %v1017
      %v1019 = vpop.f32.mrb[0].mxu0
      %1020 = vmatprep.mubr.f32.mxu0 %v520
      %1021 = vmatmul.mubr.f32.gmra.mrb[0].mxu0 %v404
      %v1022 = vpop.f32.mrb[0].mxu0
      %v1023 = vadd.f32 %v899, %v1022
      %v1024 = vpop.f32.mrb[0].mxu0
      %1025 = vmatprep.mubr.f32.mxu0 %v523
      %1026 = vmatmul.mubr.f32.gmra.mrb[0].mxu0 %v406
      %v1027 = vpop.f32.mrb[0].mxu0
      %v1028 = vadd.f32 %v899, %v1027
      %v1029 = vpop.f32.mrb[0].mxu0
      %1030 = vmatprep.mubr.f32.mxu0 %v525
      %1031 = vmatmul.mubr.f32.gmra.mrb[0].mxu0 %v407
      %v1032 = vpop.f32.mrb[0].mxu0
      %v1033 = vadd.f32 %v899, %v1032
      %v1034 = vpop.f32.mrb[0].mxu0
      %1035 = vmatprep.mubr.f32.mxu0 %v528
      %1036 = vmatmul.mubr.f32.gmra.mrb[0].mxu0 %v409
      %v1037 = vpop.f32.mrb[0].mxu0
      %v1038 = vadd.f32 %v899, %v1037
      %v1039 = vpop.f32.mrb[0].mxu0
      %1040 = vmatprep.mubr.f32.mxu0 %v530
      %1041 = vmatmul.mubr.f32.gmra.mrb[0].mxu0 %v410
      %v1042 = vpop.f32.mrb[0].mxu0
      %v1043 = vadd.f32 %v899, %v1042
      %v1044 = vpop.f32.mrb[0].mxu0
      %1045 = vmatprep.mubr.f32.mxu0 %v533
      %1046 = vmatmul.mubr.f32.gmra.mrb[0].mxu0 %v412
      %v1047 = vpop.f32.mrb[0].mxu0
      %v1048 = vadd.f32 %v899, %v1047
      %v1049 = vpop.f32.mrb[0].mxu0
      %1050 = vmatprep.mubr.f32.mxu0 %v535
      %1051 = vmatmul.mubr.f32.gmra.mrb[0].mxu0 %v413
      %v1052 = vpop.f32.mrb[0].mxu0
      %v1053 = vadd.f32 %v899, %v1052
      %v1054 = vpop.f32.mrb[0].mxu0
      %1055 = vmatprep.mubr.f32.mxu0 %v538
      %1056 = vmatmul.mubr.f32.gmra.mrb[0].mxu0 %v415
      %v1057 = vpop.f32.mrb[0].mxu0
      %v1058 = vadd.f32 %v899, %v1057
      %v1059 = vpop.f32.mrb[0].mxu0
      %1060 = vmatprep.mubr.f32.mxu0 %v540
      %1061 = vmatmul.mubr.f32.gmra.mrb[0].mxu0 %v416
      %v1062 = vpop.f32.mrb[0].mxu0
      %v1063 = vadd.f32 %v899, %v1062
      %v1064 = vpop.f32.mrb[0].mxu0
      %1065 = vmatprep.mubr.f32.mxu0 %v543
      %1066 = vmatmul.mubr.f32.gmra.mrb[0].mxu0 %v418
      %v1067 = vpop.f32.mrb[0].mxu0
      %v1068 = vadd.f32 %v899, %v1067
      %v1069 = vpop.f32.mrb[0].mxu0
      %1070 = vmatprep.mubr.f32.mxu0 %v545
      %1071 = vmatmul.mubr.f32.gmra.mrb[0].mxu0 %v419
      %v1072 = vpop.f32.mrb[0].mxu0
      %v1073 = vadd.f32 %v899, %v1072
      %v1074 = vpop.f32.mrb[0].mxu0
      %1075 = vmatprep.mubr.f32.mxu0 %v548
      %1076 = vmatmul.mubr.f32.gmra.mrb[0].mxu0 %v421
      %v1077 = vpop.f32.mrb[0].mxu0
      %v1078 = vadd.f32 %v899, %v1077
      %v1079 = vpop.f32.mrb[0].mxu0
      %1080 = vmatprep.mubr.f32.mxu0 %v550
      %1081 = vmatmul.mubr.f32.gmra.mrb[0].mxu0 %v422
      %v1082 = vpop.f32.mrb[0].mxu0
      %v1083 = vadd.f32 %v899, %v1082
      %v1084 = vpop.f32.mrb[0].mxu0
      %1085 = vmatprep.mubr.f32.mxu0 %v553
      %1086 = vmatmul.mubr.f32.gmra.mrb[0].mxu0 %v424
      %v1087 = vpop.f32.mrb[0].mxu0
      %v1088 = vadd.f32 %v899, %v1087
      %v1089 = vpop.f32.mrb[0].mxu0
      %1090 = vmatprep.mubr.f32.mxu0 %v555
      %1091 = vmatmul.mubr.f32.gmra.mrb[0].mxu0 %v425
      %v1092 = vpop.f32.mrb[0].mxu0
      %v1093 = vadd.f32 %v899, %v1092
      %v1094 = vpop.f32.mrb[0].mxu0
      %1095 = vmatprep.mubr.f32.mxu0 %v558
      %1096 = vmatmul.mubr.f32.gmra.mrb[0].mxu0 %v427
      %v1097 = vpop.f32.mrb[0].mxu0
      %v1098 = vadd.f32 %v899, %v1097
      %v1099 = vpop.f32.mrb[0].mxu0
      %1100 = vmatprep.mubr.f32.mxu0 %v560
      %1101 = vmatmul.mubr.f32.gmra.mrb[0].mxu0 %v428
      %v1102 = vpop.f32.mrb[0].mxu0
      %v1103 = vadd.f32 %v899, %v1102
      %v1104 = vpop.f32.mrb[0].mxu0
      %1105 = vmatprep.mubr.f32.mxu0 %v563
      %1106 = vmatmul.mubr.f32.gmra.mrb[0].mxu0 %v430
      %v1107 = vpop.f32.mrb[0].mxu0
      %v1108 = vadd.f32 %v899, %v1107
      %v1109 = vpop.f32.mrb[0].mxu0
      %1110 = vmatprep.mubr.f32.mxu0 %v565
      %1111 = vmatmul.mubr.f32.gmra.mrb[0].mxu0 %v431
      %v1112 = vpop.f32.mrb[0].mxu0
      %v1113 = vadd.f32 %v899, %v1112
      %v1114 = vpop.f32.mrb[0].mxu0
      %1115 = vmatprep.mubr.f32.mxu0 %v568
      %1116 = vmatmul.mubr.f32.gmra.mrb[0].mxu0 %v433
      %v1117 = vpop.f32.mrb[0].mxu0
      %v1118 = vadd.f32 %v899, %v1117
      %v1119 = vpop.f32.mrb[0].mxu0
      %1120 = vmatprep.mubr.f32.mxu0 %v570
      %1121 = vmatmul.mubr.f32.gmra.mrb[0].mxu0 %v434
      %v1122 = vpop.f32.mrb[0].mxu0
      %v1123 = vadd.f32 %v899, %v1122
      %v1124 = vpop.f32.mrb[0].mxu0
      %1125 = vdwg.mxu0
      %1126 = vmatprep.subr.mxu0 0.0
      %1127 = vmatpush1.msra.mxu0 %v782
      %1128 = vmatprep.subr.mxu0 0.0
      %1129 = vmatpush1.msra.mxu0 %v783
      %1130 = vmatprep.subr.mxu0 0.0
      %1131 = vmatpush1.msra.mxu0 %v784
      %1132 = vmatprep.subr.mxu0 0.0
      %1133 = vmatpush1.msra.mxu0 %v785
      %1134 = vmatprep.subr.mxu0 0.0
      %1135 = vmatpush1.msra.mxu0 %v786
      %1136 = vmatprep.subr.mxu0 0.0
      %1137 = vmatpush1.msra.mxu0 %v787
      %1138 = vmatprep.subr.mxu0 0.0
      %1139 = vmatpush1.msra.mxu0 %v788
      %1140 = vmatprep.subr.mxu0 0.0
      %1141 = vmatpush1.msra.mxu0 %v789
      %1142 = vmatprep.subr.mxu0 0.0
      %1143 = vmatpush1.msra.mxu0 %v790
      %1144 = vmatprep.subr.mxu0 0.0
      %1145 = vmatpush1.msra.mxu0 %v791
      %1146 = vmatprep.subr.mxu0 0.0
      %1147 = vmatpush1.msra.mxu0 %v792
      %1148 = vmatprep.subr.mxu0 0.0
      %1149 = vmatpush1.msra.mxu0 %v793
      %1150 = vmatprep.subr.mxu0 0.0
      %1151 = vmatpush1.msra.mxu0 %v794
      %1152 = vmatprep.subr.mxu0 0.0
      %1153 = vmatpush1.msra.mxu0 %v795
      %1154 = vmatprep.subr.mxu0 0.0
      %1155 = vmatpush1.msra.mxu0 %v796
      %1156 = vmatprep.subr.mxu0 0.0
      %1157 = vmatpush1.msra.mxu0 %v797
      %1158 = vmatprep.subr.mxu0 0.0
      %1159 = vmatpush1.msra.mxu0 %v798
      %1160 = vmatprep.subr.mxu0 0.0
      %1161 = vmatpush1.msra.mxu0 %v799
      %1162 = vmatprep.subr.mxu0 0.0
      %1163 = vmatpush1.msra.mxu0 %v800
      %1164 = vmatprep.subr.mxu0 0.0
      %1165 = vmatpush1.msra.mxu0 %v801
      %1166 = vmatprep.subr.mxu0 0.0
      %1167 = vmatpush1.msra.mxu0 %v802
      %1168 = vmatprep.subr.mxu0 0.0
      %1169 = vmatpush1.msra.mxu0 %v803
      %1170 = vmatprep.subr.mxu0 0.0
      %1171 = vmatpush1.msra.mxu0 %v804
      %1172 = vmatprep.subr.mxu0 0.0
      %1173 = vmatpush1.msra.mxu0 %v805
      %1174 = vmatprep.subr.mxu0 0.0
      %1175 = vmatpush1.msra.mxu0 %v806
      %1176 = vmatprep.subr.mxu0 0.0
      %1177 = vmatpush1.msra.mxu0 %v807
      %1178 = vmatprep.subr.mxu0 0.0
      %1179 = vmatpush1.msra.mxu0 %v808
      %1180 = vmatprep.subr.mxu0 0.0
      %1181 = vmatpush1.msra.mxu0 %v809
      %1182 = vmatprep.subr.mxu0 0.0
      %1183 = vmatpush1.msra.mxu0 %v810
      %1184 = vmatprep.subr.mxu0 0.0
      %1185 = vmatpush1.msra.mxu0 %v811
      %1186 = vmatprep.subr.mxu0 0.0
      %1187 = vmatpush1.msra.mxu0 %v812
      %1188 = vmatprep.subr.mxu0 0.0
      %1189 = vmatpush1.msra.mxu0 %v813
      %1190 = vmatprep.mubr.f32.mxu0 %v391
      %1191 = vmatmul.mubr.f32.gmra.mrb[0].mxu0 %v606
      %v1192 = vpop.f32.mrb[0].mxu0
      %v1193 = vadd.f32 %v968, %v1192
      %v1194 = vpop.f32.mrb[0].mxu0
      %1195 = vmatprep.mubr.f32.mxu0 %v392
      %1196 = vmatmul.mubr.f32.gmra.mrb[0].mxu0 %v608
      %v1197 = vpop.f32.mrb[0].mxu0
      %v1198 = vadd.f32 %v973, %v1197
      %v1199 = vpop.f32.mrb[0].mxu0
      %1200 = vmatprep.mubr.f32.mxu0 %v394
      %1201 = vmatmul.mubr.f32.gmra.mrb[0].mxu0 %v611
      %v1202 = vpop.f32.mrb[0].mxu0
      %v1203 = vadd.f32 %v978, %v1202
      %v1204 = vpop.f32.mrb[0].mxu0
      %1205 = vmatprep.mubr.f32.mxu0 %v395
      %1206 = vmatmul.mubr.f32.gmra.mrb[0].mxu0 %v613
      %v1207 = vpop.f32.mrb[0].mxu0
      %v1208 = vadd.f32 %v983, %v1207
      %v1209 = vpop.f32.mrb[0].mxu0
      %1210 = vmatprep.mubr.f32.mxu0 %v397
      %1211 = vmatmul.mubr.f32.gmra.mrb[0].mxu0 %v616
      %v1212 = vpop.f32.mrb[0].mxu0
      %v1213 = vadd.f32 %v988, %v1212
      %v1214 = vpop.f32.mrb[0].mxu0
      %1215 = vmatprep.mubr.f32.mxu0 %v398
      %1216 = vmatmul.mubr.f32.gmra.mrb[0].mxu0 %v618
      %v1217 = vpop.f32.mrb[0].mxu0
      %v1218 = vadd.f32 %v993, %v1217
      %v1219 = vpop.f32.mrb[0].mxu0
      %1220 = vmatprep.mubr.f32.mxu0 %v400
      %1221 = vmatmul.mubr.f32.gmra.mrb[0].mxu0 %v621
      %v1222 = vpop.f32.mrb[0].mxu0
      %v1223 = vadd.f32 %v998, %v1222
      %v1224 = vpop.f32.mrb[0].mxu0
      %1225 = vmatprep.mubr.f32.mxu0 %v401
      %1226 = vmatmul.mubr.f32.gmra.mrb[0].mxu0 %v623
      %v1227 = vpop.f32.mrb[0].mxu0
      %v1228 = vadd.f32 %v1003, %v1227
      %v1229 = vpop.f32.mrb[0].mxu0
      %1230 = vmatprep.mubr.f32.mxu0 %v403
      %1231 = vmatmul.mubr.f32.gmra.mrb[0].mxu0 %v626
      %v1232 = vpop.f32.mrb[0].mxu0
      %v1233 = vadd.f32 %v1008, %v1232
      %v1234 = vpop.f32.mrb[0].mxu0
      %1235 = vmatprep.mubr.f32.mxu0 %v404
      %1236 = vmatmul.mubr.f32.gmra.mrb[0].mxu0 %v628
      %v1237 = vpop.f32.mrb[0].mxu0
      %v1238 = vadd.f32 %v1013, %v1237
      %v1239 = vpop.f32.mrb[0].mxu0
      %1240 = vmatprep.mubr.f32.mxu0 %v406
      %1241 = vmatmul.mubr.f32.gmra.mrb[0].mxu0 %v631
      %v1242 = vpop.f32.mrb[0].mxu0
      %v1243 = vadd.f32 %v1018, %v1242
      %v1244 = vpop.f32.mrb[0].mxu0
      %1245 = vmatprep.mubr.f32.mxu0 %v407
      %1246 = vmatmul.mubr.f32.gmra.mrb[0].mxu0 %v633
      %v1247 = vpop.f32.mrb[0].mxu0
      %v1248 = vadd.f32 %v1023, %v1247
      %v1249 = vpop.f32.mrb[0].mxu0
      %1250 = vmatprep.mubr.f32.mxu0 %v409
      %1251 = vmatmul.mubr.f32.gmra.mrb[0].mxu0 %v636
      %v1252 = vpop.f32.mrb[0].mxu0
      %v1253 = vadd.f32 %v1028, %v1252
      %v1254 = vpop.f32.mrb[0].mxu0
      %1255 = vmatprep.mubr.f32.mxu0 %v410
      %1256 = vmatmul.mubr.f32.gmra.mrb[0].mxu0 %v638
      %v1257 = vpop.f32.mrb[0].mxu0
      %v1258 = vadd.f32 %v1033, %v1257
      %v1259 = vpop.f32.mrb[0].mxu0
      %1260 = vmatprep.mubr.f32.mxu0 %v412
      %1261 = vmatmul.mubr.f32.gmra.mrb[0].mxu0 %v641
      %v1262 = vpop.f32.mrb[0].mxu0
      %v1263 = vadd.f32 %v1038, %v1262
      %v1264 = vpop.f32.mrb[0].mxu0
      %1265 = vmatprep.mubr.f32.mxu0 %v413
      %1266 = vmatmul.mubr.f32.gmra.mrb[0].mxu0 %v643
      %v1267 = vpop.f32.mrb[0].mxu0
      %v1268 = vadd.f32 %v1043, %v1267
      %v1269 = vpop.f32.mrb[0].mxu0
      %1270 = vmatprep.mubr.f32.mxu0 %v415
      %1271 = vmatmul.mubr.f32.gmra.mrb[0].mxu0 %v646
      %v1272 = vpop.f32.mrb[0].mxu0
      %v1273 = vadd.f32 %v1048, %v1272
      %v1274 = vpop.f32.mrb[0].mxu0
      %1275 = vmatprep.mubr.f32.mxu0 %v416
      %1276 = vmatmul.mubr.f32.gmra.mrb[0].mxu0 %v648
      %v1277 = vpop.f32.mrb[0].mxu0
      %v1278 = vadd.f32 %v1053, %v1277
      %v1279 = vpop.f32.mrb[0].mxu0
      %1280 = vmatprep.mubr.f32.mxu0 %v418
      %1281 = vmatmul.mubr.f32.gmra.mrb[0].mxu0 %v651
      %v1282 = vpop.f32.mrb[0].mxu0
      %v1283 = vadd.f32 %v1058, %v1282
      %v1284 = vpop.f32.mrb[0].mxu0
      %1285 = vmatprep.mubr.f32.mxu0 %v419
      %1286 = vmatmul.mubr.f32.gmra.mrb[0].mxu0 %v653
      %v1287 = vpop.f32.mrb[0].mxu0
      %v1288 = vadd.f32 %v1063, %v1287
      %v1289 = vpop.f32.mrb[0].mxu0
      %1290 = vmatprep.mubr.f32.mxu0 %v421
      %1291 = vmatmul.mubr.f32.gmra.mrb[0].mxu0 %v656
      %v1292 = vpop.f32.mrb[0].mxu0
      %v1293 = vadd.f32 %v1068, %v1292
      %v1294 = vpop.f32.mrb[0].mxu0
      %1295 = vmatprep.mubr.f32.mxu0 %v422
      %1296 = vmatmul.mubr.f32.gmra.mrb[0].mxu0 %v658
      %v1297 = vpop.f32.mrb[0].mxu0
      %v1298 = vadd.f32 %v1073, %v1297
      %v1299 = vpop.f32.mrb[0].mxu0
      %1300 = vmatprep.mubr.f32.mxu0 %v424
      %1301 = vmatmul.mubr.f32.gmra.mrb[0].mxu0 %v661
      %v1302 = vpop.f32.mrb[0].mxu0
      %v1303 = vadd.f32 %v1078, %v1302
      %v1304 = vpop.f32.mrb[0].mxu0
      %1305 = vmatprep.mubr.f32.mxu0 %v425
      %1306 = vmatmul.mubr.f32.gmra.mrb[0].mxu0 %v663
      %v1307 = vpop.f32.mrb[0].mxu0
      %v1308 = vadd.f32 %v1083, %v1307
      %v1309 = vpop.f32.mrb[0].mxu0
      %1310 = vmatprep.mubr.f32.mxu0 %v427
      %1311 = vmatmul.mubr.f32.gmra.mrb[0].mxu0 %v666
      %v1312 = vpop.f32.mrb[0].mxu0
      %v1313 = vadd.f32 %v1088, %v1312
      %v1314 = vpop.f32.mrb[0].mxu0
      %1315 = vmatprep.mubr.f32.mxu0 %v428
      %1316 = vmatmul.mubr.f32.gmra.mrb[0].mxu0 %v668
      %v1317 = vpop.f32.mrb[0].mxu0
      %v1318 = vadd.f32 %v1093, %v1317
      %v1319 = vpop.f32.mrb[0].mxu0
      %1320 = vmatprep.mubr.f32.mxu0 %v430
      %1321 = vmatmul.mubr.f32.gmra.mrb[0].mxu0 %v671
      %v1322 = vpop.f32.mrb[0].mxu0
      %v1323 = vadd.f32 %v1098, %v1322
      %v1324 = vpop.f32.mrb[0].mxu0
      %1325 = vmatprep.mubr.f32.mxu0 %v431
      %1326 = vmatmul.mubr.f32.gmra.mrb[0].mxu0 %v673
      %v1327 = vpop.f32.mrb[0].mxu0
      %v1328 = vadd.f32 %v1103, %v1327
      %v1329 = vpop.f32.mrb[0].mxu0
      %1330 = vmatprep.mubr.f32.mxu0 %v433
      %1331 = vmatmul.mubr.f32.gmra.mrb[0].mxu0 %v676
      %v1332 = vpop.f32.mrb[0].mxu0
      %v1333 = vadd.f32 %v1108, %v1332
      %v1334 = vpop.f32.mrb[0].mxu0
      %1335 = vmatprep.mubr.f32.mxu0 %v434
      %1336 = vmatmul.mubr.f32.gmra.mrb[0].mxu0 %v678
      %v1337 = vpop.f32.mrb[0].mxu0
      %v1338 = vadd.f32 %v1113, %v1337
      %v1339 = vpop.f32.mrb[0].mxu0
      %1340 = vmatprep.mubr.f32.mxu0 %v436
      %1341 = vmatmul.mubr.f32.gmra.mrb[0].mxu0 %v681
      %v1342 = vpop.f32.mrb[0].mxu0
      %v1343 = vadd.f32 %v1118, %v1342
      %v1344 = vpop.f32.mrb[0].mxu0
      %1345 = vmatprep.mubr.f32.mxu0 %v437
      %1346 = vmatmul.mubr.f32.gmra.mrb[0].mxu0 %v683
      %v1347 = vpop.f32.mrb[0].mxu0
      %v1348 = vadd.f32 %v1123, %v1347
      %v1349 = vpop.f32.mrb[0].mxu0
      %1350 = vdwg.mxu0
      %1351 = vmatprep.subr.mxu0 0.0
      %1352 = vmatpush1.msra.mxu0 %v814
      %1353 = vmatprep.subr.mxu0 0.0
      %1354 = vmatpush1.msra.mxu0 %v815
      %1355 = vmatprep.subr.mxu0 0.0
      %1356 = vmatpush1.msra.mxu0 %v816
      %1357 = vmatprep.subr.mxu0 0.0
      %1358 = vmatpush1.msra.mxu0 %v817
      %1359 = vmatprep.subr.mxu0 0.0
      %1360 = vmatpush1.msra.mxu0 %v818
      %1361 = vmatprep.subr.mxu0 0.0
      %1362 = vmatpush1.msra.mxu0 %v819
      %1363 = vmatprep.subr.mxu0 0.0
      %1364 = vmatpush1.msra.mxu0 %v820
      %1365 = vmatprep.subr.mxu0 0.0
      %1366 = vmatpush1.msra.mxu0 %v821
      %1367 = vmatprep.subr.mxu0 0.0
      %1368 = vmatpush1.msra.mxu0 %v822
      %1369 = vmatprep.subr.mxu0 0.0
      %1370 = vmatpush1.msra.mxu0 %v823
      %1371 = vmatprep.subr.mxu0 0.0
      %1372 = vmatpush1.msra.mxu0 %v824
      %1373 = vmatprep.subr.mxu0 0.0
      %1374 = vmatpush1.msra.mxu0 %v825
      %1375 = vmatprep.subr.mxu0 0.0
      %1376 = vmatpush1.msra.mxu0 %v826
      %1377 = vmatprep.subr.mxu0 0.0
      %1378 = vmatpush1.msra.mxu0 %v827
      %1379 = vmatprep.subr.mxu0 0.0
      %1380 = vmatpush1.msra.mxu0 %v828
      %1381 = vmatprep.subr.mxu0 0.0
      %1382 = vmatpush1.msra.mxu0 %v829
      %1383 = vmatprep.subr.mxu0 0.0
      %1384 = vmatpush1.msra.mxu0 %v830
      %1385 = vmatprep.subr.mxu0 0.0
      %1386 = vmatpush1.msra.mxu0 %v831
      %1387 = vmatprep.subr.mxu0 0.0
      %1388 = vmatpush1.msra.mxu0 %v832
      %1389 = vmatprep.subr.mxu0 0.0
      %1390 = vmatpush1.msra.mxu0 %v833
      %1391 = vmatprep.subr.mxu0 0.0
      %1392 = vmatpush1.msra.mxu0 %v834
      %1393 = vmatprep.subr.mxu0 0.0
      %1394 = vmatpush1.msra.mxu0 %v835
      %1395 = vmatprep.subr.mxu0 0.0
      %1396 = vmatpush1.msra.mxu0 %v836
      %1397 = vmatprep.subr.mxu0 0.0
      %1398 = vmatpush1.msra.mxu0 %v837
      %1399 = vmatprep.subr.mxu0 0.0
      %1400 = vmatpush1.msra.mxu0 %v838
      %1401 = vmatprep.subr.mxu0 0.0
      %1402 = vmatpush1.msra.mxu0 %v839
      %1403 = vmatprep.subr.mxu0 0.0
      %1404 = vmatpush1.msra.mxu0 %v840
      %1405 = vmatprep.subr.mxu0 0.0
      %1406 = vmatpush1.msra.mxu0 %v841
      %1407 = vmatprep.subr.mxu0 0.0
      %1408 = vmatpush1.msra.mxu0 %v842
      %1409 = vmatprep.subr.mxu0 0.0
      %1410 = vmatpush1.msra.mxu0 %v843
      %1411 = vmatprep.subr.mxu0 0.0
      %1412 = vmatpush1.msra.mxu0 %v844
      %1413 = vmatprep.subr.mxu0 0.0
      %1414 = vmatpush1.msra.mxu0 %v845
      %1415 = vmatprep.mubr.f32.mxu0 %v611
      %1416 = vmatmul.mubr.f32.gmra.mrb[0].mxu0 %v498
      %v1417 = vpop.f32.mrb[0].mxu0
      %v1418 = vadd.f32 %v1193, %v1417
      %v1419 = vpop.f32.mrb[0].mxu0
      %1420 = vmatprep.mubr.f32.mxu0 %v613
      %1421 = vmatmul.mubr.f32.gmra.mrb[0].mxu0 %v500
      %v1422 = vpop.f32.mrb[0].mxu0
      %v1423 = vadd.f32 %v1198, %v1422
      %v1424 = vpop.f32.mrb[0].mxu0
      %1425 = vmatprep.mubr.f32.mxu0 %v616
      %1426 = vmatmul.mubr.f32.gmra.mrb[0].mxu0 %v503
      %v1427 = vpop.f32.mrb[0].mxu0
      %v1428 = vadd.f32 %v1203, %v1427
      %v1429 = vpop.f32.mrb[0].mxu0
      %1430 = vmatprep.mubr.f32.mxu0 %v618
      %1431 = vmatmul.mubr.f32.gmra.mrb[0].mxu0 %v505
      %v1432 = vpop.f32.mrb[0].mxu0
      %v1433 = vadd.f32 %v1208, %v1432
      %v1434 = vpop.f32.mrb[0].mxu0
      %1435 = vmatprep.mubr.f32.mxu0 %v621
      %1436 = vmatmul.mubr.f32.gmra.mrb[0].mxu0 %v508
      %v1437 = vpop.f32.mrb[0].mxu0
      %v1438 = vadd.f32 %v1213, %v1437
      %v1439 = vpop.f32.mrb[0].mxu0
      %1440 = vmatprep.mubr.f32.mxu0 %v623
      %1441 = vmatmul.mubr.f32.gmra.mrb[0].mxu0 %v510
      %v1442 = vpop.f32.mrb[0].mxu0
      %v1443 = vadd.f32 %v1218, %v1442
      %v1444 = vpop.f32.mrb[0].mxu0
      %1445 = vmatprep.mubr.f32.mxu0 %v626
      %1446 = vmatmul.mubr.f32.gmra.mrb[0].mxu0 %v513
      %v1447 = vpop.f32.mrb[0].mxu0
      %v1448 = vadd.f32 %v1223, %v1447
      %v1449 = vpop.f32.mrb[0].mxu0
      %1450 = vmatprep.mubr.f32.mxu0 %v628
      %1451 = vmatmul.mubr.f32.gmra.mrb[0].mxu0 %v515
      %v1452 = vpop.f32.mrb[0].mxu0
      %v1453 = vadd.f32 %v1228, %v1452
      %v1454 = vpop.f32.mrb[0].mxu0
      %1455 = vmatprep.mubr.f32.mxu0 %v631
      %1456 = vmatmul.mubr.f32.gmra.mrb[0].mxu0 %v518
      %v1457 = vpop.f32.mrb[0].mxu0
      %v1458 = vadd.f32 %v1233, %v1457
      %v1459 = vpop.f32.mrb[0].mxu0
      %1460 = vmatprep.mubr.f32.mxu0 %v633
      %1461 = vmatmul.mubr.f32.gmra.mrb[0].mxu0 %v520
      %v1462 = vpop.f32.mrb[0].mxu0
      %v1463 = vadd.f32 %v1238, %v1462
      %v1464 = vpop.f32.mrb[0].mxu0
      %1465 = vmatprep.mubr.f32.mxu0 %v636
      %1466 = vmatmul.mubr.f32.gmra.mrb[0].mxu0 %v523
      %v1467 = vpop.f32.mrb[0].mxu0
      %v1468 = vadd.f32 %v1243, %v1467
      %v1469 = vpop.f32.mrb[0].mxu0
      %1470 = vmatprep.mubr.f32.mxu0 %v638
      %1471 = vmatmul.mubr.f32.gmra.mrb[0].mxu0 %v525
      %v1472 = vpop.f32.mrb[0].mxu0
      %v1473 = vadd.f32 %v1248, %v1472
      %v1474 = vpop.f32.mrb[0].mxu0
      %1475 = vmatprep.mubr.f32.mxu0 %v641
      %1476 = vmatmul.mubr.f32.gmra.mrb[0].mxu0 %v528
      %v1477 = vpop.f32.mrb[0].mxu0
      %v1478 = vadd.f32 %v1253, %v1477
      %v1479 = vpop.f32.mrb[0].mxu0
      %1480 = vmatprep.mubr.f32.mxu0 %v643
      %1481 = vmatmul.mubr.f32.gmra.mrb[0].mxu0 %v530
      %v1482 = vpop.f32.mrb[0].mxu0
      %v1483 = vadd.f32 %v1258, %v1482
      %v1484 = vpop.f32.mrb[0].mxu0
      %1485 = vmatprep.mubr.f32.mxu0 %v646
      %1486 = vmatmul.mubr.f32.gmra.mrb[0].mxu0 %v533
      %v1487 = vpop.f32.mrb[0].mxu0
      %v1488 = vadd.f32 %v1263, %v1487
      %v1489 = vpop.f32.mrb[0].mxu0
      %1490 = vmatprep.mubr.f32.mxu0 %v648
      %1491 = vmatmul.mubr.f32.gmra.mrb[0].mxu0 %v535
      %v1492 = vpop.f32.mrb[0].mxu0
      %v1493 = vadd.f32 %v1268, %v1492
      %v1494 = vpop.f32.mrb[0].mxu0
      %1495 = vmatprep.mubr.f32.mxu0 %v651
      %1496 = vmatmul.mubr.f32.gmra.mrb[0].mxu0 %v538
      %v1497 = vpop.f32.mrb[0].mxu0
      %v1498 = vadd.f32 %v1273, %v1497
      %v1499 = vpop.f32.mrb[0].mxu0
      %1500 = vmatprep.mubr.f32.mxu0 %v653
      %1501 = vmatmul.mubr.f32.gmra.mrb[0].mxu0 %v540
      %v1502 = vpop.f32.mrb[0].mxu0
      %v1503 = vadd.f32 %v1278, %v1502
      %v1504 = vpop.f32.mrb[0].mxu0
      %1505 = vmatprep.mubr.f32.mxu0 %v656
      %1506 = vmatmul.mubr.f32.gmra.mrb[0].mxu0 %v543
      %v1507 = vpop.f32.mrb[0].mxu0
      %v1508 = vadd.f32 %v1283, %v1507
      %v1509 = vpop.f32.mrb[0].mxu0
      %1510 = vmatprep.mubr.f32.mxu0 %v658
      %1511 = vmatmul.mubr.f32.gmra.mrb[0].mxu0 %v545
      %v1512 = vpop.f32.mrb[0].mxu0
      %v1513 = vadd.f32 %v1288, %v1512
      %v1514 = vpop.f32.mrb[0].mxu0
      %1515 = vmatprep.mubr.f32.mxu0 %v661
      %1516 = vmatmul.mubr.f32.gmra.mrb[0].mxu0 %v548
      %v1517 = vpop.f32.mrb[0].mxu0
      %v1518 = vadd.f32 %v1293, %v1517
      %v1519 = vpop.f32.mrb[0].mxu0
      %1520 = vmatprep.mubr.f32.mxu0 %v663
      %1521 = vmatmul.mubr.f32.gmra.mrb[0].mxu0 %v550
      %v1522 = vpop.f32.mrb[0].mxu0
      %v1523 = vadd.f32 %v1298, %v1522
      %v1524 = vpop.f32.mrb[0].mxu0
      %1525 = vmatprep.mubr.f32.mxu0 %v666
      %1526 = vmatmul.mubr.f32.gmra.mrb[0].mxu0 %v553
      %v1527 = vpop.f32.mrb[0].mxu0
      %v1528 = vadd.f32 %v1303, %v1527
      %v1529 = vpop.f32.mrb[0].mxu0
      %1530 = vmatprep.mubr.f32.mxu0 %v668
      %1531 = vmatmul.mubr.f32.gmra.mrb[0].mxu0 %v555
      %v1532 = vpop.f32.mrb[0].mxu0
      %v1533 = vadd.f32 %v1308, %v1532
      %v1534 = vpop.f32.mrb[0].mxu0
      %1535 = vmatprep.mubr.f32.mxu0 %v671
      %1536 = vmatmul.mubr.f32.gmra.mrb[0].mxu0 %v558
      %v1537 = vpop.f32.mrb[0].mxu0
      %v1538 = vadd.f32 %v1313, %v1537
      %v1539 = vpop.f32.mrb[0].mxu0
      %1540 = vmatprep.mubr.f32.mxu0 %v673
      %1541 = vmatmul.mubr.f32.gmra.mrb[0].mxu0 %v560
      %v1542 = vpop.f32.mrb[0].mxu0
      %v1543 = vadd.f32 %v1318, %v1542
      %v1544 = vpop.f32.mrb[0].mxu0
      %1545 = vmatprep.mubr.f32.mxu0 %v676
      %1546 = vmatmul.mubr.f32.gmra.mrb[0].mxu0 %v563
      %v1547 = vpop.f32.mrb[0].mxu0
      %v1548 = vadd.f32 %v1323, %v1547
      %v1549 = vpop.f32.mrb[0].mxu0
      %1550 = vmatprep.mubr.f32.mxu0 %v678
      %1551 = vmatmul.mubr.f32.gmra.mrb[0].mxu0 %v565
      %v1552 = vpop.f32.mrb[0].mxu0
      %v1553 = vadd.f32 %v1328, %v1552
      %v1554 = vpop.f32.mrb[0].mxu0
      %1555 = vmatprep.mubr.f32.mxu0 %v681
      %1556 = vmatmul.mubr.f32.gmra.mrb[0].mxu0 %v568
      %v1557 = vpop.f32.mrb[0].mxu0
      %v1558 = vadd.f32 %v1333, %v1557
      %v1559 = vpop.f32.mrb[0].mxu0
      %1560 = vmatprep.mubr.f32.mxu0 %v683
      %1561 = vmatmul.mubr.f32.gmra.mrb[0].mxu0 %v570
      %v1562 = vpop.f32.mrb[0].mxu0
      %v1563 = vadd.f32 %v1338, %v1562
      %v1564 = vpop.f32.mrb[0].mxu0
      %1565 = vmatprep.mubr.f32.mxu0 %v728
      %1566 = vmatmul.mubr.f32.gmra.mrb[0].mxu0 %v721
      %v1567 = vpop.f32.mrb[0].mxu0
      %v1568 = vadd.f32 %v1343, %v1567
      %v1569 = vpop.f32.mrb[0].mxu0
      %1570 = vmatprep.mubr.f32.mxu0 %v730
      %1571 = vmatmul.mubr.f32.gmra.mrb[0].mxu0 %v723
      %v1572 = vpop.f32.mrb[0].mxu0
      %v1573 = vadd.f32 %v1348, %v1572
      %v1574 = vpop.f32.mrb[0].mxu0
      %1575 = vdwg.mxu0
      %1576 = vmatprep.subr.mxu0 0.0
      %1577 = vmatpush1.msra.mxu0 %v846
      %1578 = vmatprep.subr.mxu0 0.0
      %1579 = vmatpush1.msra.mxu0 %v847
      %1580 = vmatprep.subr.mxu0 0.0
      %1581 = vmatpush1.msra.mxu0 %v848
      %1582 = vmatprep.subr.mxu0 0.0
      %1583 = vmatpush1.msra.mxu0 %v849
      %1584 = vmatprep.subr.mxu0 0.0
      %1585 = vmatpush1.msra.mxu0 %v850
      %1586 = vmatprep.subr.mxu0 0.0
      %1587 = vmatpush1.msra.mxu0 %v851
      %1588 = vmatprep.subr.mxu0 0.0
      %1589 = vmatpush1.msra.mxu0 %v852
      %1590 = vmatprep.subr.mxu0 0.0
      %1591 = vmatpush1.msra.mxu0 %v853
      %1592 = vmatprep.subr.mxu0 0.0
      %1593 = vmatpush1.msra.mxu0 %v854
      %1594 = vmatprep.subr.mxu0 0.0
      %1595 = vmatpush1.msra.mxu0 %v855
      %1596 = vmatprep.subr.mxu0 0.0
      %1597 = vmatpush1.msra.mxu0 %v856
      %1598 = vmatprep.subr.mxu0 0.0
      %1599 = vmatpush1.msra.mxu0 %v857
      %1600 = vmatprep.subr.mxu0 0.0
      %1601 = vmatpush1.msra.mxu0 %v858
      %1602 = vmatprep.subr.mxu0 0.0
      %1603 = vmatpush1.msra.mxu0 %v859
      %1604 = vmatprep.subr.mxu0 0.0
      %1605 = vmatpush1.msra.mxu0 %v860
      %1606 = vmatprep.subr.mxu0 0.0
      %1607 = vmatpush1.msra.mxu0 %v861
      %1608 = vmatprep.subr.mxu0 0.0
      %1609 = vmatpush1.msra.mxu0 %v862
      %1610 = vmatprep.subr.mxu0 0.0
      %1611 = vmatpush1.msra.mxu0 %v863
      %1612 = vmatprep.subr.mxu0 0.0
      %1613 = vmatpush1.msra.mxu0 %v864
      %1614 = vmatprep.subr.mxu0 0.0
      %1615 = vmatpush1.msra.mxu0 %v865
      %1616 = vmatprep.subr.mxu0 0.0
      %1617 = vmatpush1.msra.mxu0 %v866
      %1618 = vmatprep.subr.mxu0 0.0
      %1619 = vmatpush1.msra.mxu0 %v867
      %1620 = vmatprep.subr.mxu0 0.0
      %1621 = vmatpush1.msra.mxu0 %v868
      %1622 = vmatprep.subr.mxu0 0.0
      %1623 = vmatpush1.msra.mxu0 %v869
      %1624 = vmatprep.subr.mxu0 0.0
      %1625 = vmatpush1.msra.mxu0 %v870
      %1626 = vmatprep.subr.mxu0 0.0
      %1627 = vmatpush1.msra.mxu0 %v871
      %1628 = vmatprep.subr.mxu0 0.0
      %1629 = vmatpush1.msra.mxu0 %v872
      %1630 = vmatprep.subr.mxu0 0.0
      %1631 = vmatpush1.msra.mxu0 %v873
      %1632 = vmatprep.subr.mxu0 0.0
      %1633 = vmatpush1.msra.mxu0 %v874
      %1634 = vmatprep.subr.mxu0 0.0
      %1635 = vmatpush1.msra.mxu0 %v875
      %1636 = vmatprep.subr.mxu0 0.0
      %1637 = vmatpush1.msra.mxu0 %v876
      %1638 = vmatprep.subr.mxu0 0.0
      %1639 = vmatpush1.msra.mxu0 %v877
      %1640 = vmatprep.mubr.f32.mxu0 %v503
      %1641 = vmatmul.mubr.f32.gmra.mrb[0].mxu0 %v394
      %v1642 = vpop.f32.mrb[0].mxu0
      %v1643 = vadd.f32 %v1418, %v1642
      %v1644 = vpop.f32.mrb[0].mxu0
      %1645 = vmatprep.mubr.f32.mxu0 %v505
      %1646 = vmatmul.mubr.f32.gmra.mrb[0].mxu0 %v395
      %v1647 = vpop.f32.mrb[0].mxu0
      %v1648 = vadd.f32 %v1423, %v1647
      %v1649 = vpop.f32.mrb[0].mxu0
      %1650 = vmatprep.mubr.f32.mxu0 %v508
      %1651 = vmatmul.mubr.f32.gmra.mrb[0].mxu0 %v397
      %v1652 = vpop.f32.mrb[0].mxu0
      %v1653 = vadd.f32 %v1428, %v1652
      %v1654 = vpop.f32.mrb[0].mxu0
      %1655 = vmatprep.mubr.f32.mxu0 %v510
      %1656 = vmatmul.mubr.f32.gmra.mrb[0].mxu0 %v398
      %v1657 = vpop.f32.mrb[0].mxu0
      %v1658 = vadd.f32 %v1433, %v1657
      %v1659 = vpop.f32.mrb[0].mxu0
      %1660 = vmatprep.mubr.f32.mxu0 %v513
      %1661 = vmatmul.mubr.f32.gmra.mrb[0].mxu0 %v400
      %v1662 = vpop.f32.mrb[0].mxu0
      %v1663 = vadd.f32 %v1438, %v1662
      %v1664 = vpop.f32.mrb[0].mxu0
      %1665 = vmatprep.mubr.f32.mxu0 %v515
      %1666 = vmatmul.mubr.f32.gmra.mrb[0].mxu0 %v401
      %v1667 = vpop.f32.mrb[0].mxu0
      %v1668 = vadd.f32 %v1443, %v1667
      %v1669 = vpop.f32.mrb[0].mxu0
      %1670 = vmatprep.mubr.f32.mxu0 %v518
      %1671 = vmatmul.mubr.f32.gmra.mrb[0].mxu0 %v403
      %v1672 = vpop.f32.mrb[0].mxu0
      %v1673 = vadd.f32 %v1448, %v1672
      %v1674 = vpop.f32.mrb[0].mxu0
      %1675 = vmatprep.mubr.f32.mxu0 %v520
      %1676 = vmatmul.mubr.f32.gmra.mrb[0].mxu0 %v404
      %v1677 = vpop.f32.mrb[0].mxu0
      %v1678 = vadd.f32 %v1453, %v1677
      %v1679 = vpop.f32.mrb[0].mxu0
      %1680 = vmatprep.mubr.f32.mxu0 %v523
      %1681 = vmatmul.mubr.f32.gmra.mrb[0].mxu0 %v406
      %v1682 = vpop.f32.mrb[0].mxu0
      %v1683 = vadd.f32 %v1458, %v1682
      %v1684 = vpop.f32.mrb[0].mxu0
      %1685 = vmatprep.mubr.f32.mxu0 %v525
      %1686 = vmatmul.mubr.f32.gmra.mrb[0].mxu0 %v407
      %v1687 = vpop.f32.mrb[0].mxu0
      %v1688 = vadd.f32 %v1463, %v1687
      %v1689 = vpop.f32.mrb[0].mxu0
      %1690 = vmatprep.mubr.f32.mxu0 %v528
      %1691 = vmatmul.mubr.f32.gmra.mrb[0].mxu0 %v409
      %v1692 = vpop.f32.mrb[0].mxu0
      %v1693 = vadd.f32 %v1468, %v1692
      %v1694 = vpop.f32.mrb[0].mxu0
      %1695 = vmatprep.mubr.f32.mxu0 %v530
      %1696 = vmatmul.mubr.f32.gmra.mrb[0].mxu0 %v410
      %v1697 = vpop.f32.mrb[0].mxu0
      %v1698 = vadd.f32 %v1473, %v1697
      %v1699 = vpop.f32.mrb[0].mxu0
      %1700 = vmatprep.mubr.f32.mxu0 %v533
      %1701 = vmatmul.mubr.f32.gmra.mrb[0].mxu0 %v412
      %v1702 = vpop.f32.mrb[0].mxu0
      %v1703 = vadd.f32 %v1478, %v1702
      %v1704 = vpop.f32.mrb[0].mxu0
      %1705 = vmatprep.mubr.f32.mxu0 %v535
      %1706 = vmatmul.mubr.f32.gmra.mrb[0].mxu0 %v413
      %v1707 = vpop.f32.mrb[0].mxu0
      %v1708 = vadd.f32 %v1483, %v1707
      %v1709 = vpop.f32.mrb[0].mxu0
      %1710 = vmatprep.mubr.f32.mxu0 %v538
      %1711 = vmatmul.mubr.f32.gmra.mrb[0].mxu0 %v415
      %v1712 = vpop.f32.mrb[0].mxu0
      %v1713 = vadd.f32 %v1488, %v1712
      %v1714 = vpop.f32.mrb[0].mxu0
      %1715 = vmatprep.mubr.f32.mxu0 %v540
      %1716 = vmatmul.mubr.f32.gmra.mrb[0].mxu0 %v416
      %v1717 = vpop.f32.mrb[0].mxu0
      %v1718 = vadd.f32 %v1493, %v1717
      %v1719 = vpop.f32.mrb[0].mxu0
      %1720 = vmatprep.mubr.f32.mxu0 %v543
      %1721 = vmatmul.mubr.f32.gmra.mrb[0].mxu0 %v418
      %v1722 = vpop.f32.mrb[0].mxu0
      %v1723 = vadd.f32 %v1498, %v1722
      %v1724 = vpop.f32.mrb[0].mxu0
      %1725 = vmatprep.mubr.f32.mxu0 %v545
      %1726 = vmatmul.mubr.f32.gmra.mrb[0].mxu0 %v419
      %v1727 = vpop.f32.mrb[0].mxu0
      %v1728 = vadd.f32 %v1503, %v1727
      %v1729 = vpop.f32.mrb[0].mxu0
      %1730 = vmatprep.mubr.f32.mxu0 %v548
      %1731 = vmatmul.mubr.f32.gmra.mrb[0].mxu0 %v421
      %v1732 = vpop.f32.mrb[0].mxu0
      %v1733 = vadd.f32 %v1508, %v1732
      %v1734 = vpop.f32.mrb[0].mxu0
      %1735 = vmatprep.mubr.f32.mxu0 %v550
      %1736 = vmatmul.mubr.f32.gmra.mrb[0].mxu0 %v422
      %v1737 = vpop.f32.mrb[0].mxu0
      %v1738 = vadd.f32 %v1513, %v1737
      %v1739 = vpop.f32.mrb[0].mxu0
      %1740 = vmatprep.mubr.f32.mxu0 %v553
      %1741 = vmatmul.mubr.f32.gmra.mrb[0].mxu0 %v424
      %v1742 = vpop.f32.mrb[0].mxu0
      %v1743 = vadd.f32 %v1518, %v1742
      %v1744 = vpop.f32.mrb[0].mxu0
      %1745 = vmatprep.mubr.f32.mxu0 %v555
      %1746 = vmatmul.mubr.f32.gmra.mrb[0].mxu0 %v425
      %v1747 = vpop.f32.mrb[0].mxu0
      %v1748 = vadd.f32 %v1523, %v1747
      %v1749 = vpop.f32.mrb[0].mxu0
      %1750 = vmatprep.mubr.f32.mxu0 %v558
      %1751 = vmatmul.mubr.f32.gmra.mrb[0].mxu0 %v427
      %v1752 = vpop.f32.mrb[0].mxu0
      %v1753 = vadd.f32 %v1528, %v1752
      %v1754 = vpop.f32.mrb[0].mxu0
      %1755 = vmatprep.mubr.f32.mxu0 %v560
      %1756 = vmatmul.mubr.f32.gmra.mrb[0].mxu0 %v428
      %v1757 = vpop.f32.mrb[0].mxu0
      %v1758 = vadd.f32 %v1533, %v1757
      %v1759 = vpop.f32.mrb[0].mxu0
      %1760 = vmatprep.mubr.f32.mxu0 %v563
      %1761 = vmatmul.mubr.f32.gmra.mrb[0].mxu0 %v430
      %v1762 = vpop.f32.mrb[0].mxu0
      %v1763 = vadd.f32 %v1538, %v1762
      %v1764 = vpop.f32.mrb[0].mxu0
      %1765 = vmatprep.mubr.f32.mxu0 %v565
      %1766 = vmatmul.mubr.f32.gmra.mrb[0].mxu0 %v431
      %v1767 = vpop.f32.mrb[0].mxu0
      %v1768 = vadd.f32 %v1543, %v1767
      %v1769 = vpop.f32.mrb[0].mxu0
      %1770 = vmatprep.mubr.f32.mxu0 %v568
      %1771 = vmatmul.mubr.f32.gmra.mrb[0].mxu0 %v433
      %v1772 = vpop.f32.mrb[0].mxu0
      %v1773 = vadd.f32 %v1548, %v1772
      %v1774 = vpop.f32.mrb[0].mxu0
      %1775 = vmatprep.mubr.f32.mxu0 %v570
      %1776 = vmatmul.mubr.f32.gmra.mrb[0].mxu0 %v434
      %v1777 = vpop.f32.mrb[0].mxu0
      %v1778 = vadd.f32 %v1553, %v1777
      %v1779 = vpop.f32.mrb[0].mxu0
      %1780 = vmatprep.mubr.f32.mxu0 %v721
      %1781 = vmatmul.mubr.f32.gmra.mrb[0].mxu0 %v436
      %v1782 = vpop.f32.mrb[0].mxu0
      %v1783 = vadd.f32 %v1558, %v1782
      %v1784 = vpop.f32.mrb[0].mxu0
      %1785 = vmatprep.mubr.f32.mxu0 %v723
      %1786 = vmatmul.mubr.f32.gmra.mrb[0].mxu0 %v437
      %v1787 = vpop.f32.mrb[0].mxu0
      %v1788 = vadd.f32 %v1563, %v1787
      %v1789 = vpop.f32.mrb[0].mxu0
      %1790 = vmatprep.mubr.f32.mxu0 %v738
      %1791 = vmatmul.mubr.f32.gmra.mrb[0].mxu0 %v439
      %v1792 = vpop.f32.mrb[0].mxu0
      %v1793 = vadd.f32 %v1568, %v1792
      %v1794 = vpop.f32.mrb[0].mxu0
      %1795 = vmatprep.mubr.f32.mxu0 %v740
      %1796 = vmatmul.mubr.f32.gmra.mrb[0].mxu0 %v440
      %v1797 = vpop.f32.mrb[0].mxu0
      %v1798 = vadd.f32 %v1573, %v1797
      %v1799 = vpop.f32.mrb[0].mxu0
      %1800 = vdwg.mxu0
      %1801 = vmatprep.subr.mxu0 0.0
      %1802 = vmatpush1.msra.mxu0 %v878
      %1803 = vmatprep.subr.mxu0 0.0
      %1804 = vmatpush1.msra.mxu0 %v879
      %1805 = vmatprep.subr.mxu0 0.0
      %1806 = vmatpush1.msra.mxu0 %v880
      %1807 = vmatprep.subr.mxu0 0.0
      %1808 = vmatpush1.msra.mxu0 %v881
      %1809 = vmatprep.subr.mxu0 0.0
      %1810 = vmatpush1.msra.mxu0 %v882
      %1811 = vmatprep.subr.mxu0 0.0
      %1812 = vmatpush1.msra.mxu0 %v883
      %1813 = vmatprep.subr.mxu0 0.0
      %1814 = vmatpush1.msra.mxu0 %v884
      %1815 = vmatprep.subr.mxu0 0.0
      %1816 = vmatpush1.msra.mxu0 %v885
      %1817 = vmatprep.subr.mxu0 0.0
      %1818 = vmatpush1.msra.mxu0 %v886
      %1819 = vmatprep.subr.mxu0 0.0
      %1820 = vmatpush1.msra.mxu0 %v887
      %1821 = vmatprep.subr.mxu0 0.0
      %1822 = vmatpush1.msra.mxu0 %v888
      %1823 = vmatprep.subr.mxu0 0.0
      %1824 = vmatpush1.msra.mxu0 %v889
      %1825 = vmatprep.subr.mxu0 0.0
      %1826 = vmatpush1.msra.mxu0 %v890
      %1827 = vmatprep.subr.mxu0 0.0
      %1828 = vmatpush1.msra.mxu0 %v891
      %1829 = vmatprep.subr.mxu0 0.0
      %1830 = vmatpush1.msra.mxu0 %v892
      %1831 = vmatprep.subr.mxu0 0.0
      %1832 = vmatpush1.msra.mxu0 %v893
      %1833 = vmatprep.subr.mxu0 0.0
      %1834 = vmatpush1.msra.mxu0 0.0
      %1835 = vmatprep.subr.mxu0 0.0
      %1836 = vmatpush1.msra.mxu0 0.0
      %1837 = vmatprep.subr.mxu0 0.0
      %1838 = vmatpush1.msra.mxu0 0.0
      %1839 = vmatprep.subr.mxu0 0.0
      %1840 = vmatpush1.msra.mxu0 0.0
      %1841 = vmatprep.subr.mxu0 0.0
      %1842 = vmatpush1.msra.mxu0 0.0
      %1843 = vmatprep.subr.mxu0 0.0
      %1844 = vmatpush1.msra.mxu0 0.0
      %1845 = vmatprep.subr.mxu0 0.0
      %1846 = vmatpush1.msra.mxu0 0.0
      %1847 = vmatprep.subr.mxu0 0.0
      %1848 = vmatpush1.msra.mxu0 0.0
      %1849 = vmatprep.subr.mxu0 0.0
      %1850 = vmatpush1.msra.mxu0 0.0
      %1851 = vmatprep.subr.mxu0 0.0
      %1852 = vmatpush1.msra.mxu0 0.0
      %1853 = vmatprep.subr.mxu0 0.0
      %1854 = vmatpush1.msra.mxu0 0.0
      %1855 = vmatprep.subr.mxu0 0.0
      %1856 = vmatpush1.msra.mxu0 0.0
      %1857 = vmatprep.subr.mxu0 0.0
      %1858 = vmatpush1.msra.mxu0 0.0
      %1859 = vmatprep.subr.mxu0 0.0
      %1860 = vmatpush1.msra.mxu0 0.0
      %1861 = vmatprep.subr.mxu0 0.0
      %1862 = vmatpush1.msra.mxu0 0.0
      %1863 = vmatprep.subr.mxu0 0.0
      %1864 = vmatpush1.msra.mxu0 0.0
      %1865 = vmatprep.mubr.f32.mxu0 0.0
      %1866 = vmatmul.mubr.f32.gmra.mrb[0].mxu0 %v616
      %v1867 = vpop.f32.mrb[0].mxu0
      %v1868 = vadd.f32 %v1643, %v1867
      %v1869 = vpop.f32.mrb[0].mxu0
      %1870 = vmatprep.mubr.f32.mxu0 0.0
      %1871 = vmatmul.mubr.f32.gmra.mrb[0].mxu0 %v618
      %v1872 = vpop.f32.mrb[0].mxu0
      %v1873 = vadd.f32 %v1648, %v1872
      %v1874 = vpop.f32.mrb[0].mxu0
      %1875 = vmatprep.mubr.f32.mxu0 0.0
      %1876 = vmatmul.mubr.f32.gmra.mrb[0].mxu0 %v621
      %v1877 = vpop.f32.mrb[0].mxu0
      %v1878 = vadd.f32 %v1653, %v1877
      %v1879 = vpop.f32.mrb[0].mxu0
      %1880 = vmatprep.mubr.f32.mxu0 0.0
      %1881 = vmatmul.mubr.f32.gmra.mrb[0].mxu0 %v623
      %v1882 = vpop.f32.mrb[0].mxu0
      %v1883 = vadd.f32 %v1658, %v1882
      %v1884 = vpop.f32.mrb[0].mxu0
      %1885 = vmatprep.mubr.f32.mxu0 0.0
      %1886 = vmatmul.mubr.f32.gmra.mrb[0].mxu0 %v626
      %v1887 = vpop.f32.mrb[0].mxu0
      %v1888 = vadd.f32 %v1663, %v1887
      %v1889 = vpop.f32.mrb[0].mxu0
      %1890 = vmatprep.mubr.f32.mxu0 0.0
      %1891 = vmatmul.mubr.f32.gmra.mrb[0].mxu0 %v628
      %v1892 = vpop.f32.mrb[0].mxu0
      %v1893 = vadd.f32 %v1668, %v1892
      %v1894 = vpop.f32.mrb[0].mxu0
      %1895 = vmatprep.mubr.f32.mxu0 0.0
      %1896 = vmatmul.mubr.f32.gmra.mrb[0].mxu0 %v631
      %v1897 = vpop.f32.mrb[0].mxu0
      %v1898 = vadd.f32 %v1673, %v1897
      %v1899 = vpop.f32.mrb[0].mxu0
      %1900 = vmatprep.mubr.f32.mxu0 0.0
      %1901 = vmatmul.mubr.f32.gmra.mrb[0].mxu0 %v633
      %v1902 = vpop.f32.mrb[0].mxu0
      %v1903 = vadd.f32 %v1678, %v1902
      %v1904 = vpop.f32.mrb[0].mxu0
      %1905 = vmatprep.mubr.f32.mxu0 0.0
      %1906 = vmatmul.mubr.f32.gmra.mrb[0].mxu0 %v636
      %v1907 = vpop.f32.mrb[0].mxu0
      %v1908 = vadd.f32 %v1683, %v1907
      %v1909 = vpop.f32.mrb[0].mxu0
      %1910 = vmatprep.mubr.f32.mxu0 0.0
      %1911 = vmatmul.mubr.f32.gmra.mrb[0].mxu0 %v638
      %v1912 = vpop.f32.mrb[0].mxu0
      %v1913 = vadd.f32 %v1688, %v1912
      %v1914 = vpop.f32.mrb[0].mxu0
      %1915 = vmatprep.mubr.f32.mxu0 0.0
      %1916 = vmatmul.mubr.f32.gmra.mrb[0].mxu0 %v641
      %v1917 = vpop.f32.mrb[0].mxu0
      %v1918 = vadd.f32 %v1693, %v1917
      %v1919 = vpop.f32.mrb[0].mxu0
      %1920 = vmatprep.mubr.f32.mxu0 0.0
      %1921 = vmatmul.mubr.f32.gmra.mrb[0].mxu0 %v643
      %v1922 = vpop.f32.mrb[0].mxu0
      %v1923 = vadd.f32 %v1698, %v1922
      %v1924 = vpop.f32.mrb[0].mxu0
      %1925 = vmatprep.mubr.f32.mxu0 0.0
      %1926 = vmatmul.mubr.f32.gmra.mrb[0].mxu0 %v646
      %v1927 = vpop.f32.mrb[0].mxu0
      %v1928 = vadd.f32 %v1703, %v1927
      %v1929 = vpop.f32.mrb[0].mxu0
      %1930 = vmatprep.mubr.f32.mxu0 0.0
      %1931 = vmatmul.mubr.f32.gmra.mrb[0].mxu0 %v648
      %v1932 = vpop.f32.mrb[0].mxu0
      %v1933 = vadd.f32 %v1708, %v1932
      %v1934 = vpop.f32.mrb[0].mxu0
      %1935 = vmatprep.mubr.f32.mxu0 0.0
      %1936 = vmatmul.mubr.f32.gmra.mrb[0].mxu0 %v651
      %v1937 = vpop.f32.mrb[0].mxu0
      %v1938 = vadd.f32 %v1713, %v1937
      %v1939 = vpop.f32.mrb[0].mxu0
      %1940 = vmatprep.mubr.f32.mxu0 0.0
      %1941 = vmatmul.mubr.f32.gmra.mrb[0].mxu0 %v653
      %v1942 = vpop.f32.mrb[0].mxu0
      %v1943 = vadd.f32 %v1718, %v1942
      %v1944 = vpop.f32.mrb[0].mxu0
      %1945 = vmatprep.mubr.f32.mxu0 0.0
      %1946 = vmatmul.mubr.f32.gmra.mrb[0].mxu0 %v656
      %v1947 = vpop.f32.mrb[0].mxu0
      %v1948 = vadd.f32 %v1723, %v1947
      %v1949 = vpop.f32.mrb[0].mxu0
      %1950 = vmatprep.mubr.f32.mxu0 0.0
      %1951 = vmatmul.mubr.f32.gmra.mrb[0].mxu0 %v658
      %v1952 = vpop.f32.mrb[0].mxu0
      %v1953 = vadd.f32 %v1728, %v1952
      %v1954 = vpop.f32.mrb[0].mxu0
      %1955 = vmatprep.mubr.f32.mxu0 0.0
      %1956 = vmatmul.mubr.f32.gmra.mrb[0].mxu0 %v661
      %v1957 = vpop.f32.mrb[0].mxu0
      %v1958 = vadd.f32 %v1733, %v1957
      %v1959 = vpop.f32.mrb[0].mxu0
      %1960 = vmatprep.mubr.f32.mxu0 0.0
      %1961 = vmatmul.mubr.f32.gmra.mrb[0].mxu0 %v663
      %v1962 = vpop.f32.mrb[0].mxu0
      %v1963 = vadd.f32 %v1738, %v1962
      %v1964 = vpop.f32.mrb[0].mxu0
      %1965 = vmatprep.mubr.f32.mxu0 0.0
      %1966 = vmatmul.mubr.f32.gmra.mrb[0].mxu0 %v666
      %v1967 = vpop.f32.mrb[0].mxu0
      %v1968 = vadd.f32 %v1743, %v1967
      %v1969 = vpop.f32.mrb[0].mxu0
      %1970 = vmatprep.mubr.f32.mxu0 0.0
      %1971 = vmatmul.mubr.f32.gmra.mrb[0].mxu0 %v668
      %v1972 = vpop.f32.mrb[0].mxu0
      %v1973 = vadd.f32 %v1748, %v1972
      %v1974 = vpop.f32.mrb[0].mxu0
      %1975 = vmatprep.mubr.f32.mxu0 0.0
      %1976 = vmatmul.mubr.f32.gmra.mrb[0].mxu0 %v671
      %v1977 = vpop.f32.mrb[0].mxu0
      %v1978 = vadd.f32 %v1753, %v1977
      %v1979 = vpop.f32.mrb[0].mxu0
      %1980 = vmatprep.mubr.f32.mxu0 0.0
      %1981 = vmatmul.mubr.f32.gmra.mrb[0].mxu0 %v673
      %v1982 = vpop.f32.mrb[0].mxu0
      %v1983 = vadd.f32 %v1758, %v1982
      %v1984 = vpop.f32.mrb[0].mxu0
      %1985 = vmatprep.mubr.f32.mxu0 0.0
      %1986 = vmatmul.mubr.f32.gmra.mrb[0].mxu0 %v676
      %v1987 = vpop.f32.mrb[0].mxu0
      %v1988 = vadd.f32 %v1763, %v1987
      %v1989 = vpop.f32.mrb[0].mxu0
      %1990 = vmatprep.mubr.f32.mxu0 0.0
      %1991 = vmatmul.mubr.f32.gmra.mrb[0].mxu0 %v678
      %v1992 = vpop.f32.mrb[0].mxu0
      %v1993 = vadd.f32 %v1768, %v1992
      %v1994 = vpop.f32.mrb[0].mxu0
      %1995 = vmatprep.mubr.f32.mxu0 0.0
      %1996 = vmatmul.mubr.f32.gmra.mrb[0].mxu0 %v681
      %v1997 = vpop.f32.mrb[0].mxu0
      %v1998 = vadd.f32 %v1773, %v1997
      %v1999 = vpop.f32.mrb[0].mxu0
      %2000 = vmatprep.mubr.f32.mxu0 0.0
      %2001 = vmatmul.mubr.f32.gmra.mrb[0].mxu0 %v683
      %v2002 = vpop.f32.mrb[0].mxu0
      %v2003 = vadd.f32 %v1778, %v2002
      %v2004 = vpop.f32.mrb[0].mxu0
      %2005 = vmatprep.mubr.f32.mxu0 0.0
      %2006 = vmatmul.mubr.f32.gmra.mrb[0].mxu0 %v728
      %v2007 = vpop.f32.mrb[0].mxu0
      %v2008 = vadd.f32 %v1783, %v2007
      %v2009 = vpop.f32.mrb[0].mxu0
      %2010 = vmatprep.mubr.f32.mxu0 0.0
      %2011 = vmatmul.mubr.f32.gmra.mrb[0].mxu0 %v730
      %v2012 = vpop.f32.mrb[0].mxu0
      %v2013 = vadd.f32 %v1788, %v2012
      %v2014 = vpop.f32.mrb[0].mxu0
      %2015 = vmatprep.mubr.f32.mxu0 0.0
      %2016 = vmatmul.mubr.f32.gmra.mrb[0].mxu0 %v745
      %v2017 = vpop.f32.mrb[0].mxu0
      %v2018 = vadd.f32 %v1793, %v2017
      %v2019 = vpop.f32.mrb[0].mxu0
      %2020 = vmatprep.mubr.f32.mxu0 0.0
      %2021 = vmatmul.mubr.f32.gmra.mrb[0].mxu0 %v747
      %v2022 = vpop.f32.mrb[0].mxu0
      %v2023 = vadd.f32 %v1798, %v2022
      %v2024 = vpop.f32.mrb[0].mxu0
      %2025 = vdwg.mxu0
      %vm2026 = vcmp.ge.f32.partialorder %v1868, 0.0
      %vm2027 = vcmp.ge.f32.partialorder %v1873, 0.0
      %vm2028 = vcmp.ge.f32.partialorder %v1878, 0.0
      %vm2029 = vcmp.ge.f32.partialorder %v1883, 0.0
      %vm2030 = vcmp.ge.f32.partialorder %v1888, 0.0
      %vm2031 = vcmp.ge.f32.partialorder %v1893, 0.0
      %vm2032 = vcmp.ge.f32.partialorder %v1898, 0.0
      %vm2033 = vcmp.ge.f32.partialorder %v1903, 0.0
      %vm2034 = vcmp.ge.f32.partialorder %v1908, 0.0
      %vm2035 = vcmp.ge.f32.partialorder %v1913, 0.0
      %vm2036 = vcmp.ge.f32.partialorder %v1918, 0.0
      %vm2037 = vcmp.ge.f32.partialorder %v1923, 0.0
      %vm2038 = vcmp.ge.f32.partialorder %v1928, 0.0
      %vm2039 = vcmp.ge.f32.partialorder %v1933, 0.0
      %vm2040 = vcmp.ge.f32.partialorder %v1938, 0.0
      %vm2041 = vcmp.ge.f32.partialorder %v1943, 0.0
      %vm2042 = vcmp.ge.f32.partialorder %v1948, 0.0
      %vm2043 = vcmp.ge.f32.partialorder %v1953, 0.0
      %vm2044 = vcmp.ge.f32.partialorder %v1958, 0.0
      %vm2045 = vcmp.ge.f32.partialorder %v1963, 0.0
      %vm2046 = vcmp.ge.f32.partialorder %v1968, 0.0
      %vm2047 = vcmp.ge.f32.partialorder %v1973, 0.0
      %vm2048 = vcmp.ge.f32.partialorder %v1978, 0.0
      %vm2049 = vcmp.ge.f32.partialorder %v1983, 0.0
      %vm2050 = vcmp.ge.f32.partialorder %v1988, 0.0
      %vm2051 = vcmp.ge.f32.partialorder %v1993, 0.0
      %vm2052 = vcmp.ge.f32.partialorder %v1998, 0.0
      %vm2053 = vcmp.ge.f32.partialorder %v2003, 0.0
      %vm2054 = vcmp.ge.f32.partialorder %v2008, 0.0
      %vm2055 = vcmp.ge.f32.partialorder %v2013, 0.0
      %vm2056 = vcmp.ge.f32.partialorder %v2018, 0.0
      %vm2057 = vcmp.ge.f32.partialorder %v2023, 0.0
      %v2058 = vmul.f32 %v1868, 0.1
      %v2059 = vmul.f32 %v1873, 0.1
      %v2060 = vmul.f32 %v1878, 0.1
      %v2061 = vmul.f32 %v1883, 0.1
      %v2062 = vmul.f32 %v1888, 0.1
      %v2063 = vmul.f32 %v1893, 0.1
      %v2064 = vmul.f32 %v1898, 0.1
      %v2065 = vmul.f32 %v1903, 0.1
      %v2066 = vmul.f32 %v1908, 0.1
      %v2067 = vmul.f32 %v1913, 0.1
      %v2068 = vmul.f32 %v1918, 0.1
      %v2069 = vmul.f32 %v1923, 0.1
      %v2070 = vmul.f32 %v1928, 0.1
      %v2071 = vmul.f32 %v1933, 0.1
      %v2072 = vmul.f32 %v1938, 0.1
      %v2073 = vmul.f32 %v1943, 0.1
      %v2074 = vmul.f32 %v1948, 0.1
      %v2075 = vmul.f32 %v1953, 0.1
      %v2076 = vmul.f32 %v1958, 0.1
      %v2077 = vmul.f32 %v1963, 0.1
      %v2078 = vmul.f32 %v1968, 0.1
      %v2079 = vmul.f32 %v1973, 0.1
      %v2080 = vmul.f32 %v1978, 0.1
      %v2081 = vmul.f32 %v1983, 0.1
      %v2082 = vmul.f32 %v1988, 0.1
      %v2083 = vmul.f32 %v1993, 0.1
      %v2084 = vmul.f32 %v1998, 0.1
      %v2085 = vmul.f32 %v2003, 0.1
      %v2086 = vmul.f32 %v2008, 0.1
      %v2087 = vmul.f32 %v2013, 0.1
      %v2088 = vmul.f32 %v2018, 0.1
      %v2089 = vmul.f32 %v2023, 0.1
      %v2090 = vsel %vm2026, %v1868, %v2058
      %v2091 = vsel %vm2027, %v1873, %v2059
      %v2092 = vsel %vm2028, %v1878, %v2060
      %v2093 = vsel %vm2029, %v1883, %v2061
      %v2094 = vsel %vm2030, %v1888, %v2062
      %v2095 = vsel %vm2031, %v1893, %v2063
      %v2096 = vsel %vm2032, %v1898, %v2064
      %v2097 = vsel %vm2033, %v1903, %v2065
      %v2098 = vsel %vm2034, %v1908, %v2066
      %v2099 = vsel %vm2035, %v1913, %v2067
      %v2100 = vsel %vm2036, %v1918, %v2068
      %v2101 = vsel %vm2037, %v1923, %v2069
      %v2102 = vsel %vm2038, %v1928, %v2070
      %v2103 = vsel %vm2039, %v1933, %v2071
      %v2104 = vsel %vm2040, %v1938, %v2072
      %v2105 = vsel %vm2041, %v1943, %v2073
      %v2106 = vsel %vm2042, %v1948, %v2074
      %v2107 = vsel %vm2043, %v1953, %v2075
      %v2108 = vsel %vm2044, %v1958, %v2076
      %v2109 = vsel %vm2045, %v1963, %v2077
      %v2110 = vsel %vm2046, %v1968, %v2078
      %v2111 = vsel %vm2047, %v1973, %v2079
      %v2112 = vsel %vm2048, %v1978, %v2080
      %v2113 = vsel %vm2049, %v1983, %v2081
      %v2114 = vsel %vm2050, %v1988, %v2082
      %v2115 = vsel %vm2051, %v1993, %v2083
      %v2116 = vsel %vm2052, %v1998, %v2084
      %v2117 = vsel %vm2053, %v2003, %v2085
      %v2118 = vsel %vm2054, %v2008, %v2086
      %v2119 = vsel %vm2055, %v2013, %v2087
      %v2120 = vsel %vm2056, %v2018, %v2088
      %v2121 = vsel %vm2057, %v2023, %v2089
      %s2122 = scalar_lea.vmem [#allocation3], 24
      %2123 = vst [vmem:[%s2122 + $0x1] sm:$0xff] %v2090
      %2124 = vst [vmem:[%s2122 + $0x9] sm:$0xff] %v2091
      %2125 = vst [vmem:[%s2122 + $0x19] sm:$0xff] %v2092
      %2126 = vst [vmem:[%s2122 + $0x21] sm:$0xff] %v2093
      %2127 = vst [vmem:[%s2122 + $0x31] sm:$0xff] %v2094
      %2128 = vst [vmem:[%s2122 + $0x39] sm:$0xff] %v2095
      %2129 = vst [vmem:[%s2122 + $0x49] sm:$0xff] %v2096
      %2130 = vst [vmem:[%s2122 + $0x51] sm:$0xff] %v2097
      %2131 = vst [vmem:[%s2122 + $0x61] sm:$0xff] %v2098
      %2132 = vst [vmem:[%s2122 + $0x69] sm:$0xff] %v2099
      %2133 = vst [vmem:[%s2122 + $0x79] sm:$0xff] %v2100
      %2134 = vst [vmem:[%s2122 + $0x81] sm:$0xff] %v2101
      %2135 = vst [vmem:[%s2122 + $0x91] sm:$0xff] %v2102
      %2136 = vst [vmem:[%s2122 + $0x99] sm:$0xff] %v2103
      %2137 = vst [vmem:[%s2122 + $0xa9] sm:$0xff] %v2104
      %2138 = vst [vmem:[%s2122 + $0xb1] sm:$0xff] %v2105
      %2139 = vst [vmem:[%s2122 + $0xc1] sm:$0xff] %v2106
      %2140 = vst [vmem:[%s2122 + $0xc9] sm:$0xff] %v2107
      %2141 = vst [vmem:[%s2122 + $0xd9] sm:$0xff] %v2108
      %2142 = vst [vmem:[%s2122 + $0xe1] sm:$0xff] %v2109
      %2143 = vst [vmem:[%s2122 + $0xf1] sm:$0xff] %v2110
      %2144 = vst [vmem:[%s2122 + $0xf9] sm:$0xff] %v2111
      %2145 = vst [vmem:[%s2122 + $0x109] sm:$0xff] %v2112
      %2146 = vst [vmem:[%s2122 + $0x111] sm:$0xff] %v2113
      %2147 = vst [vmem:[%s2122 + $0x121] sm:$0xff] %v2114
      %2148 = vst [vmem:[%s2122 + $0x129] sm:$0xff] %v2115
      %2149 = vst [vmem:[%s2122 + $0x139] sm:$0xff] %v2116
      %2150 = vst [vmem:[%s2122 + $0x141] sm:$0xff] %v2117
      %2151 = vst [vmem:[%s2122 + $0x151] sm:$0xff] %v2118
      %2152 = vst [vmem:[%s2122 + $0x159] sm:$0xff] %v2119
      %2153 = vst [vmem:[%s2122 + $0x169] sm:$0xff] %v2120
      %2154 = vst [vmem:[%s2122 + $0x171] sm:$0xff] %v2121
      %v2155 = vld [vmem:[#allocation3] sm:$0xff]
      %v2156 = vld [vmem:[#allocation3 + $0x8] sm:$0xff]
      %v2157 = vld [vmem:[#allocation3 + $0x10] sm:$0x3]
      %v2158 = vld [vmem:[#allocation3 + $0x18] sm:$0xff]
      %v2159 = vld [vmem:[#allocation3 + $0x20] sm:$0xff]
      %v2160 = vld [vmem:[#allocation3 + $0x28] sm:$0x3]
      %v2161 = vld [vmem:[#allocation3 + $0x30] sm:$0xff]
      %v2162 = vld [vmem:[#allocation3 + $0x38] sm:$0xff]
      %v2163 = vld [vmem:[#allocation3 + $0x40] sm:$0x3]
      %v2164 = vld [vmem:[#allocation3 + $0x48] sm:$0xff]
      %v2165 = vld [vmem:[#allocation3 + $0x50] sm:$0xff]
      %v2166 = vld [vmem:[#allocation3 + $0x58] sm:$0x3]
      %v2167 = vld [vmem:[#allocation3 + $0x60] sm:$0xff]
      %v2168 = vld [vmem:[#allocation3 + $0x68] sm:$0xff]
      %v2169 = vld [vmem:[#allocation3 + $0x70] sm:$0x3]
      %v2170 = vld [vmem:[#allocation3 + $0x78] sm:$0xff]
      %v2171 = vld [vmem:[#allocation3 + $0x80] sm:$0xff]
      %v2172 = vld [vmem:[#allocation3 + $0x88] sm:$0x3]
      %v2173 = vld [vmem:[#allocation3 + $0x90] sm:$0xff]
      %v2174 = vld [vmem:[#allocation3 + $0x98] sm:$0xff]
      %v2175 = vld [vmem:[#allocation3 + $0xa0] sm:$0x3]
      %v2176 = vld [vmem:[#allocation3 + $0xa8] sm:$0xff]
      %v2177 = vld [vmem:[#allocation3 + $0xb0] sm:$0xff]
      %v2178 = vld [vmem:[#allocation3 + $0xb8] sm:$0x3]
      %v2179 = vld [vmem:[#allocation3 + $0xc0] sm:$0xff]
      %v2180 = vld [vmem:[#allocation3 + $0xc8] sm:$0xff]
      %v2181 = vld [vmem:[#allocation3 + $0xd0] sm:$0x3]
      %v2182 = vld [vmem:[#allocation3 + $0xd8] sm:$0xff]
      %v2183 = vld [vmem:[#allocation3 + $0xe0] sm:$0xff]
      %v2184 = vld [vmem:[#allocation3 + $0xe8] sm:$0x3]
      %v2185 = vld [vmem:[#allocation3 + $0xf0] sm:$0xff]
      %v2186 = vld [vmem:[#allocation3 + $0xf8] sm:$0xff]
      %v2187 = vld [vmem:[#allocation3 + $0x100] sm:$0x3]
      %v2188 = vld [vmem:[#allocation3 + $0x108] sm:$0xff]
      %v2189 = vld [vmem:[#allocation3 + $0x110] sm:$0xff]
      %v2190 = vld [vmem:[#allocation3 + $0x118] sm:$0x3]
      %v2191 = vld [vmem:[#allocation3 + $0x120] sm:$0xff]
      %v2192 = vld [vmem:[#allocation3 + $0x128] sm:$0xff]
      %v2193 = vld [vmem:[#allocation3 + $0x130] sm:$0x3]
      %v2194 = vld [vmem:[#allocation3 + $0x138] sm:$0xff]
      %v2195 = vld [vmem:[#allocation3 + $0x140] sm:$0xff]
      %v2196 = vld [vmem:[#allocation3 + $0x148] sm:$0x3]
      %v2197 = vld [vmem:[#allocation3 + $0x150] sm:$0xff]
      %v2198 = vld [vmem:[#allocation3 + $0x158] sm:$0xff]
      %v2199 = vld [vmem:[#allocation3 + $0x160] sm:$0x3]
      %v2200 = vld [vmem:[#allocation3 + $0x168] sm:$0xff]
      %v2201 = vld [vmem:[#allocation3 + $0x170] sm:$0xff]
      %v2202 = vld [vmem:[#allocation3 + $0x178] sm:$0x3]
      %v2203 = vld [vmem:[#allocation3 + $0x180] sm:$0xff]
      %v2204 = vld [vmem:[#allocation3 + $0x188] sm:$0xff]
      %v2205 = vld [vmem:[#allocation3 + $0x190] sm:$0x3]
      %v2206 = vld [vmem:[#allocation3 + $0x198] sm:$0xff]
      %v2207 = vld [vmem:[#allocation3 + $0x1a0] sm:$0xff]
      %v2208 = vld [vmem:[#allocation3 + $0x1a8] sm:$0x3]
      %v2257 = vrot.slane %v2155, 1
      %v2258 = vrot.slane %v2156, 1
      %v2259 = vsel %vm490, %v2257, %v2258
      %v2260 = vrot.slane %v2157, 1
      %v2261 = vsel %vm490, %v2258, %v2260
      %v2262 = vrot.slane %v2158, 1
      %v2263 = vrot.slane %v2159, 1
      %v2264 = vsel %vm490, %v2262, %v2263
      %v2265 = vrot.slane %v2160, 1
      %v2266 = vsel %vm490, %v2263, %v2265
      %v2267 = vrot.slane %v2161, 1
      %v2268 = vrot.slane %v2162, 1
      %v2269 = vsel %vm490, %v2267, %v2268
      %v2270 = vrot.slane %v2163, 1
      %v2271 = vsel %vm490, %v2268, %v2270
      %v2272 = vrot.slane %v2164, 1
      %v2273 = vrot.slane %v2165, 1
      %v2274 = vsel %vm490, %v2272, %v2273
      %v2275 = vrot.slane %v2166, 1
      %v2276 = vsel %vm490, %v2273, %v2275
      %v2277 = vrot.slane %v2167, 1
      %v2278 = vrot.slane %v2168, 1
      %v2279 = vsel %vm490, %v2277, %v2278
      %v2280 = vrot.slane %v2169, 1
      %v2281 = vsel %vm490, %v2278, %v2280
      %v2282 = vrot.slane %v2170, 1
      %v2283 = vrot.slane %v2171, 1
      %v2284 = vsel %vm490, %v2282, %v2283
      %v2285 = vrot.slane %v2172, 1
      %v2286 = vsel %vm490, %v2283, %v2285
      %v2287 = vrot.slane %v2173, 1
      %v2288 = vrot.slane %v2174, 1
      %v2289 = vsel %vm490, %v2287, %v2288
      %v2290 = vrot.slane %v2175, 1
      %v2291 = vsel %vm490, %v2288, %v2290
      %v2292 = vrot.slane %v2176, 1
      %v2293 = vrot.slane %v2177, 1
      %v2294 = vsel %vm490, %v2292, %v2293
      %v2295 = vrot.slane %v2178, 1
      %v2296 = vsel %vm490, %v2293, %v2295
      %v2297 = vrot.slane %v2179, 1
      %v2298 = vrot.slane %v2180, 1
      %v2299 = vsel %vm490, %v2297, %v2298
      %v2300 = vrot.slane %v2181, 1
      %v2301 = vsel %vm490, %v2298, %v2300
      %v2302 = vrot.slane %v2182, 1
      %v2303 = vrot.slane %v2183, 1
      %v2304 = vsel %vm490, %v2302, %v2303
      %v2305 = vrot.slane %v2184, 1
      %v2306 = vsel %vm490, %v2303, %v2305
      %v2307 = vrot.slane %v2185, 1
      %v2308 = vrot.slane %v2186, 1
      %v2309 = vsel %vm490, %v2307, %v2308
      %v2310 = vrot.slane %v2187, 1
      %v2311 = vsel %vm490, %v2308, %v2310
      %v2312 = vrot.slane %v2188, 1
      %v2313 = vrot.slane %v2189, 1
      %v2314 = vsel %vm490, %v2312, %v2313
      %v2315 = vrot.slane %v2190, 1
      %v2316 = vsel %vm490, %v2313, %v2315
      %v2317 = vrot.slane %v2191, 1
      %v2318 = vrot.slane %v2192, 1
      %v2319 = vsel %vm490, %v2317, %v2318
      %v2320 = vrot.slane %v2193, 1
      %v2321 = vsel %vm490, %v2318, %v2320
      %v2322 = vrot.slane %v2194, 1
      %v2323 = vrot.slane %v2195, 1
      %v2324 = vsel %vm490, %v2322, %v2323
      %v2325 = vrot.slane %v2196, 1
      %v2326 = vsel %vm490, %v2323, %v2325
      %v2327 = vrot.slane %v2197, 1
      %v2328 = vrot.slane %v2198, 1
      %v2329 = vsel %vm490, %v2327, %v2328
      %v2330 = vrot.slane %v2199, 1
      %v2331 = vsel %vm490, %v2328, %v2330
      %v2332 = vrot.slane %v2200, 1
      %v2333 = vrot.slane %v2201, 1
      %v2334 = vsel %vm490, %v2332, %v2333
      %v2335 = vrot.slane %v2202, 1
      %v2336 = vsel %vm490, %v2333, %v2335
      %v2369 = vrot.slane %v2155, 2
      %v2370 = vrot.slane %v2156, 2
      %v2371 = vsel %vm603, %v2369, %v2370
      %v2372 = vrot.slane %v2157, 2
      %v2373 = vsel %vm603, %v2370, %v2372
      %v2374 = vrot.slane %v2158, 2
      %v2375 = vrot.slane %v2159, 2
      %v2376 = vsel %vm603, %v2374, %v2375
      %v2377 = vrot.slane %v2160, 2
      %v2378 = vsel %vm603, %v2375, %v2377
      %v2379 = vrot.slane %v2161, 2
      %v2380 = vrot.slane %v2162, 2
      %v2381 = vsel %vm603, %v2379, %v2380
      %v2382 = vrot.slane %v2163, 2
      %v2383 = vsel %vm603, %v2380, %v2382
      %v2384 = vrot.slane %v2164, 2
      %v2385 = vrot.slane %v2165, 2
      %v2386 = vsel %vm603, %v2384, %v2385
      %v2387 = vrot.slane %v2166, 2
      %v2388 = vsel %vm603, %v2385, %v2387
      %v2389 = vrot.slane %v2167, 2
      %v2390 = vrot.slane %v2168, 2
      %v2391 = vsel %vm603, %v2389, %v2390
      %v2392 = vrot.slane %v2169, 2
      %v2393 = vsel %vm603, %v2390, %v2392
      %v2394 = vrot.slane %v2170, 2
      %v2395 = vrot.slane %v2171, 2
      %v2396 = vsel %vm603, %v2394, %v2395
      %v2397 = vrot.slane %v2172, 2
      %v2398 = vsel %vm603, %v2395, %v2397
      %v2399 = vrot.slane %v2173, 2
      %v2400 = vrot.slane %v2174, 2
      %v2401 = vsel %vm603, %v2399, %v2400
      %v2402 = vrot.slane %v2175, 2
      %v2403 = vsel %vm603, %v2400, %v2402
      %v2404 = vrot.slane %v2176, 2
      %v2405 = vrot.slane %v2177, 2
      %v2406 = vsel %vm603, %v2404, %v2405
      %v2407 = vrot.slane %v2178, 2
      %v2408 = vsel %vm603, %v2405, %v2407
      %v2409 = vrot.slane %v2179, 2
      %v2410 = vrot.slane %v2180, 2
      %v2411 = vsel %vm603, %v2409, %v2410
      %v2412 = vrot.slane %v2181, 2
      %v2413 = vsel %vm603, %v2410, %v2412
      %v2414 = vrot.slane %v2182, 2
      %v2415 = vrot.slane %v2183, 2
      %v2416 = vsel %vm603, %v2414, %v2415
      %v2417 = vrot.slane %v2184, 2
      %v2418 = vsel %vm603, %v2415, %v2417
      %v2419 = vrot.slane %v2185, 2
      %v2420 = vrot.slane %v2186, 2
      %v2421 = vsel %vm603, %v2419, %v2420
      %v2422 = vrot.slane %v2187, 2
      %v2423 = vsel %vm603, %v2420, %v2422
      %v2424 = vrot.slane %v2188, 2
      %v2425 = vrot.slane %v2189, 2
      %v2426 = vsel %vm603, %v2424, %v2425
      %v2427 = vrot.slane %v2190, 2
      %v2428 = vsel %vm603, %v2425, %v2427
      %v2429 = vrot.slane %v2191, 2
      %v2430 = vrot.slane %v2192, 2
      %v2431 = vsel %vm603, %v2429, %v2430
      %v2432 = vrot.slane %v2193, 2
      %v2433 = vsel %vm603, %v2430, %v2432
      %v2434 = vrot.slane %v2194, 2
      %v2435 = vrot.slane %v2195, 2
      %v2436 = vsel %vm603, %v2434, %v2435
      %v2437 = vrot.slane %v2196, 2
      %v2438 = vsel %vm603, %v2435, %v2437
      %v2439 = vrot.slane %v2197, 2
      %v2440 = vrot.slane %v2198, 2
      %v2441 = vsel %vm603, %v2439, %v2440
      %v2442 = vrot.slane %v2199, 2
      %v2443 = vsel %vm603, %v2440, %v2442
      %v2444 = vrot.slane %v2200, 2
      %v2445 = vrot.slane %v2201, 2
      %v2446 = vsel %vm603, %v2444, %v2445
      %v2447 = vrot.slane %v2202, 2
      %v2448 = vsel %vm603, %v2445, %v2447
      %v2484 = vrot.slane %v2203, 1
      %v2485 = vrot.slane %v2204, 1
      %v2486 = vsel %vm490, %v2484, %v2485
      %v2487 = vrot.slane %v2205, 1
      %v2488 = vsel %vm490, %v2485, %v2487
      %v2491 = vrot.slane %v2203, 2
      %v2492 = vrot.slane %v2204, 2
      %v2493 = vsel %vm603, %v2491, %v2492
      %v2494 = vrot.slane %v2205, 2
      %v2495 = vsel %vm603, %v2492, %v2494
      %v2501 = vrot.slane %v2206, 1
      %v2502 = vrot.slane %v2207, 1
      %v2503 = vsel %vm490, %v2501, %v2502
      %v2504 = vrot.slane %v2208, 1
      %v2505 = vsel %vm490, %v2502, %v2504
      %v2508 = vrot.slane %v2206, 2
      %v2509 = vrot.slane %v2207, 2
      %v2510 = vsel %vm603, %v2508, %v2509
      %v2511 = vrot.slane %v2208, 2
      %v2512 = vsel %vm603, %v2509, %v2511
      %v2515 = vld [vmem:[%s3] sm:$0xff]
      %v2516 = vld [vmem:[%s3 + $0x8] sm:$0xff]
      %v2517 = vld [vmem:[%s3 + $0x10] sm:$0xff]
      %v2518 = vld [vmem:[%s3 + $0x18] sm:$0xff]
      %v2519 = vld [vmem:[%s3 + $0x20] sm:$0xff]
      %v2520 = vld [vmem:[%s3 + $0x28] sm:$0xff]
      %v2521 = vld [vmem:[%s3 + $0x30] sm:$0xff]
      %v2522 = vld [vmem:[%s3 + $0x38] sm:$0xff]
      %v2523 = vld [vmem:[%s3 + $0x40] sm:$0xff]
      %v2524 = vld [vmem:[%s3 + $0x48] sm:$0xff]
      %v2525 = vld [vmem:[%s3 + $0x50] sm:$0xff]
      %v2526 = vld [vmem:[%s3 + $0x58] sm:$0xff]
      %v2527 = vld [vmem:[%s3 + $0x60] sm:$0xff]
      %v2528 = vld [vmem:[%s3 + $0x68] sm:$0xff]
      %v2529 = vld [vmem:[%s3 + $0x70] sm:$0xff]
      %v2530 = vld [vmem:[%s3 + $0x78] sm:$0xff]
      %v2531 = vld [vmem:[%s3 + $0x80] sm:$0xff]
      %v2532 = vld [vmem:[%s3 + $0x88] sm:$0xff]
      %v2533 = vld [vmem:[%s3 + $0x90] sm:$0xff]
      %v2534 = vld [vmem:[%s3 + $0x98] sm:$0xff]
      %v2535 = vld [vmem:[%s3 + $0xa0] sm:$0xff]
      %v2536 = vld [vmem:[%s3 + $0xa8] sm:$0xff]
      %v2537 = vld [vmem:[%s3 + $0xb0] sm:$0xff]
      %v2538 = vld [vmem:[%s3 + $0xb8] sm:$0xff]
      %v2539 = vld [vmem:[%s3 + $0xc0] sm:$0xff]
      %v2540 = vld [vmem:[%s3 + $0xc8] sm:$0xff]
      %v2541 = vld [vmem:[%s3 + $0xd0] sm:$0xff]
      %v2542 = vld [vmem:[%s3 + $0xd8] sm:$0xff]
      %v2543 = vld [vmem:[%s3 + $0xe0] sm:$0xff]
      %v2544 = vld [vmem:[%s3 + $0xe8] sm:$0xff]
      %v2545 = vld [vmem:[%s3 + $0xf0] sm:$0xff]
      %v2546 = vld [vmem:[%s3 + $0xf8] sm:$0xff]
      %v2547 = vld [vmem:[%s3 + $0x100] sm:$0xff]
      %v2548 = vld [vmem:[%s3 + $0x108] sm:$0xff]
      %v2549 = vld [vmem:[%s3 + $0x110] sm:$0xff]
      %v2550 = vld [vmem:[%s3 + $0x118] sm:$0xff]
      %v2551 = vld [vmem:[%s3 + $0x120] sm:$0xff]
      %v2552 = vld [vmem:[%s3 + $0x128] sm:$0xff]
      %v2553 = vld [vmem:[%s3 + $0x130] sm:$0xff]
      %v2554 = vld [vmem:[%s3 + $0x138] sm:$0xff]
      %v2555 = vld [vmem:[%s3 + $0x140] sm:$0xff]
      %v2556 = vld [vmem:[%s3 + $0x148] sm:$0xff]
      %v2557 = vld [vmem:[%s3 + $0x150] sm:$0xff]
      %v2558 = vld [vmem:[%s3 + $0x158] sm:$0xff]
      %v2559 = vld [vmem:[%s3 + $0x160] sm:$0xff]
      %v2560 = vld [vmem:[%s3 + $0x168] sm:$0xff]
      %v2561 = vld [vmem:[%s3 + $0x170] sm:$0xff]
      %v2562 = vld [vmem:[%s3 + $0x178] sm:$0xff]
      %v2563 = vld [vmem:[%s3 + $0x180] sm:$0xff]
      %v2564 = vld [vmem:[%s3 + $0x188] sm:$0xff]
      %v2565 = vld [vmem:[%s3 + $0x190] sm:$0xff]
      %v2566 = vld [vmem:[%s3 + $0x198] sm:$0xff]
      %v2567 = vld [vmem:[%s3 + $0x1a0] sm:$0xff]
      %v2568 = vld [vmem:[%s3 + $0x1a8] sm:$0xff]
      %v2569 = vld [vmem:[%s3 + $0x1b0] sm:$0xff]
      %v2570 = vld [vmem:[%s3 + $0x1b8] sm:$0xff]
      %v2571 = vld [vmem:[%s3 + $0x1c0] sm:$0xff]
      %v2572 = vld [vmem:[%s3 + $0x1c8] sm:$0xff]
      %v2573 = vld [vmem:[%s3 + $0x1d0] sm:$0xff]
      %v2574 = vld [vmem:[%s3 + $0x1d8] sm:$0xff]
      %v2575 = vld [vmem:[%s3 + $0x1e0] sm:$0xff]
      %v2576 = vld [vmem:[%s3 + $0x1e8] sm:$0xff]
      %v2577 = vld [vmem:[%s3 + $0x1f0] sm:$0xff]
      %v2578 = vld [vmem:[%s3 + $0x1f8] sm:$0xff]
      %v2579 = vld [vmem:[%s3 + $0x200] sm:$0xff]
      %v2580 = vld [vmem:[%s3 + $0x208] sm:$0xff]
      %v2581 = vld [vmem:[%s3 + $0x210] sm:$0xff]
      %v2582 = vld [vmem:[%s3 + $0x218] sm:$0xff]
      %v2583 = vld [vmem:[%s3 + $0x220] sm:$0xff]
      %v2584 = vld [vmem:[%s3 + $0x228] sm:$0xff]
      %v2585 = vld [vmem:[%s3 + $0x230] sm:$0xff]
      %v2586 = vld [vmem:[%s3 + $0x238] sm:$0xff]
      %v2587 = vld [vmem:[%s3 + $0x240] sm:$0xff]
      %v2588 = vld [vmem:[%s3 + $0x248] sm:$0xff]
      %v2589 = vld [vmem:[%s3 + $0x250] sm:$0xff]
      %v2590 = vld [vmem:[%s3 + $0x258] sm:$0xff]
      %v2591 = vld [vmem:[%s3 + $0x260] sm:$0xff]
      %v2592 = vld [vmem:[%s3 + $0x268] sm:$0xff]
      %v2593 = vld [vmem:[%s3 + $0x270] sm:$0xff]
      %v2594 = vld [vmem:[%s3 + $0x278] sm:$0xff]
      %v2595 = vld [vmem:[%s3 + $0x280] sm:$0xff]
      %v2596 = vld [vmem:[%s3 + $0x288] sm:$0xff]
      %v2597 = vld [vmem:[%s3 + $0x290] sm:$0xff]
      %v2598 = vld [vmem:[%s3 + $0x298] sm:$0xff]
      %v2599 = vld [vmem:[%s3 + $0x2a0] sm:$0xff]
      %v2600 = vld [vmem:[%s3 + $0x2a8] sm:$0xff]
      %v2601 = vld [vmem:[%s3 + $0x2b0] sm:$0xff]
      %v2602 = vld [vmem:[%s3 + $0x2b8] sm:$0xff]
      %v2603 = vld [vmem:[%s3 + $0x2c0] sm:$0xff]
      %v2604 = vld [vmem:[%s3 + $0x2c8] sm:$0xff]
      %v2605 = vld [vmem:[%s3 + $0x2d0] sm:$0xff]
      %v2606 = vld [vmem:[%s3 + $0x2d8] sm:$0xff]
      %v2607 = vld [vmem:[%s3 + $0x2e0] sm:$0xff]
      %v2608 = vld [vmem:[%s3 + $0x2e8] sm:$0xff]
      %v2609 = vld [vmem:[%s3 + $0x2f0] sm:$0xff]
      %v2610 = vld [vmem:[%s3 + $0x2f8] sm:$0xff]
      %v2611 = vld [vmem:[%s3 + $0x300] sm:$0xff]
      %v2612 = vld [vmem:[%s3 + $0x308] sm:$0xff]
      %v2613 = vld [vmem:[%s3 + $0x310] sm:$0xff]
      %v2614 = vld [vmem:[%s3 + $0x318] sm:$0xff]
      %v2615 = vld [vmem:[%s3 + $0x320] sm:$0xff]
      %v2616 = vld [vmem:[%s3 + $0x328] sm:$0xff]
      %v2617 = vld [vmem:[%s3 + $0x330] sm:$0xff]
      %v2618 = vld [vmem:[%s3 + $0x338] sm:$0xff]
      %v2619 = vld [vmem:[%s3 + $0x340] sm:$0xff]
      %v2620 = vld [vmem:[%s3 + $0x348] sm:$0xff]
      %v2621 = vld [vmem:[%s3 + $0x350] sm:$0xff]
      %v2622 = vld [vmem:[%s3 + $0x358] sm:$0xff]
      %v2623 = vld [vmem:[%s3 + $0x360] sm:$0xff]
      %v2624 = vld [vmem:[%s3 + $0x368] sm:$0xff]
      %v2625 = vld [vmem:[%s3 + $0x370] sm:$0xff]
      %v2626 = vld [vmem:[%s3 + $0x378] sm:$0xff]
      %v2627 = vld [vmem:[%s3 + $0x380] sm:$0xff]
      %v2628 = vld [vmem:[%s3 + $0x388] sm:$0xff]
      %v2629 = vld [vmem:[%s3 + $0x390] sm:$0xff]
      %v2630 = vld [vmem:[%s3 + $0x398] sm:$0xff]
      %v2631 = vld [vmem:[%s3 + $0x3a0] sm:$0xff]
      %v2632 = vld [vmem:[%s3 + $0x3a8] sm:$0xff]
      %v2633 = vld [vmem:[%s3 + $0x3b0] sm:$0xff]
      %v2634 = vld [vmem:[%s3 + $0x3b8] sm:$0xff]
      %v2635 = vld [vmem:[%s3 + $0x3c0] sm:$0xff]
      %v2636 = vld [vmem:[%s3 + $0x3c8] sm:$0xff]
      %v2637 = vld [vmem:[%s3 + $0x3d0] sm:$0xff]
      %v2638 = vld [vmem:[%s3 + $0x3d8] sm:$0xff]
      %v2639 = vld [vmem:[%s3 + $0x3e0] sm:$0xff]
      %v2640 = vld [vmem:[%s3 + $0x3e8] sm:$0xff]
      %v2641 = vld [vmem:[%s3 + $0x3f0] sm:$0xff]
      %v2642 = vld [vmem:[%s3 + $0x3f8] sm:$0xff]
      %v2643 = vld [vmem:[%s3 + $0x400] sm:$0xff]
      %v2644 = vld [vmem:[%s3 + $0x408] sm:$0xff]
      %v2645 = vld [vmem:[%s3 + $0x410] sm:$0xff]
      %v2646 = vld [vmem:[%s3 + $0x418] sm:$0xff]
      %v2647 = vld [vmem:[%s3 + $0x420] sm:$0xff]
      %v2648 = vld [vmem:[%s3 + $0x428] sm:$0xff]
      %v2649 = vld [vmem:[%s3 + $0x430] sm:$0xff]
      %v2650 = vld [vmem:[%s3 + $0x438] sm:$0xff]
      %v2651 = vld [vmem:[%s3 + $0x440] sm:$0xff]
      %v2652 = vld [vmem:[%s3 + $0x448] sm:$0xff]
      %v2653 = vld [vmem:[%s3 + $0x450] sm:$0xff]
      %v2654 = vld [vmem:[%s3 + $0x458] sm:$0xff]
      %v2655 = vld [vmem:[%s3 + $0x460] sm:$0xff]
      %v2656 = vld [vmem:[%s3 + $0x468] sm:$0xff]
      %v2657 = vld [vmem:[%s3 + $0x470] sm:$0xff]
      %v2658 = vld [vmem:[%s3 + $0x478] sm:$0xff]
      %v2659 = vld [vmem:[%s3 + $0x480] sm:$0xff]
      %v2660 = vld [vmem:[%s3 + $0x488] sm:$0xff]
      %v2661 = vld [vmem:[%s3 + $0x490] sm:$0xff]
      %v2662 = vld [vmem:[%s3 + $0x498] sm:$0xff]
      %v2663 = vld [vmem:[%s3 + $0x4a0] sm:$0xff]
      %v2664 = vld [vmem:[%s3 + $0x4a8] sm:$0xff]
      %v2665 = vld [vmem:[%s3 + $0x4b0] sm:$0xff]
      %v2666 = vld [vmem:[%s3 + $0x4b8] sm:$0xff]
      %v2667 = vld [vmem:[%s3 + $0x4c0] sm:$0xff]
      %v2668 = vld [vmem:[%s3 + $0x4c8] sm:$0xff]
      %v2669 = vld [vmem:[%s3 + $0x4d0] sm:$0xff]
      %v2670 = vld [vmem:[%s3 + $0x4d8] sm:$0xff]
      %v2671 = vld [vmem:[%s3 + $0x4e0] sm:$0xff]
      %v2672 = vld [vmem:[%s3 + $0x4e8] sm:$0xff]
      %v2673 = vld [vmem:[%s3 + $0x4f0] sm:$0xff]
      %v2674 = vld [vmem:[%s3 + $0x4f8] sm:$0xff]
      %v2675 = vld [vmem:[%s4] sm:$0x1]
      %v2677 = vlaneseq
      %v2678 = vshrl.u32 %v2677, 7
      %v2679 = vsub.s32 0, %v2678
      %v2680 = vrot.slane %v2675, %v2679
      %2682 = vmatprep.subr.mxu0 0.0
      %2683 = vmatpush1.msra.mxu0 %v2515
      %2684 = vmatprep.subr.mxu0 0.0
      %2685 = vmatpush1.msra.mxu0 %v2516
      %2686 = vmatprep.subr.mxu0 0.0
      %2687 = vmatpush1.msra.mxu0 %v2517
      %2688 = vmatprep.subr.mxu0 0.0
      %2689 = vmatpush1.msra.mxu0 %v2518
      %2690 = vmatprep.subr.mxu0 0.0
      %2691 = vmatpush1.msra.mxu0 %v2519
      %2692 = vmatprep.subr.mxu0 0.0
      %2693 = vmatpush1.msra.mxu0 %v2520
      %2694 = vmatprep.subr.mxu0 0.0
      %2695 = vmatpush1.msra.mxu0 %v2521
      %2696 = vmatprep.subr.mxu0 0.0
      %2697 = vmatpush1.msra.mxu0 %v2522
      %2698 = vmatprep.subr.mxu0 0.0
      %2699 = vmatpush1.msra.mxu0 %v2523
      %2700 = vmatprep.subr.mxu0 0.0
      %2701 = vmatpush1.msra.mxu0 %v2524
      %2702 = vmatprep.subr.mxu0 0.0
      %2703 = vmatpush1.msra.mxu0 %v2525
      %2704 = vmatprep.subr.mxu0 0.0
      %2705 = vmatpush1.msra.mxu0 %v2526
      %2706 = vmatprep.subr.mxu0 0.0
      %2707 = vmatpush1.msra.mxu0 %v2527
      %2708 = vmatprep.subr.mxu0 0.0
      %2709 = vmatpush1.msra.mxu0 %v2528
      %2710 = vmatprep.subr.mxu0 0.0
      %2711 = vmatpush1.msra.mxu0 %v2529
      %2712 = vmatprep.subr.mxu0 0.0
      %2713 = vmatpush1.msra.mxu0 %v2530
      %2714 = vmatprep.subr.mxu0 0.0
      %2715 = vmatpush1.msra.mxu0 %v2531
      %2716 = vmatprep.subr.mxu0 0.0
      %2717 = vmatpush1.msra.mxu0 %v2532
      %2718 = vmatprep.subr.mxu0 0.0
      %2719 = vmatpush1.msra.mxu0 %v2533
      %2720 = vmatprep.subr.mxu0 0.0
      %2721 = vmatpush1.msra.mxu0 %v2534
      %2722 = vmatprep.subr.mxu0 0.0
      %2723 = vmatpush1.msra.mxu0 %v2535
      %2724 = vmatprep.subr.mxu0 0.0
      %2725 = vmatpush1.msra.mxu0 %v2536
      %2726 = vmatprep.subr.mxu0 0.0
      %2727 = vmatpush1.msra.mxu0 %v2537
      %2728 = vmatprep.subr.mxu0 0.0
      %2729 = vmatpush1.msra.mxu0 %v2538
      %2730 = vmatprep.subr.mxu0 0.0
      %2731 = vmatpush1.msra.mxu0 %v2539
      %2732 = vmatprep.subr.mxu0 0.0
      %2733 = vmatpush1.msra.mxu0 %v2540
      %2734 = vmatprep.subr.mxu0 0.0
      %2735 = vmatpush1.msra.mxu0 %v2541
      %2736 = vmatprep.subr.mxu0 0.0
      %2737 = vmatpush1.msra.mxu0 %v2542
      %2738 = vmatprep.subr.mxu0 0.0
      %2739 = vmatpush1.msra.mxu0 %v2543
      %2740 = vmatprep.subr.mxu0 0.0
      %2741 = vmatpush1.msra.mxu0 %v2544
      %2742 = vmatprep.subr.mxu0 0.0
      %2743 = vmatpush1.msra.mxu0 %v2545
      %2744 = vmatprep.subr.mxu0 0.0
      %2745 = vmatpush1.msra.mxu0 %v2546
      %2746 = vmatprep.mubr.f32.mxu0 %v2259
      %2747 = vmatmul.mubr.f32.gmra.mrb[0].mxu0 %v2155
      %v2748 = vpop.f32.mrb[0].mxu0
      %v2749 = vadd.f32 %v2680, %v2748
      %v2750 = vpop.f32.mrb[0].mxu0
      %2751 = vmatprep.mubr.f32.mxu0 %v2261
      %2752 = vmatmul.mubr.f32.gmra.mrb[0].mxu0 %v2156
      %v2753 = vpop.f32.mrb[0].mxu0
      %v2754 = vadd.f32 %v2680, %v2753
      %v2755 = vpop.f32.mrb[0].mxu0
      %2756 = vmatprep.mubr.f32.mxu0 %v2264
      %2757 = vmatmul.mubr.f32.gmra.mrb[0].mxu0 %v2158
      %v2758 = vpop.f32.mrb[0].mxu0
      %v2759 = vadd.f32 %v2680, %v2758
      %v2760 = vpop.f32.mrb[0].mxu0
      %2761 = vmatprep.mubr.f32.mxu0 %v2266
      %2762 = vmatmul.mubr.f32.gmra.mrb[0].mxu0 %v2159
      %v2763 = vpop.f32.mrb[0].mxu0
      %v2764 = vadd.f32 %v2680, %v2763
      %v2765 = vpop.f32.mrb[0].mxu0
      %2766 = vmatprep.mubr.f32.mxu0 %v2269
      %2767 = vmatmul.mubr.f32.gmra.mrb[0].mxu0 %v2161
      %v2768 = vpop.f32.mrb[0].mxu0
      %v2769 = vadd.f32 %v2680, %v2768
      %v2770 = vpop.f32.mrb[0].mxu0
      %2771 = vmatprep.mubr.f32.mxu0 %v2271
      %2772 = vmatmul.mubr.f32.gmra.mrb[0].mxu0 %v2162
      %v2773 = vpop.f32.mrb[0].mxu0
      %v2774 = vadd.f32 %v2680, %v2773
      %v2775 = vpop.f32.mrb[0].mxu0
      %2776 = vmatprep.mubr.f32.mxu0 %v2274
      %2777 = vmatmul.mubr.f32.gmra.mrb[0].mxu0 %v2164
      %v2778 = vpop.f32.mrb[0].mxu0
      %v2779 = vadd.f32 %v2680, %v2778
      %v2780 = vpop.f32.mrb[0].mxu0
      %2781 = vmatprep.mubr.f32.mxu0 %v2276
      %2782 = vmatmul.mubr.f32.gmra.mrb[0].mxu0 %v2165
      %v2783 = vpop.f32.mrb[0].mxu0
      %v2784 = vadd.f32 %v2680, %v2783
      %v2785 = vpop.f32.mrb[0].mxu0
      %2786 = vmatprep.mubr.f32.mxu0 %v2279
      %2787 = vmatmul.mubr.f32.gmra.mrb[0].mxu0 %v2167
      %v2788 = vpop.f32.mrb[0].mxu0
      %v2789 = vadd.f32 %v2680, %v2788
      %v2790 = vpop.f32.mrb[0].mxu0
      %2791 = vmatprep.mubr.f32.mxu0 %v2281
      %2792 = vmatmul.mubr.f32.gmra.mrb[0].mxu0 %v2168
      %v2793 = vpop.f32.mrb[0].mxu0
      %v2794 = vadd.f32 %v2680, %v2793
      %v2795 = vpop.f32.mrb[0].mxu0
      %2796 = vmatprep.mubr.f32.mxu0 %v2284
      %2797 = vmatmul.mubr.f32.gmra.mrb[0].mxu0 %v2170
      %v2798 = vpop.f32.mrb[0].mxu0
      %v2799 = vadd.f32 %v2680, %v2798
      %v2800 = vpop.f32.mrb[0].mxu0
      %2801 = vmatprep.mubr.f32.mxu0 %v2286
      %2802 = vmatmul.mubr.f32.gmra.mrb[0].mxu0 %v2171
      %v2803 = vpop.f32.mrb[0].mxu0
      %v2804 = vadd.f32 %v2680, %v2803
      %v2805 = vpop.f32.mrb[0].mxu0
      %2806 = vmatprep.mubr.f32.mxu0 %v2289
      %2807 = vmatmul.mubr.f32.gmra.mrb[0].mxu0 %v2173
      %v2808 = vpop.f32.mrb[0].mxu0
      %v2809 = vadd.f32 %v2680, %v2808
      %v2810 = vpop.f32.mrb[0].mxu0
      %2811 = vmatprep.mubr.f32.mxu0 %v2291
      %2812 = vmatmul.mubr.f32.gmra.mrb[0].mxu0 %v2174
      %v2813 = vpop.f32.mrb[0].mxu0
      %v2814 = vadd.f32 %v2680, %v2813
      %v2815 = vpop.f32.mrb[0].mxu0
      %2816 = vmatprep.mubr.f32.mxu0 %v2294
      %2817 = vmatmul.mubr.f32.gmra.mrb[0].mxu0 %v2176
      %v2818 = vpop.f32.mrb[0].mxu0
      %v2819 = vadd.f32 %v2680, %v2818
      %v2820 = vpop.f32.mrb[0].mxu0
      %2821 = vmatprep.mubr.f32.mxu0 %v2296
      %2822 = vmatmul.mubr.f32.gmra.mrb[0].mxu0 %v2177
      %v2823 = vpop.f32.mrb[0].mxu0
      %v2824 = vadd.f32 %v2680, %v2823
      %v2825 = vpop.f32.mrb[0].mxu0
      %2826 = vmatprep.mubr.f32.mxu0 %v2299
      %2827 = vmatmul.mubr.f32.gmra.mrb[0].mxu0 %v2179
      %v2828 = vpop.f32.mrb[0].mxu0
      %v2829 = vadd.f32 %v2680, %v2828
      %v2830 = vpop.f32.mrb[0].mxu0
      %2831 = vmatprep.mubr.f32.mxu0 %v2301
      %2832 = vmatmul.mubr.f32.gmra.mrb[0].mxu0 %v2180
      %v2833 = vpop.f32.mrb[0].mxu0
      %v2834 = vadd.f32 %v2680, %v2833
      %v2835 = vpop.f32.mrb[0].mxu0
      %2836 = vmatprep.mubr.f32.mxu0 %v2304
      %2837 = vmatmul.mubr.f32.gmra.mrb[0].mxu0 %v2182
      %v2838 = vpop.f32.mrb[0].mxu0
      %v2839 = vadd.f32 %v2680, %v2838
      %v2840 = vpop.f32.mrb[0].mxu0
      %2841 = vmatprep.mubr.f32.mxu0 %v2306
      %2842 = vmatmul.mubr.f32.gmra.mrb[0].mxu0 %v2183
      %v2843 = vpop.f32.mrb[0].mxu0
      %v2844 = vadd.f32 %v2680, %v2843
      %v2845 = vpop.f32.mrb[0].mxu0
      %2846 = vmatprep.mubr.f32.mxu0 %v2309
      %2847 = vmatmul.mubr.f32.gmra.mrb[0].mxu0 %v2185
      %v2848 = vpop.f32.mrb[0].mxu0
      %v2849 = vadd.f32 %v2680, %v2848
      %v2850 = vpop.f32.mrb[0].mxu0
      %2851 = vmatprep.mubr.f32.mxu0 %v2311
      %2852 = vmatmul.mubr.f32.gmra.mrb[0].mxu0 %v2186
      %v2853 = vpop.f32.mrb[0].mxu0
      %v2854 = vadd.f32 %v2680, %v2853
      %v2855 = vpop.f32.mrb[0].mxu0
      %2856 = vmatprep.mubr.f32.mxu0 %v2314
      %2857 = vmatmul.mubr.f32.gmra.mrb[0].mxu0 %v2188
      %v2858 = vpop.f32.mrb[0].mxu0
      %v2859 = vadd.f32 %v2680, %v2858
      %v2860 = vpop.f32.mrb[0].mxu0
      %2861 = vmatprep.mubr.f32.mxu0 %v2316
      %2862 = vmatmul.mubr.f32.gmra.mrb[0].mxu0 %v2189
      %v2863 = vpop.f32.mrb[0].mxu0
      %v2864 = vadd.f32 %v2680, %v2863
      %v2865 = vpop.f32.mrb[0].mxu0
      %2866 = vmatprep.mubr.f32.mxu0 %v2319
      %2867 = vmatmul.mubr.f32.gmra.mrb[0].mxu0 %v2191
      %v2868 = vpop.f32.mrb[0].mxu0
      %v2869 = vadd.f32 %v2680, %v2868
      %v2870 = vpop.f32.mrb[0].mxu0
      %2871 = vmatprep.mubr.f32.mxu0 %v2321
      %2872 = vmatmul.mubr.f32.gmra.mrb[0].mxu0 %v2192
      %v2873 = vpop.f32.mrb[0].mxu0
      %v2874 = vadd.f32 %v2680, %v2873
      %v2875 = vpop.f32.mrb[0].mxu0
      %2876 = vmatprep.mubr.f32.mxu0 %v2324
      %2877 = vmatmul.mubr.f32.gmra.mrb[0].mxu0 %v2194
      %v2878 = vpop.f32.mrb[0].mxu0
      %v2879 = vadd.f32 %v2680, %v2878
      %v2880 = vpop.f32.mrb[0].mxu0
      %2881 = vmatprep.mubr.f32.mxu0 %v2326
      %2882 = vmatmul.mubr.f32.gmra.mrb[0].mxu0 %v2195
      %v2883 = vpop.f32.mrb[0].mxu0
      %v2884 = vadd.f32 %v2680, %v2883
      %v2885 = vpop.f32.mrb[0].mxu0
      %2886 = vmatprep.mubr.f32.mxu0 %v2329
      %2887 = vmatmul.mubr.f32.gmra.mrb[0].mxu0 %v2197
      %v2888 = vpop.f32.mrb[0].mxu0
      %v2889 = vadd.f32 %v2680, %v2888
      %v2890 = vpop.f32.mrb[0].mxu0
      %2891 = vmatprep.mubr.f32.mxu0 %v2331
      %2892 = vmatmul.mubr.f32.gmra.mrb[0].mxu0 %v2198
      %v2893 = vpop.f32.mrb[0].mxu0
      %v2894 = vadd.f32 %v2680, %v2893
      %v2895 = vpop.f32.mrb[0].mxu0
      %2896 = vmatprep.mubr.f32.mxu0 %v2334
      %2897 = vmatmul.mubr.f32.gmra.mrb[0].mxu0 %v2200
      %v2898 = vpop.f32.mrb[0].mxu0
      %v2899 = vadd.f32 %v2680, %v2898
      %v2900 = vpop.f32.mrb[0].mxu0
      %2901 = vmatprep.mubr.f32.mxu0 %v2336
      %2902 = vmatmul.mubr.f32.gmra.mrb[0].mxu0 %v2201
      %v2903 = vpop.f32.mrb[0].mxu0
      %v2904 = vadd.f32 %v2680, %v2903
      %v2905 = vpop.f32.mrb[0].mxu0
      %2906 = vdwg.mxu0
      %2907 = vmatprep.subr.mxu0 0.0
      %2908 = vmatpush1.msra.mxu0 %v2547
      %2909 = vmatprep.subr.mxu0 0.0
      %2910 = vmatpush1.msra.mxu0 %v2548
      %2911 = vmatprep.subr.mxu0 0.0
      %2912 = vmatpush1.msra.mxu0 %v2549
      %2913 = vmatprep.subr.mxu0 0.0
      %2914 = vmatpush1.msra.mxu0 %v2550
      %2915 = vmatprep.subr.mxu0 0.0
      %2916 = vmatpush1.msra.mxu0 %v2551
      %2917 = vmatprep.subr.mxu0 0.0
      %2918 = vmatpush1.msra.mxu0 %v2552
      %2919 = vmatprep.subr.mxu0 0.0
      %2920 = vmatpush1.msra.mxu0 %v2553
      %2921 = vmatprep.subr.mxu0 0.0
      %2922 = vmatpush1.msra.mxu0 %v2554
      %2923 = vmatprep.subr.mxu0 0.0
      %2924 = vmatpush1.msra.mxu0 %v2555
      %2925 = vmatprep.subr.mxu0 0.0
      %2926 = vmatpush1.msra.mxu0 %v2556
      %2927 = vmatprep.subr.mxu0 0.0
      %2928 = vmatpush1.msra.mxu0 %v2557
      %2929 = vmatprep.subr.mxu0 0.0
      %2930 = vmatpush1.msra.mxu0 %v2558
      %2931 = vmatprep.subr.mxu0 0.0
      %2932 = vmatpush1.msra.mxu0 %v2559
      %2933 = vmatprep.subr.mxu0 0.0
      %2934 = vmatpush1.msra.mxu0 %v2560
      %2935 = vmatprep.subr.mxu0 0.0
      %2936 = vmatpush1.msra.mxu0 %v2561
      %2937 = vmatprep.subr.mxu0 0.0
      %2938 = vmatpush1.msra.mxu0 %v2562
      %2939 = vmatprep.subr.mxu0 0.0
      %2940 = vmatpush1.msra.mxu0 %v2563
      %2941 = vmatprep.subr.mxu0 0.0
      %2942 = vmatpush1.msra.mxu0 %v2564
      %2943 = vmatprep.subr.mxu0 0.0
      %2944 = vmatpush1.msra.mxu0 %v2565
      %2945 = vmatprep.subr.mxu0 0.0
      %2946 = vmatpush1.msra.mxu0 %v2566
      %2947 = vmatprep.subr.mxu0 0.0
      %2948 = vmatpush1.msra.mxu0 %v2567
      %2949 = vmatprep.subr.mxu0 0.0
      %2950 = vmatpush1.msra.mxu0 %v2568
      %2951 = vmatprep.subr.mxu0 0.0
      %2952 = vmatpush1.msra.mxu0 %v2569
      %2953 = vmatprep.subr.mxu0 0.0
      %2954 = vmatpush1.msra.mxu0 %v2570
      %2955 = vmatprep.subr.mxu0 0.0
      %2956 = vmatpush1.msra.mxu0 %v2571
      %2957 = vmatprep.subr.mxu0 0.0
      %2958 = vmatpush1.msra.mxu0 %v2572
      %2959 = vmatprep.subr.mxu0 0.0
      %2960 = vmatpush1.msra.mxu0 %v2573
      %2961 = vmatprep.subr.mxu0 0.0
      %2962 = vmatpush1.msra.mxu0 %v2574
      %2963 = vmatprep.subr.mxu0 0.0
      %2964 = vmatpush1.msra.mxu0 %v2575
      %2965 = vmatprep.subr.mxu0 0.0
      %2966 = vmatpush1.msra.mxu0 %v2576
      %2967 = vmatprep.subr.mxu0 0.0
      %2968 = vmatpush1.msra.mxu0 %v2577
      %2969 = vmatprep.subr.mxu0 0.0
      %2970 = vmatpush1.msra.mxu0 %v2578
      %2971 = vmatprep.mubr.f32.mxu0 %v2158
      %2972 = vmatmul.mubr.f32.gmra.mrb[0].mxu0 %v2371
      %v2973 = vpop.f32.mrb[0].mxu0
      %v2974 = vadd.f32 %v2749, %v2973
      %v2975 = vpop.f32.mrb[0].mxu0
      %2976 = vmatprep.mubr.f32.mxu0 %v2159
      %2977 = vmatmul.mubr.f32.gmra.mrb[0].mxu0 %v2373
      %v2978 = vpop.f32.mrb[0].mxu0
      %v2979 = vadd.f32 %v2754, %v2978
      %v2980 = vpop.f32.mrb[0].mxu0
      %2981 = vmatprep.mubr.f32.mxu0 %v2161
      %2982 = vmatmul.mubr.f32.gmra.mrb[0].mxu0 %v2376
      %v2983 = vpop.f32.mrb[0].mxu0
      %v2984 = vadd.f32 %v2759, %v2983
      %v2985 = vpop.f32.mrb[0].mxu0
      %2986 = vmatprep.mubr.f32.mxu0 %v2162
      %2987 = vmatmul.mubr.f32.gmra.mrb[0].mxu0 %v2378
      %v2988 = vpop.f32.mrb[0].mxu0
      %v2989 = vadd.f32 %v2764, %v2988
      %v2990 = vpop.f32.mrb[0].mxu0
      %2991 = vmatprep.mubr.f32.mxu0 %v2164
      %2992 = vmatmul.mubr.f32.gmra.mrb[0].mxu0 %v2381
      %v2993 = vpop.f32.mrb[0].mxu0
      %v2994 = vadd.f32 %v2769, %v2993
      %v2995 = vpop.f32.mrb[0].mxu0
      %2996 = vmatprep.mubr.f32.mxu0 %v2165
      %2997 = vmatmul.mubr.f32.gmra.mrb[0].mxu0 %v2383
      %v2998 = vpop.f32.mrb[0].mxu0
      %v2999 = vadd.f32 %v2774, %v2998
      %v3000 = vpop.f32.mrb[0].mxu0
      %3001 = vmatprep.mubr.f32.mxu0 %v2167
      %3002 = vmatmul.mubr.f32.gmra.mrb[0].mxu0 %v2386
      %v3003 = vpop.f32.mrb[0].mxu0
      %v3004 = vadd.f32 %v2779, %v3003
      %v3005 = vpop.f32.mrb[0].mxu0
      %3006 = vmatprep.mubr.f32.mxu0 %v2168
      %3007 = vmatmul.mubr.f32.gmra.mrb[0].mxu0 %v2388
      %v3008 = vpop.f32.mrb[0].mxu0
      %v3009 = vadd.f32 %v2784, %v3008
      %v3010 = vpop.f32.mrb[0].mxu0
      %3011 = vmatprep.mubr.f32.mxu0 %v2170
      %3012 = vmatmul.mubr.f32.gmra.mrb[0].mxu0 %v2391
      %v3013 = vpop.f32.mrb[0].mxu0
      %v3014 = vadd.f32 %v2789, %v3013
      %v3015 = vpop.f32.mrb[0].mxu0
      %3016 = vmatprep.mubr.f32.mxu0 %v2171
      %3017 = vmatmul.mubr.f32.gmra.mrb[0].mxu0 %v2393
      %v3018 = vpop.f32.mrb[0].mxu0
      %v3019 = vadd.f32 %v2794, %v3018
      %v3020 = vpop.f32.mrb[0].mxu0
      %3021 = vmatprep.mubr.f32.mxu0 %v2173
      %3022 = vmatmul.mubr.f32.gmra.mrb[0].mxu0 %v2396
      %v3023 = vpop.f32.mrb[0].mxu0
      %v3024 = vadd.f32 %v2799, %v3023
      %v3025 = vpop.f32.mrb[0].mxu0
      %3026 = vmatprep.mubr.f32.mxu0 %v2174
      %3027 = vmatmul.mubr.f32.gmra.mrb[0].mxu0 %v2398
      %v3028 = vpop.f32.mrb[0].mxu0
      %v3029 = vadd.f32 %v2804, %v3028
      %v3030 = vpop.f32.mrb[0].mxu0
      %3031 = vmatprep.mubr.f32.mxu0 %v2176
      %3032 = vmatmul.mubr.f32.gmra.mrb[0].mxu0 %v2401
      %v3033 = vpop.f32.mrb[0].mxu0
      %v3034 = vadd.f32 %v2809, %v3033
      %v3035 = vpop.f32.mrb[0].mxu0
      %3036 = vmatprep.mubr.f32.mxu0 %v2177
      %3037 = vmatmul.mubr.f32.gmra.mrb[0].mxu0 %v2403
      %v3038 = vpop.f32.mrb[0].mxu0
      %v3039 = vadd.f32 %v2814, %v3038
      %v3040 = vpop.f32.mrb[0].mxu0
      %3041 = vmatprep.mubr.f32.mxu0 %v2179
      %3042 = vmatmul.mubr.f32.gmra.mrb[0].mxu0 %v2406
      %v3043 = vpop.f32.mrb[0].mxu0
      %v3044 = vadd.f32 %v2819, %v3043
      %v3045 = vpop.f32.mrb[0].mxu0
      %3046 = vmatprep.mubr.f32.mxu0 %v2180
      %3047 = vmatmul.mubr.f32.gmra.mrb[0].mxu0 %v2408
      %v3048 = vpop.f32.mrb[0].mxu0
      %v3049 = vadd.f32 %v2824, %v3048
      %v3050 = vpop.f32.mrb[0].mxu0
      %3051 = vmatprep.mubr.f32.mxu0 %v2182
      %3052 = vmatmul.mubr.f32.gmra.mrb[0].mxu0 %v2411
      %v3053 = vpop.f32.mrb[0].mxu0
      %v3054 = vadd.f32 %v2829, %v3053
      %v3055 = vpop.f32.mrb[0].mxu0
      %3056 = vmatprep.mubr.f32.mxu0 %v2183
      %3057 = vmatmul.mubr.f32.gmra.mrb[0].mxu0 %v2413
      %v3058 = vpop.f32.mrb[0].mxu0
      %v3059 = vadd.f32 %v2834, %v3058
      %v3060 = vpop.f32.mrb[0].mxu0
      %3061 = vmatprep.mubr.f32.mxu0 %v2185
      %3062 = vmatmul.mubr.f32.gmra.mrb[0].mxu0 %v2416
      %v3063 = vpop.f32.mrb[0].mxu0
      %v3064 = vadd.f32 %v2839, %v3063
      %v3065 = vpop.f32.mrb[0].mxu0
      %3066 = vmatprep.mubr.f32.mxu0 %v2186
      %3067 = vmatmul.mubr.f32.gmra.mrb[0].mxu0 %v2418
      %v3068 = vpop.f32.mrb[0].mxu0
      %v3069 = vadd.f32 %v2844, %v3068
      %v3070 = vpop.f32.mrb[0].mxu0
      %3071 = vmatprep.mubr.f32.mxu0 %v2188
      %3072 = vmatmul.mubr.f32.gmra.mrb[0].mxu0 %v2421
      %v3073 = vpop.f32.mrb[0].mxu0
      %v3074 = vadd.f32 %v2849, %v3073
      %v3075 = vpop.f32.mrb[0].mxu0
      %3076 = vmatprep.mubr.f32.mxu0 %v2189
      %3077 = vmatmul.mubr.f32.gmra.mrb[0].mxu0 %v2423
      %v3078 = vpop.f32.mrb[0].mxu0
      %v3079 = vadd.f32 %v2854, %v3078
      %v3080 = vpop.f32.mrb[0].mxu0
      %3081 = vmatprep.mubr.f32.mxu0 %v2191
      %3082 = vmatmul.mubr.f32.gmra.mrb[0].mxu0 %v2426
      %v3083 = vpop.f32.mrb[0].mxu0
      %v3084 = vadd.f32 %v2859, %v3083
      %v3085 = vpop.f32.mrb[0].mxu0
      %3086 = vmatprep.mubr.f32.mxu0 %v2192
      %3087 = vmatmul.mubr.f32.gmra.mrb[0].mxu0 %v2428
      %v3088 = vpop.f32.mrb[0].mxu0
      %v3089 = vadd.f32 %v2864, %v3088
      %v3090 = vpop.f32.mrb[0].mxu0
      %3091 = vmatprep.mubr.f32.mxu0 %v2194
      %3092 = vmatmul.mubr.f32.gmra.mrb[0].mxu0 %v2431
      %v3093 = vpop.f32.mrb[0].mxu0
      %v3094 = vadd.f32 %v2869, %v3093
      %v3095 = vpop.f32.mrb[0].mxu0
      %3096 = vmatprep.mubr.f32.mxu0 %v2195
      %3097 = vmatmul.mubr.f32.gmra.mrb[0].mxu0 %v2433
      %v3098 = vpop.f32.mrb[0].mxu0
      %v3099 = vadd.f32 %v2874, %v3098
      %v3100 = vpop.f32.mrb[0].mxu0
      %3101 = vmatprep.mubr.f32.mxu0 %v2197
      %3102 = vmatmul.mubr.f32.gmra.mrb[0].mxu0 %v2436
      %v3103 = vpop.f32.mrb[0].mxu0
      %v3104 = vadd.f32 %v2879, %v3103
      %v3105 = vpop.f32.mrb[0].mxu0
      %3106 = vmatprep.mubr.f32.mxu0 %v2198
      %3107 = vmatmul.mubr.f32.gmra.mrb[0].mxu0 %v2438
      %v3108 = vpop.f32.mrb[0].mxu0
      %v3109 = vadd.f32 %v2884, %v3108
      %v3110 = vpop.f32.mrb[0].mxu0
      %3111 = vmatprep.mubr.f32.mxu0 %v2200
      %3112 = vmatmul.mubr.f32.gmra.mrb[0].mxu0 %v2441
      %v3113 = vpop.f32.mrb[0].mxu0
      %v3114 = vadd.f32 %v2889, %v3113
      %v3115 = vpop.f32.mrb[0].mxu0
      %3116 = vmatprep.mubr.f32.mxu0 %v2201
      %3117 = vmatmul.mubr.f32.gmra.mrb[0].mxu0 %v2443
      %v3118 = vpop.f32.mrb[0].mxu0
      %v3119 = vadd.f32 %v2894, %v3118
      %v3120 = vpop.f32.mrb[0].mxu0
      %3121 = vmatprep.mubr.f32.mxu0 %v2203
      %3122 = vmatmul.mubr.f32.gmra.mrb[0].mxu0 %v2446
      %v3123 = vpop.f32.mrb[0].mxu0
      %v3124 = vadd.f32 %v2899, %v3123
      %v3125 = vpop.f32.mrb[0].mxu0
      %3126 = vmatprep.mubr.f32.mxu0 %v2204
      %3127 = vmatmul.mubr.f32.gmra.mrb[0].mxu0 %v2448
      %v3128 = vpop.f32.mrb[0].mxu0
      %v3129 = vadd.f32 %v2904, %v3128
      %v3130 = vpop.f32.mrb[0].mxu0
      %3131 = vdwg.mxu0
      %3132 = vmatprep.subr.mxu0 0.0
      %3133 = vmatpush1.msra.mxu0 %v2579
      %3134 = vmatprep.subr.mxu0 0.0
      %3135 = vmatpush1.msra.mxu0 %v2580
      %3136 = vmatprep.subr.mxu0 0.0
      %3137 = vmatpush1.msra.mxu0 %v2581
      %3138 = vmatprep.subr.mxu0 0.0
      %3139 = vmatpush1.msra.mxu0 %v2582
      %3140 = vmatprep.subr.mxu0 0.0
      %3141 = vmatpush1.msra.mxu0 %v2583
      %3142 = vmatprep.subr.mxu0 0.0
      %3143 = vmatpush1.msra.mxu0 %v2584
      %3144 = vmatprep.subr.mxu0 0.0
      %3145 = vmatpush1.msra.mxu0 %v2585
      %3146 = vmatprep.subr.mxu0 0.0
      %3147 = vmatpush1.msra.mxu0 %v2586
      %3148 = vmatprep.subr.mxu0 0.0
      %3149 = vmatpush1.msra.mxu0 %v2587
      %3150 = vmatprep.subr.mxu0 0.0
      %3151 = vmatpush1.msra.mxu0 %v2588
      %3152 = vmatprep.subr.mxu0 0.0
      %3153 = vmatpush1.msra.mxu0 %v2589
      %3154 = vmatprep.subr.mxu0 0.0
      %3155 = vmatpush1.msra.mxu0 %v2590
      %3156 = vmatprep.subr.mxu0 0.0
      %3157 = vmatpush1.msra.mxu0 %v2591
      %3158 = vmatprep.subr.mxu0 0.0
      %3159 = vmatpush1.msra.mxu0 %v2592
      %3160 = vmatprep.subr.mxu0 0.0
      %3161 = vmatpush1.msra.mxu0 %v2593
      %3162 = vmatprep.subr.mxu0 0.0
      %3163 = vmatpush1.msra.mxu0 %v2594
      %3164 = vmatprep.subr.mxu0 0.0
      %3165 = vmatpush1.msra.mxu0 %v2595
      %3166 = vmatprep.subr.mxu0 0.0
      %3167 = vmatpush1.msra.mxu0 %v2596
      %3168 = vmatprep.subr.mxu0 0.0
      %3169 = vmatpush1.msra.mxu0 %v2597
      %3170 = vmatprep.subr.mxu0 0.0
      %3171 = vmatpush1.msra.mxu0 %v2598
      %3172 = vmatprep.subr.mxu0 0.0
      %3173 = vmatpush1.msra.mxu0 %v2599
      %3174 = vmatprep.subr.mxu0 0.0
      %3175 = vmatpush1.msra.mxu0 %v2600
      %3176 = vmatprep.subr.mxu0 0.0
      %3177 = vmatpush1.msra.mxu0 %v2601
      %3178 = vmatprep.subr.mxu0 0.0
      %3179 = vmatpush1.msra.mxu0 %v2602
      %3180 = vmatprep.subr.mxu0 0.0
      %3181 = vmatpush1.msra.mxu0 %v2603
      %3182 = vmatprep.subr.mxu0 0.0
      %3183 = vmatpush1.msra.mxu0 %v2604
      %3184 = vmatprep.subr.mxu0 0.0
      %3185 = vmatpush1.msra.mxu0 %v2605
      %3186 = vmatprep.subr.mxu0 0.0
      %3187 = vmatpush1.msra.mxu0 %v2606
      %3188 = vmatprep.subr.mxu0 0.0
      %3189 = vmatpush1.msra.mxu0 %v2607
      %3190 = vmatprep.subr.mxu0 0.0
      %3191 = vmatpush1.msra.mxu0 %v2608
      %3192 = vmatprep.subr.mxu0 0.0
      %3193 = vmatpush1.msra.mxu0 %v2609
      %3194 = vmatprep.subr.mxu0 0.0
      %3195 = vmatpush1.msra.mxu0 %v2610
      %3196 = vmatprep.mubr.f32.mxu0 %v2376
      %3197 = vmatmul.mubr.f32.gmra.mrb[0].mxu0 %v2264
      %v3198 = vpop.f32.mrb[0].mxu0
      %v3199 = vadd.f32 %v2974, %v3198
      %v3200 = vpop.f32.mrb[0].mxu0
      %3201 = vmatprep.mubr.f32.mxu0 %v2378
      %3202 = vmatmul.mubr.f32.gmra.mrb[0].mxu0 %v2266
      %v3203 = vpop.f32.mrb[0].mxu0
      %v3204 = vadd.f32 %v2979, %v3203
      %v3205 = vpop.f32.mrb[0].mxu0
      %3206 = vmatprep.mubr.f32.mxu0 %v2381
      %3207 = vmatmul.mubr.f32.gmra.mrb[0].mxu0 %v2269
      %v3208 = vpop.f32.mrb[0].mxu0
      %v3209 = vadd.f32 %v2984, %v3208
      %v3210 = vpop.f32.mrb[0].mxu0
      %3211 = vmatprep.mubr.f32.mxu0 %v2383
      %3212 = vmatmul.mubr.f32.gmra.mrb[0].mxu0 %v2271
      %v3213 = vpop.f32.mrb[0].mxu0
      %v3214 = vadd.f32 %v2989, %v3213
      %v3215 = vpop.f32.mrb[0].mxu0
      %3216 = vmatprep.mubr.f32.mxu0 %v2386
      %3217 = vmatmul.mubr.f32.gmra.mrb[0].mxu0 %v2274
      %v3218 = vpop.f32.mrb[0].mxu0
      %v3219 = vadd.f32 %v2994, %v3218
      %v3220 = vpop.f32.mrb[0].mxu0
      %3221 = vmatprep.mubr.f32.mxu0 %v2388
      %3222 = vmatmul.mubr.f32.gmra.mrb[0].mxu0 %v2276
      %v3223 = vpop.f32.mrb[0].mxu0
      %v3224 = vadd.f32 %v2999, %v3223
      %v3225 = vpop.f32.mrb[0].mxu0
      %3226 = vmatprep.mubr.f32.mxu0 %v2391
      %3227 = vmatmul.mubr.f32.gmra.mrb[0].mxu0 %v2279
      %v3228 = vpop.f32.mrb[0].mxu0
      %v3229 = vadd.f32 %v3004, %v3228
      %v3230 = vpop.f32.mrb[0].mxu0
      %3231 = vmatprep.mubr.f32.mxu0 %v2393
      %3232 = vmatmul.mubr.f32.gmra.mrb[0].mxu0 %v2281
      %v3233 = vpop.f32.mrb[0].mxu0
      %v3234 = vadd.f32 %v3009, %v3233
      %v3235 = vpop.f32.mrb[0].mxu0
      %3236 = vmatprep.mubr.f32.mxu0 %v2396
      %3237 = vmatmul.mubr.f32.gmra.mrb[0].mxu0 %v2284
      %v3238 = vpop.f32.mrb[0].mxu0
      %v3239 = vadd.f32 %v3014, %v3238
      %v3240 = vpop.f32.mrb[0].mxu0
      %3241 = vmatprep.mubr.f32.mxu0 %v2398
      %3242 = vmatmul.mubr.f32.gmra.mrb[0].mxu0 %v2286
      %v3243 = vpop.f32.mrb[0].mxu0
      %v3244 = vadd.f32 %v3019, %v3243
      %v3245 = vpop.f32.mrb[0].mxu0
      %3246 = vmatprep.mubr.f32.mxu0 %v2401
      %3247 = vmatmul.mubr.f32.gmra.mrb[0].mxu0 %v2289
      %v3248 = vpop.f32.mrb[0].mxu0
      %v3249 = vadd.f32 %v3024, %v3248
      %v3250 = vpop.f32.mrb[0].mxu0
      %3251 = vmatprep.mubr.f32.mxu0 %v2403
      %3252 = vmatmul.mubr.f32.gmra.mrb[0].mxu0 %v2291
      %v3253 = vpop.f32.mrb[0].mxu0
      %v3254 = vadd.f32 %v3029, %v3253
      %v3255 = vpop.f32.mrb[0].mxu0
      %3256 = vmatprep.mubr.f32.mxu0 %v2406
      %3257 = vmatmul.mubr.f32.gmra.mrb[0].mxu0 %v2294
      %v3258 = vpop.f32.mrb[0].mxu0
      %v3259 = vadd.f32 %v3034, %v3258
      %v3260 = vpop.f32.mrb[0].mxu0
      %3261 = vmatprep.mubr.f32.mxu0 %v2408
      %3262 = vmatmul.mubr.f32.gmra.mrb[0].mxu0 %v2296
      %v3263 = vpop.f32.mrb[0].mxu0
      %v3264 = vadd.f32 %v3039, %v3263
      %v3265 = vpop.f32.mrb[0].mxu0
      %3266 = vmatprep.mubr.f32.mxu0 %v2411
      %3267 = vmatmul.mubr.f32.gmra.mrb[0].mxu0 %v2299
      %v3268 = vpop.f32.mrb[0].mxu0
      %v3269 = vadd.f32 %v3044, %v3268
      %v3270 = vpop.f32.mrb[0].mxu0
      %3271 = vmatprep.mubr.f32.mxu0 %v2413
      %3272 = vmatmul.mubr.f32.gmra.mrb[0].mxu0 %v2301
      %v3273 = vpop.f32.mrb[0].mxu0
      %v3274 = vadd.f32 %v3049, %v3273
      %v3275 = vpop.f32.mrb[0].mxu0
      %3276 = vmatprep.mubr.f32.mxu0 %v2416
      %3277 = vmatmul.mubr.f32.gmra.mrb[0].mxu0 %v2304
      %v3278 = vpop.f32.mrb[0].mxu0
      %v3279 = vadd.f32 %v3054, %v3278
      %v3280 = vpop.f32.mrb[0].mxu0
      %3281 = vmatprep.mubr.f32.mxu0 %v2418
      %3282 = vmatmul.mubr.f32.gmra.mrb[0].mxu0 %v2306
      %v3283 = vpop.f32.mrb[0].mxu0
      %v3284 = vadd.f32 %v3059, %v3283
      %v3285 = vpop.f32.mrb[0].mxu0
      %3286 = vmatprep.mubr.f32.mxu0 %v2421
      %3287 = vmatmul.mubr.f32.gmra.mrb[0].mxu0 %v2309
      %v3288 = vpop.f32.mrb[0].mxu0
      %v3289 = vadd.f32 %v3064, %v3288
      %v3290 = vpop.f32.mrb[0].mxu0
      %3291 = vmatprep.mubr.f32.mxu0 %v2423
      %3292 = vmatmul.mubr.f32.gmra.mrb[0].mxu0 %v2311
      %v3293 = vpop.f32.mrb[0].mxu0
      %v3294 = vadd.f32 %v3069, %v3293
      %v3295 = vpop.f32.mrb[0].mxu0
      %3296 = vmatprep.mubr.f32.mxu0 %v2426
      %3297 = vmatmul.mubr.f32.gmra.mrb[0].mxu0 %v2314
      %v3298 = vpop.f32.mrb[0].mxu0
      %v3299 = vadd.f32 %v3074, %v3298
      %v3300 = vpop.f32.mrb[0].mxu0
      %3301 = vmatprep.mubr.f32.mxu0 %v2428
      %3302 = vmatmul.mubr.f32.gmra.mrb[0].mxu0 %v2316
      %v3303 = vpop.f32.mrb[0].mxu0
      %v3304 = vadd.f32 %v3079, %v3303
      %v3305 = vpop.f32.mrb[0].mxu0
      %3306 = vmatprep.mubr.f32.mxu0 %v2431
      %3307 = vmatmul.mubr.f32.gmra.mrb[0].mxu0 %v2319
      %v3308 = vpop.f32.mrb[0].mxu0
      %v3309 = vadd.f32 %v3084, %v3308
      %v3310 = vpop.f32.mrb[0].mxu0
      %3311 = vmatprep.mubr.f32.mxu0 %v2433
      %3312 = vmatmul.mubr.f32.gmra.mrb[0].mxu0 %v2321
      %v3313 = vpop.f32.mrb[0].mxu0
      %v3314 = vadd.f32 %v3089, %v3313
      %v3315 = vpop.f32.mrb[0].mxu0
      %3316 = vmatprep.mubr.f32.mxu0 %v2436
      %3317 = vmatmul.mubr.f32.gmra.mrb[0].mxu0 %v2324
      %v3318 = vpop.f32.mrb[0].mxu0
      %v3319 = vadd.f32 %v3094, %v3318
      %v3320 = vpop.f32.mrb[0].mxu0
      %3321 = vmatprep.mubr.f32.mxu0 %v2438
      %3322 = vmatmul.mubr.f32.gmra.mrb[0].mxu0 %v2326
      %v3323 = vpop.f32.mrb[0].mxu0
      %v3324 = vadd.f32 %v3099, %v3323
      %v3325 = vpop.f32.mrb[0].mxu0
      %3326 = vmatprep.mubr.f32.mxu0 %v2441
      %3327 = vmatmul.mubr.f32.gmra.mrb[0].mxu0 %v2329
      %v3328 = vpop.f32.mrb[0].mxu0
      %v3329 = vadd.f32 %v3104, %v3328
      %v3330 = vpop.f32.mrb[0].mxu0
      %3331 = vmatprep.mubr.f32.mxu0 %v2443
      %3332 = vmatmul.mubr.f32.gmra.mrb[0].mxu0 %v2331
      %v3333 = vpop.f32.mrb[0].mxu0
      %v3334 = vadd.f32 %v3109, %v3333
      %v3335 = vpop.f32.mrb[0].mxu0
      %3336 = vmatprep.mubr.f32.mxu0 %v2446
      %3337 = vmatmul.mubr.f32.gmra.mrb[0].mxu0 %v2334
      %v3338 = vpop.f32.mrb[0].mxu0
      %v3339 = vadd.f32 %v3114, %v3338
      %v3340 = vpop.f32.mrb[0].mxu0
      %3341 = vmatprep.mubr.f32.mxu0 %v2448
      %3342 = vmatmul.mubr.f32.gmra.mrb[0].mxu0 %v2336
      %v3343 = vpop.f32.mrb[0].mxu0
      %v3344 = vadd.f32 %v3119, %v3343
      %v3345 = vpop.f32.mrb[0].mxu0
      %3346 = vmatprep.mubr.f32.mxu0 %v2493
      %3347 = vmatmul.mubr.f32.gmra.mrb[0].mxu0 %v2486
      %v3348 = vpop.f32.mrb[0].mxu0
      %v3349 = vadd.f32 %v3124, %v3348
      %v3350 = vpop.f32.mrb[0].mxu0
      %3351 = vmatprep.mubr.f32.mxu0 %v2495
      %3352 = vmatmul.mubr.f32.gmra.mrb[0].mxu0 %v2488
      %v3353 = vpop.f32.mrb[0].mxu0
      %v3354 = vadd.f32 %v3129, %v3353
      %v3355 = vpop.f32.mrb[0].mxu0
      %3356 = vdwg.mxu0
      %3357 = vmatprep.subr.mxu0 0.0
      %3358 = vmatpush1.msra.mxu0 %v2611
      %3359 = vmatprep.subr.mxu0 0.0
      %3360 = vmatpush1.msra.mxu0 %v2612
      %3361 = vmatprep.subr.mxu0 0.0
      %3362 = vmatpush1.msra.mxu0 %v2613
      %3363 = vmatprep.subr.mxu0 0.0
      %3364 = vmatpush1.msra.mxu0 %v2614
      %3365 = vmatprep.subr.mxu0 0.0
      %3366 = vmatpush1.msra.mxu0 %v2615
      %3367 = vmatprep.subr.mxu0 0.0
      %3368 = vmatpush1.msra.mxu0 %v2616
      %3369 = vmatprep.subr.mxu0 0.0
      %3370 = vmatpush1.msra.mxu0 %v2617
      %3371 = vmatprep.subr.mxu0 0.0
      %3372 = vmatpush1.msra.mxu0 %v2618
      %3373 = vmatprep.subr.mxu0 0.0
      %3374 = vmatpush1.msra.mxu0 %v2619
      %3375 = vmatprep.subr.mxu0 0.0
      %3376 = vmatpush1.msra.mxu0 %v2620
      %3377 = vmatprep.subr.mxu0 0.0
      %3378 = vmatpush1.msra.mxu0 %v2621
      %3379 = vmatprep.subr.mxu0 0.0
      %3380 = vmatpush1.msra.mxu0 %v2622
      %3381 = vmatprep.subr.mxu0 0.0
      %3382 = vmatpush1.msra.mxu0 %v2623
      %3383 = vmatprep.subr.mxu0 0.0
      %3384 = vmatpush1.msra.mxu0 %v2624
      %3385 = vmatprep.subr.mxu0 0.0
      %3386 = vmatpush1.msra.mxu0 %v2625
      %3387 = vmatprep.subr.mxu0 0.0
      %3388 = vmatpush1.msra.mxu0 %v2626
      %3389 = vmatprep.subr.mxu0 0.0
      %3390 = vmatpush1.msra.mxu0 %v2627
      %3391 = vmatprep.subr.mxu0 0.0
      %3392 = vmatpush1.msra.mxu0 %v2628
      %3393 = vmatprep.subr.mxu0 0.0
      %3394 = vmatpush1.msra.mxu0 %v2629
      %3395 = vmatprep.subr.mxu0 0.0
      %3396 = vmatpush1.msra.mxu0 %v2630
      %3397 = vmatprep.subr.mxu0 0.0
      %3398 = vmatpush1.msra.mxu0 %v2631
      %3399 = vmatprep.subr.mxu0 0.0
      %3400 = vmatpush1.msra.mxu0 %v2632
      %3401 = vmatprep.subr.mxu0 0.0
      %3402 = vmatpush1.msra.mxu0 %v2633
      %3403 = vmatprep.subr.mxu0 0.0
      %3404 = vmatpush1.msra.mxu0 %v2634
      %3405 = vmatprep.subr.mxu0 0.0
      %3406 = vmatpush1.msra.mxu0 %v2635
      %3407 = vmatprep.subr.mxu0 0.0
      %3408 = vmatpush1.msra.mxu0 %v2636
      %3409 = vmatprep.subr.mxu0 0.0
      %3410 = vmatpush1.msra.mxu0 %v2637
      %3411 = vmatprep.subr.mxu0 0.0
      %3412 = vmatpush1.msra.mxu0 %v2638
      %3413 = vmatprep.subr.mxu0 0.0
      %3414 = vmatpush1.msra.mxu0 %v2639
      %3415 = vmatprep.subr.mxu0 0.0
      %3416 = vmatpush1.msra.mxu0 %v2640
      %3417 = vmatprep.subr.mxu0 0.0
      %3418 = vmatpush1.msra.mxu0 %v2641
      %3419 = vmatprep.subr.mxu0 0.0
      %3420 = vmatpush1.msra.mxu0 %v2642
      %3421 = vmatprep.mubr.f32.mxu0 %v2269
      %3422 = vmatmul.mubr.f32.gmra.mrb[0].mxu0 %v2161
      %v3423 = vpop.f32.mrb[0].mxu0
      %v3424 = vadd.f32 %v3199, %v3423
      %v3425 = vpop.f32.mrb[0].mxu0
      %3426 = vmatprep.mubr.f32.mxu0 %v2271
      %3427 = vmatmul.mubr.f32.gmra.mrb[0].mxu0 %v2162
      %v3428 = vpop.f32.mrb[0].mxu0
      %v3429 = vadd.f32 %v3204, %v3428
      %v3430 = vpop.f32.mrb[0].mxu0
      %3431 = vmatprep.mubr.f32.mxu0 %v2274
      %3432 = vmatmul.mubr.f32.gmra.mrb[0].mxu0 %v2164
      %v3433 = vpop.f32.mrb[0].mxu0
      %v3434 = vadd.f32 %v3209, %v3433
      %v3435 = vpop.f32.mrb[0].mxu0
      %3436 = vmatprep.mubr.f32.mxu0 %v2276
      %3437 = vmatmul.mubr.f32.gmra.mrb[0].mxu0 %v2165
      %v3438 = vpop.f32.mrb[0].mxu0
      %v3439 = vadd.f32 %v3214, %v3438
      %v3440 = vpop.f32.mrb[0].mxu0
      %3441 = vmatprep.mubr.f32.mxu0 %v2279
      %3442 = vmatmul.mubr.f32.gmra.mrb[0].mxu0 %v2167
      %v3443 = vpop.f32.mrb[0].mxu0
      %v3444 = vadd.f32 %v3219, %v3443
      %v3445 = vpop.f32.mrb[0].mxu0
      %3446 = vmatprep.mubr.f32.mxu0 %v2281
      %3447 = vmatmul.mubr.f32.gmra.mrb[0].mxu0 %v2168
      %v3448 = vpop.f32.mrb[0].mxu0
      %v3449 = vadd.f32 %v3224, %v3448
      %v3450 = vpop.f32.mrb[0].mxu0
      %3451 = vmatprep.mubr.f32.mxu0 %v2284
      %3452 = vmatmul.mubr.f32.gmra.mrb[0].mxu0 %v2170
      %v3453 = vpop.f32.mrb[0].mxu0
      %v3454 = vadd.f32 %v3229, %v3453
      %v3455 = vpop.f32.mrb[0].mxu0
      %3456 = vmatprep.mubr.f32.mxu0 %v2286
      %3457 = vmatmul.mubr.f32.gmra.mrb[0].mxu0 %v2171
      %v3458 = vpop.f32.mrb[0].mxu0
      %v3459 = vadd.f32 %v3234, %v3458
      %v3460 = vpop.f32.mrb[0].mxu0
      %3461 = vmatprep.mubr.f32.mxu0 %v2289
      %3462 = vmatmul.mubr.f32.gmra.mrb[0].mxu0 %v2173
      %v3463 = vpop.f32.mrb[0].mxu0
      %v3464 = vadd.f32 %v3239, %v3463
      %v3465 = vpop.f32.mrb[0].mxu0
      %3466 = vmatprep.mubr.f32.mxu0 %v2291
      %3467 = vmatmul.mubr.f32.gmra.mrb[0].mxu0 %v2174
      %v3468 = vpop.f32.mrb[0].mxu0
      %v3469 = vadd.f32 %v3244, %v3468
      %v3470 = vpop.f32.mrb[0].mxu0
      %3471 = vmatprep.mubr.f32.mxu0 %v2294
      %3472 = vmatmul.mubr.f32.gmra.mrb[0].mxu0 %v2176
      %v3473 = vpop.f32.mrb[0].mxu0
      %v3474 = vadd.f32 %v3249, %v3473
      %v3475 = vpop.f32.mrb[0].mxu0
      %3476 = vmatprep.mubr.f32.mxu0 %v2296
      %3477 = vmatmul.mubr.f32.gmra.mrb[0].mxu0 %v2177
      %v3478 = vpop.f32.mrb[0].mxu0
      %v3479 = vadd.f32 %v3254, %v3478
      %v3480 = vpop.f32.mrb[0].mxu0
      %3481 = vmatprep.mubr.f32.mxu0 %v2299
      %3482 = vmatmul.mubr.f32.gmra.mrb[0].mxu0 %v2179
      %v3483 = vpop.f32.mrb[0].mxu0
      %v3484 = vadd.f32 %v3259, %v3483
      %v3485 = vpop.f32.mrb[0].mxu0
      %3486 = vmatprep.mubr.f32.mxu0 %v2301
      %3487 = vmatmul.mubr.f32.gmra.mrb[0].mxu0 %v2180
      %v3488 = vpop.f32.mrb[0].mxu0
      %v3489 = vadd.f32 %v3264, %v3488
      %v3490 = vpop.f32.mrb[0].mxu0
      %3491 = vmatprep.mubr.f32.mxu0 %v2304
      %3492 = vmatmul.mubr.f32.gmra.mrb[0].mxu0 %v2182
      %v3493 = vpop.f32.mrb[0].mxu0
      %v3494 = vadd.f32 %v3269, %v3493
      %v3495 = vpop.f32.mrb[0].mxu0
      %3496 = vmatprep.mubr.f32.mxu0 %v2306
      %3497 = vmatmul.mubr.f32.gmra.mrb[0].mxu0 %v2183
      %v3498 = vpop.f32.mrb[0].mxu0
      %v3499 = vadd.f32 %v3274, %v3498
      %v3500 = vpop.f32.mrb[0].mxu0
      %3501 = vmatprep.mubr.f32.mxu0 %v2309
      %3502 = vmatmul.mubr.f32.gmra.mrb[0].mxu0 %v2185
      %v3503 = vpop.f32.mrb[0].mxu0
      %v3504 = vadd.f32 %v3279, %v3503
      %v3505 = vpop.f32.mrb[0].mxu0
      %3506 = vmatprep.mubr.f32.mxu0 %v2311
      %3507 = vmatmul.mubr.f32.gmra.mrb[0].mxu0 %v2186
      %v3508 = vpop.f32.mrb[0].mxu0
      %v3509 = vadd.f32 %v3284, %v3508
      %v3510 = vpop.f32.mrb[0].mxu0
      %3511 = vmatprep.mubr.f32.mxu0 %v2314
      %3512 = vmatmul.mubr.f32.gmra.mrb[0].mxu0 %v2188
      %v3513 = vpop.f32.mrb[0].mxu0
      %v3514 = vadd.f32 %v3289, %v3513
      %v3515 = vpop.f32.mrb[0].mxu0
      %3516 = vmatprep.mubr.f32.mxu0 %v2316
      %3517 = vmatmul.mubr.f32.gmra.mrb[0].mxu0 %v2189
      %v3518 = vpop.f32.mrb[0].mxu0
      %v3519 = vadd.f32 %v3294, %v3518
      %v3520 = vpop.f32.mrb[0].mxu0
      %3521 = vmatprep.mubr.f32.mxu0 %v2319
      %3522 = vmatmul.mubr.f32.gmra.mrb[0].mxu0 %v2191
      %v3523 = vpop.f32.mrb[0].mxu0
      %v3524 = vadd.f32 %v3299, %v3523
      %v3525 = vpop.f32.mrb[0].mxu0
      %3526 = vmatprep.mubr.f32.mxu0 %v2321
      %3527 = vmatmul.mubr.f32.gmra.mrb[0].mxu0 %v2192
      %v3528 = vpop.f32.mrb[0].mxu0
      %v3529 = vadd.f32 %v3304, %v3528
      %v3530 = vpop.f32.mrb[0].mxu0
      %3531 = vmatprep.mubr.f32.mxu0 %v2324
      %3532 = vmatmul.mubr.f32.gmra.mrb[0].mxu0 %v2194
      %v3533 = vpop.f32.mrb[0].mxu0
      %v3534 = vadd.f32 %v3309, %v3533
      %v3535 = vpop.f32.mrb[0].mxu0
      %3536 = vmatprep.mubr.f32.mxu0 %v2326
      %3537 = vmatmul.mubr.f32.gmra.mrb[0].mxu0 %v2195
      %v3538 = vpop.f32.mrb[0].mxu0
      %v3539 = vadd.f32 %v3314, %v3538
      %v3540 = vpop.f32.mrb[0].mxu0
      %3541 = vmatprep.mubr.f32.mxu0 %v2329
      %3542 = vmatmul.mubr.f32.gmra.mrb[0].mxu0 %v2197
      %v3543 = vpop.f32.mrb[0].mxu0
      %v3544 = vadd.f32 %v3319, %v3543
      %v3545 = vpop.f32.mrb[0].mxu0
      %3546 = vmatprep.mubr.f32.mxu0 %v2331
      %3547 = vmatmul.mubr.f32.gmra.mrb[0].mxu0 %v2198
      %v3548 = vpop.f32.mrb[0].mxu0
      %v3549 = vadd.f32 %v3324, %v3548
      %v3550 = vpop.f32.mrb[0].mxu0
      %3551 = vmatprep.mubr.f32.mxu0 %v2334
      %3552 = vmatmul.mubr.f32.gmra.mrb[0].mxu0 %v2200
      %v3553 = vpop.f32.mrb[0].mxu0
      %v3554 = vadd.f32 %v3329, %v3553
      %v3555 = vpop.f32.mrb[0].mxu0
      %3556 = vmatprep.mubr.f32.mxu0 %v2336
      %3557 = vmatmul.mubr.f32.gmra.mrb[0].mxu0 %v2201
      %v3558 = vpop.f32.mrb[0].mxu0
      %v3559 = vadd.f32 %v3334, %v3558
      %v3560 = vpop.f32.mrb[0].mxu0
      %3561 = vmatprep.mubr.f32.mxu0 %v2486
      %3562 = vmatmul.mubr.f32.gmra.mrb[0].mxu0 %v2203
      %v3563 = vpop.f32.mrb[0].mxu0
      %v3564 = vadd.f32 %v3339, %v3563
      %v3565 = vpop.f32.mrb[0].mxu0
      %3566 = vmatprep.mubr.f32.mxu0 %v2488
      %3567 = vmatmul.mubr.f32.gmra.mrb[0].mxu0 %v2204
      %v3568 = vpop.f32.mrb[0].mxu0
      %v3569 = vadd.f32 %v3344, %v3568
      %v3570 = vpop.f32.mrb[0].mxu0
      %3571 = vmatprep.mubr.f32.mxu0 %v2503
      %3572 = vmatmul.mubr.f32.gmra.mrb[0].mxu0 %v2206
      %v3573 = vpop.f32.mrb[0].mxu0
      %v3574 = vadd.f32 %v3349, %v3573
      %v3575 = vpop.f32.mrb[0].mxu0
      %3576 = vmatprep.mubr.f32.mxu0 %v2505
      %3577 = vmatmul.mubr.f32.gmra.mrb[0].mxu0 %v2207
      %v3578 = vpop.f32.mrb[0].mxu0
      %v3579 = vadd.f32 %v3354, %v3578
      %v3580 = vpop.f32.mrb[0].mxu0
      %3581 = vdwg.mxu0
      %3582 = vmatprep.subr.mxu0 0.0
      %3583 = vmatpush1.msra.mxu0 %v2643
      %3584 = vmatprep.subr.mxu0 0.0
      %3585 = vmatpush1.msra.mxu0 %v2644
      %3586 = vmatprep.subr.mxu0 0.0
      %3587 = vmatpush1.msra.mxu0 %v2645
      %3588 = vmatprep.subr.mxu0 0.0
      %3589 = vmatpush1.msra.mxu0 %v2646
      %3590 = vmatprep.subr.mxu0 0.0
      %3591 = vmatpush1.msra.mxu0 %v2647
      %3592 = vmatprep.subr.mxu0 0.0
      %3593 = vmatpush1.msra.mxu0 %v2648
      %3594 = vmatprep.subr.mxu0 0.0
      %3595 = vmatpush1.msra.mxu0 %v2649
      %3596 = vmatprep.subr.mxu0 0.0
      %3597 = vmatpush1.msra.mxu0 %v2650
      %3598 = vmatprep.subr.mxu0 0.0
      %3599 = vmatpush1.msra.mxu0 %v2651
      %3600 = vmatprep.subr.mxu0 0.0
      %3601 = vmatpush1.msra.mxu0 %v2652
      %3602 = vmatprep.subr.mxu0 0.0
      %3603 = vmatpush1.msra.mxu0 %v2653
      %3604 = vmatprep.subr.mxu0 0.0
      %3605 = vmatpush1.msra.mxu0 %v2654
      %3606 = vmatprep.subr.mxu0 0.0
      %3607 = vmatpush1.msra.mxu0 %v2655
      %3608 = vmatprep.subr.mxu0 0.0
      %3609 = vmatpush1.msra.mxu0 %v2656
      %3610 = vmatprep.subr.mxu0 0.0
      %3611 = vmatpush1.msra.mxu0 %v2657
      %3612 = vmatprep.subr.mxu0 0.0
      %3613 = vmatpush1.msra.mxu0 %v2658
      %3614 = vmatprep.subr.mxu0 0.0
      %3615 = vmatpush1.msra.mxu0 %v2659
      %3616 = vmatprep.subr.mxu0 0.0
      %3617 = vmatpush1.msra.mxu0 %v2660
      %3618 = vmatprep.subr.mxu0 0.0
      %3619 = vmatpush1.msra.mxu0 %v2661
      %3620 = vmatprep.subr.mxu0 0.0
      %3621 = vmatpush1.msra.mxu0 %v2662
      %3622 = vmatprep.subr.mxu0 0.0
      %3623 = vmatpush1.msra.mxu0 %v2663
      %3624 = vmatprep.subr.mxu0 0.0
      %3625 = vmatpush1.msra.mxu0 %v2664
      %3626 = vmatprep.subr.mxu0 0.0
      %3627 = vmatpush1.msra.mxu0 %v2665
      %3628 = vmatprep.subr.mxu0 0.0
      %3629 = vmatpush1.msra.mxu0 %v2666
      %3630 = vmatprep.subr.mxu0 0.0
      %3631 = vmatpush1.msra.mxu0 %v2667
      %3632 = vmatprep.subr.mxu0 0.0
      %3633 = vmatpush1.msra.mxu0 %v2668
      %3634 = vmatprep.subr.mxu0 0.0
      %3635 = vmatpush1.msra.mxu0 %v2669
      %3636 = vmatprep.subr.mxu0 0.0
      %3637 = vmatpush1.msra.mxu0 %v2670
      %3638 = vmatprep.subr.mxu0 0.0
      %3639 = vmatpush1.msra.mxu0 %v2671
      %3640 = vmatprep.subr.mxu0 0.0
      %3641 = vmatpush1.msra.mxu0 %v2672
      %3642 = vmatprep.subr.mxu0 0.0
      %3643 = vmatpush1.msra.mxu0 %v2673
      %3644 = vmatprep.subr.mxu0 0.0
      %3645 = vmatpush1.msra.mxu0 %v2674
      %3646 = vmatprep.mubr.f32.mxu0 %v498
      %3647 = vmatmul.mubr.f32.gmra.mrb[0].mxu0 %v2381
      %v3648 = vpop.f32.mrb[0].mxu0
      %v3649 = vadd.f32 %v3424, %v3648
      %v3650 = vpop.f32.mrb[0].mxu0
      %3651 = vmatprep.mubr.f32.mxu0 %v500
      %3652 = vmatmul.mubr.f32.gmra.mrb[0].mxu0 %v2383
      %v3653 = vpop.f32.mrb[0].mxu0
      %v3654 = vadd.f32 %v3429, %v3653
      %v3655 = vpop.f32.mrb[0].mxu0
      %3656 = vmatprep.mubr.f32.mxu0 %v503
      %3657 = vmatmul.mubr.f32.gmra.mrb[0].mxu0 %v2386
      %v3658 = vpop.f32.mrb[0].mxu0
      %v3659 = vadd.f32 %v3434, %v3658
      %v3660 = vpop.f32.mrb[0].mxu0
      %3661 = vmatprep.mubr.f32.mxu0 %v505
      %3662 = vmatmul.mubr.f32.gmra.mrb[0].mxu0 %v2388
      %v3663 = vpop.f32.mrb[0].mxu0
      %v3664 = vadd.f32 %v3439, %v3663
      %v3665 = vpop.f32.mrb[0].mxu0
      %3666 = vmatprep.mubr.f32.mxu0 %v508
      %3667 = vmatmul.mubr.f32.gmra.mrb[0].mxu0 %v2391
      %v3668 = vpop.f32.mrb[0].mxu0
      %v3669 = vadd.f32 %v3444, %v3668
      %v3670 = vpop.f32.mrb[0].mxu0
      %3671 = vmatprep.mubr.f32.mxu0 %v510
      %3672 = vmatmul.mubr.f32.gmra.mrb[0].mxu0 %v2393
      %v3673 = vpop.f32.mrb[0].mxu0
      %v3674 = vadd.f32 %v3449, %v3673
      %v3675 = vpop.f32.mrb[0].mxu0
      %3676 = vmatprep.mubr.f32.mxu0 %v513
      %3677 = vmatmul.mubr.f32.gmra.mrb[0].mxu0 %v2396
      %v3678 = vpop.f32.mrb[0].mxu0
      %v3679 = vadd.f32 %v3454, %v3678
      %v3680 = vpop.f32.mrb[0].mxu0
      %3681 = vmatprep.mubr.f32.mxu0 %v515
      %3682 = vmatmul.mubr.f32.gmra.mrb[0].mxu0 %v2398
      %v3683 = vpop.f32.mrb[0].mxu0
      %v3684 = vadd.f32 %v3459, %v3683
      %v3685 = vpop.f32.mrb[0].mxu0
      %3686 = vmatprep.mubr.f32.mxu0 %v518
      %3687 = vmatmul.mubr.f32.gmra.mrb[0].mxu0 %v2401
      %v3688 = vpop.f32.mrb[0].mxu0
      %v3689 = vadd.f32 %v3464, %v3688
      %v3690 = vpop.f32.mrb[0].mxu0
      %3691 = vmatprep.mubr.f32.mxu0 %v520
      %3692 = vmatmul.mubr.f32.gmra.mrb[0].mxu0 %v2403
      %v3693 = vpop.f32.mrb[0].mxu0
      %v3694 = vadd.f32 %v3469, %v3693
      %v3695 = vpop.f32.mrb[0].mxu0
      %3696 = vmatprep.mubr.f32.mxu0 %v523
      %3697 = vmatmul.mubr.f32.gmra.mrb[0].mxu0 %v2406
      %v3698 = vpop.f32.mrb[0].mxu0
      %v3699 = vadd.f32 %v3474, %v3698
      %v3700 = vpop.f32.mrb[0].mxu0
      %3701 = vmatprep.mubr.f32.mxu0 %v525
      %3702 = vmatmul.mubr.f32.gmra.mrb[0].mxu0 %v2408
      %v3703 = vpop.f32.mrb[0].mxu0
      %v3704 = vadd.f32 %v3479, %v3703
      %v3705 = vpop.f32.mrb[0].mxu0
      %3706 = vmatprep.mubr.f32.mxu0 %v528
      %3707 = vmatmul.mubr.f32.gmra.mrb[0].mxu0 %v2411
      %v3708 = vpop.f32.mrb[0].mxu0
      %v3709 = vadd.f32 %v3484, %v3708
      %v3710 = vpop.f32.mrb[0].mxu0
      %3711 = vmatprep.mubr.f32.mxu0 %v530
      %3712 = vmatmul.mubr.f32.gmra.mrb[0].mxu0 %v2413
      %v3713 = vpop.f32.mrb[0].mxu0
      %v3714 = vadd.f32 %v3489, %v3713
      %v3715 = vpop.f32.mrb[0].mxu0
      %3716 = vmatprep.mubr.f32.mxu0 %v533
      %3717 = vmatmul.mubr.f32.gmra.mrb[0].mxu0 %v2416
      %v3718 = vpop.f32.mrb[0].mxu0
      %v3719 = vadd.f32 %v3494, %v3718
      %v3720 = vpop.f32.mrb[0].mxu0
      %3721 = vmatprep.mubr.f32.mxu0 %v535
      %3722 = vmatmul.mubr.f32.gmra.mrb[0].mxu0 %v2418
      %v3723 = vpop.f32.mrb[0].mxu0
      %v3724 = vadd.f32 %v3499, %v3723
      %v3725 = vpop.f32.mrb[0].mxu0
      %3726 = vmatprep.mubr.f32.mxu0 %v538
      %3727 = vmatmul.mubr.f32.gmra.mrb[0].mxu0 %v2421
      %v3728 = vpop.f32.mrb[0].mxu0
      %v3729 = vadd.f32 %v3504, %v3728
      %v3730 = vpop.f32.mrb[0].mxu0
      %3731 = vmatprep.mubr.f32.mxu0 %v540
      %3732 = vmatmul.mubr.f32.gmra.mrb[0].mxu0 %v2423
      %v3733 = vpop.f32.mrb[0].mxu0
      %v3734 = vadd.f32 %v3509, %v3733
      %v3735 = vpop.f32.mrb[0].mxu0
      %3736 = vmatprep.mubr.f32.mxu0 %v543
      %3737 = vmatmul.mubr.f32.gmra.mrb[0].mxu0 %v2426
      %v3738 = vpop.f32.mrb[0].mxu0
      %v3739 = vadd.f32 %v3514, %v3738
      %v3740 = vpop.f32.mrb[0].mxu0
      %3741 = vmatprep.mubr.f32.mxu0 %v545
      %3742 = vmatmul.mubr.f32.gmra.mrb[0].mxu0 %v2428
      %v3743 = vpop.f32.mrb[0].mxu0
      %v3744 = vadd.f32 %v3519, %v3743
      %v3745 = vpop.f32.mrb[0].mxu0
      %3746 = vmatprep.mubr.f32.mxu0 %v548
      %3747 = vmatmul.mubr.f32.gmra.mrb[0].mxu0 %v2431
      %v3748 = vpop.f32.mrb[0].mxu0
      %v3749 = vadd.f32 %v3524, %v3748
      %v3750 = vpop.f32.mrb[0].mxu0
      %3751 = vmatprep.mubr.f32.mxu0 %v550
      %3752 = vmatmul.mubr.f32.gmra.mrb[0].mxu0 %v2433
      %v3753 = vpop.f32.mrb[0].mxu0
      %v3754 = vadd.f32 %v3529, %v3753
      %v3755 = vpop.f32.mrb[0].mxu0
      %3756 = vmatprep.mubr.f32.mxu0 %v553
      %3757 = vmatmul.mubr.f32.gmra.mrb[0].mxu0 %v2436
      %v3758 = vpop.f32.mrb[0].mxu0
      %v3759 = vadd.f32 %v3534, %v3758
      %v3760 = vpop.f32.mrb[0].mxu0
      %3761 = vmatprep.mubr.f32.mxu0 %v555
      %3762 = vmatmul.mubr.f32.gmra.mrb[0].mxu0 %v2438
      %v3763 = vpop.f32.mrb[0].mxu0
      %v3764 = vadd.f32 %v3539, %v3763
      %v3765 = vpop.f32.mrb[0].mxu0
      %3766 = vmatprep.mubr.f32.mxu0 %v558
      %3767 = vmatmul.mubr.f32.gmra.mrb[0].mxu0 %v2441
      %v3768 = vpop.f32.mrb[0].mxu0
      %v3769 = vadd.f32 %v3544, %v3768
      %v3770 = vpop.f32.mrb[0].mxu0
      %3771 = vmatprep.mubr.f32.mxu0 %v560
      %3772 = vmatmul.mubr.f32.gmra.mrb[0].mxu0 %v2443
      %v3773 = vpop.f32.mrb[0].mxu0
      %v3774 = vadd.f32 %v3549, %v3773
      %v3775 = vpop.f32.mrb[0].mxu0
      %3776 = vmatprep.mubr.f32.mxu0 %v563
      %3777 = vmatmul.mubr.f32.gmra.mrb[0].mxu0 %v2446
      %v3778 = vpop.f32.mrb[0].mxu0
      %v3779 = vadd.f32 %v3554, %v3778
      %v3780 = vpop.f32.mrb[0].mxu0
      %3781 = vmatprep.mubr.f32.mxu0 %v565
      %3782 = vmatmul.mubr.f32.gmra.mrb[0].mxu0 %v2448
      %v3783 = vpop.f32.mrb[0].mxu0
      %v3784 = vadd.f32 %v3559, %v3783
      %v3785 = vpop.f32.mrb[0].mxu0
      %3786 = vmatprep.mubr.f32.mxu0 %v568
      %3787 = vmatmul.mubr.f32.gmra.mrb[0].mxu0 %v2493
      %v3788 = vpop.f32.mrb[0].mxu0
      %v3789 = vadd.f32 %v3564, %v3788
      %v3790 = vpop.f32.mrb[0].mxu0
      %3791 = vmatprep.mubr.f32.mxu0 %v570
      %3792 = vmatmul.mubr.f32.gmra.mrb[0].mxu0 %v2495
      %v3793 = vpop.f32.mrb[0].mxu0
      %v3794 = vadd.f32 %v3569, %v3793
      %v3795 = vpop.f32.mrb[0].mxu0
      %3796 = vmatprep.mubr.f32.mxu0 %v721
      %3797 = vmatmul.mubr.f32.gmra.mrb[0].mxu0 %v2510
      %v3798 = vpop.f32.mrb[0].mxu0
      %v3799 = vadd.f32 %v3574, %v3798
      %v3800 = vpop.f32.mrb[0].mxu0
      %3801 = vmatprep.mubr.f32.mxu0 %v723
      %3802 = vmatmul.mubr.f32.gmra.mrb[0].mxu0 %v2512
      %v3803 = vpop.f32.mrb[0].mxu0
      %v3804 = vadd.f32 %v3579, %v3803
      %v3805 = vpop.f32.mrb[0].mxu0
      %3806 = vdwg.mxu0
      %vm3807 = vcmp.ge.f32.partialorder %v3649, 0.0
      %vm3808 = vcmp.ge.f32.partialorder %v3654, 0.0
      %vm3809 = vcmp.ge.f32.partialorder %v3659, 0.0
      %vm3810 = vcmp.ge.f32.partialorder %v3664, 0.0
      %vm3811 = vcmp.ge.f32.partialorder %v3669, 0.0
      %vm3812 = vcmp.ge.f32.partialorder %v3674, 0.0
      %vm3813 = vcmp.ge.f32.partialorder %v3679, 0.0
      %vm3814 = vcmp.ge.f32.partialorder %v3684, 0.0
      %vm3815 = vcmp.ge.f32.partialorder %v3689, 0.0
      %vm3816 = vcmp.ge.f32.partialorder %v3694, 0.0
      %vm3817 = vcmp.ge.f32.partialorder %v3699, 0.0
      %vm3818 = vcmp.ge.f32.partialorder %v3704, 0.0
      %vm3819 = vcmp.ge.f32.partialorder %v3709, 0.0
      %vm3820 = vcmp.ge.f32.partialorder %v3714, 0.0
      %vm3821 = vcmp.ge.f32.partialorder %v3719, 0.0
      %vm3822 = vcmp.ge.f32.partialorder %v3724, 0.0
      %vm3823 = vcmp.ge.f32.partialorder %v3729, 0.0
      %vm3824 = vcmp.ge.f32.partialorder %v3734, 0.0
      %vm3825 = vcmp.ge.f32.partialorder %v3739, 0.0
      %vm3826 = vcmp.ge.f32.partialorder %v3744, 0.0
      %vm3827 = vcmp.ge.f32.partialorder %v3749, 0.0
      %vm3828 = vcmp.ge.f32.partialorder %v3754, 0.0
      %vm3829 = vcmp.ge.f32.partialorder %v3759, 0.0
      %vm3830 = vcmp.ge.f32.partialorder %v3764, 0.0
      %vm3831 = vcmp.ge.f32.partialorder %v3769, 0.0
      %vm3832 = vcmp.ge.f32.partialorder %v3774, 0.0
      %vm3833 = vcmp.ge.f32.partialorder %v3779, 0.0
      %vm3834 = vcmp.ge.f32.partialorder %v3784, 0.0
      %vm3835 = vcmp.ge.f32.partialorder %v3789, 0.0
      %vm3836 = vcmp.ge.f32.partialorder %v3794, 0.0
      %vm3837 = vcmp.ge.f32.partialorder %v3799, 0.0
      %vm3838 = vcmp.ge.f32.partialorder %v3804, 0.0
      %v3839 = vmul.f32 %v3649, 0.1
      %v3840 = vmul.f32 %v3654, 0.1
      %v3841 = vmul.f32 %v3659, 0.1
      %v3842 = vmul.f32 %v3664, 0.1
      %v3843 = vmul.f32 %v3669, 0.1
      %v3844 = vmul.f32 %v3674, 0.1
      %v3845 = vmul.f32 %v3679, 0.1
      %v3846 = vmul.f32 %v3684, 0.1
      %v3847 = vmul.f32 %v3689, 0.1
      %v3848 = vmul.f32 %v3694, 0.1
      %v3849 = vmul.f32 %v3699, 0.1
      %v3850 = vmul.f32 %v3704, 0.1
      %v3851 = vmul.f32 %v3709, 0.1
      %v3852 = vmul.f32 %v3714, 0.1
      %v3853 = vmul.f32 %v3719, 0.1
      %v3854 = vmul.f32 %v3724, 0.1
      %v3855 = vmul.f32 %v3729, 0.1
      %v3856 = vmul.f32 %v3734, 0.1
      %v3857 = vmul.f32 %v3739, 0.1
      %v3858 = vmul.f32 %v3744, 0.1
      %v3859 = vmul.f32 %v3749, 0.1
      %v3860 = vmul.f32 %v3754, 0.1
      %v3861 = vmul.f32 %v3759, 0.1
      %v3862 = vmul.f32 %v3764, 0.1
      %v3863 = vmul.f32 %v3769, 0.1
      %v3864 = vmul.f32 %v3774, 0.1
      %v3865 = vmul.f32 %v3779, 0.1
      %v3866 = vmul.f32 %v3784, 0.1
      %v3867 = vmul.f32 %v3789, 0.1
      %v3868 = vmul.f32 %v3794, 0.1
      %v3869 = vmul.f32 %v3799, 0.1
      %v3870 = vmul.f32 %v3804, 0.1
      %v3871 = vsel %vm3807, %v3649, %v3839
      %v3872 = vsel %vm3808, %v3654, %v3840
      %v3873 = vsel %vm3809, %v3659, %v3841
      %v3874 = vsel %vm3810, %v3664, %v3842
      %v3875 = vsel %vm3811, %v3669, %v3843
      %v3876 = vsel %vm3812, %v3674, %v3844
      %v3877 = vsel %vm3813, %v3679, %v3845
      %v3878 = vsel %vm3814, %v3684, %v3846
      %v3879 = vsel %vm3815, %v3689, %v3847
      %v3880 = vsel %vm3816, %v3694, %v3848
      %v3881 = vsel %vm3817, %v3699, %v3849
      %v3882 = vsel %vm3818, %v3704, %v3850
      %v3883 = vsel %vm3819, %v3709, %v3851
      %v3884 = vsel %vm3820, %v3714, %v3852
      %v3885 = vsel %vm3821, %v3719, %v3853
      %v3886 = vsel %vm3822, %v3724, %v3854
      %v3887 = vsel %vm3823, %v3729, %v3855
      %v3888 = vsel %vm3824, %v3734, %v3856
      %v3889 = vsel %vm3825, %v3739, %v3857
      %v3890 = vsel %vm3826, %v3744, %v3858
      %v3891 = vsel %vm3827, %v3749, %v3859
      %v3892 = vsel %vm3828, %v3754, %v3860
      %v3893 = vsel %vm3829, %v3759, %v3861
      %v3894 = vsel %vm3830, %v3764, %v3862
      %v3895 = vsel %vm3831, %v3769, %v3863
      %v3896 = vsel %vm3832, %v3774, %v3864
      %v3897 = vsel %vm3833, %v3779, %v3865
      %v3898 = vsel %vm3834, %v3784, %v3866
      %v3899 = vsel %vm3835, %v3789, %v3867
      %v3900 = vsel %vm3836, %v3794, %v3868
      %v3901 = vsel %vm3837, %v3799, %v3869
      %v3902 = vsel %vm3838, %v3804, %v3870
      %3903 = vst [vmem:[%s224] sm:$0xff] %v3871
      %3904 = vst [vmem:[%s224 + $0x8] sm:$0xff] %v3872
      %3905 = vst [vmem:[%s224 + $0x10] sm:$0xff] %v3873
      %3906 = vst [vmem:[%s224 + $0x18] sm:$0xff] %v3874
      %3907 = vst [vmem:[%s224 + $0x20] sm:$0xff] %v3875
      %3908 = vst [vmem:[%s224 + $0x28] sm:$0xff] %v3876
      %3909 = vst [vmem:[%s224 + $0x30] sm:$0xff] %v3877
      %3910 = vst [vmem:[%s224 + $0x38] sm:$0xff] %v3878
      %3911 = vst [vmem:[%s224 + $0x40] sm:$0xff] %v3879
      %3912 = vst [vmem:[%s224 + $0x48] sm:$0xff] %v3880
      %3913 = vst [vmem:[%s224 + $0x50] sm:$0xff] %v3881
      %3914 = vst [vmem:[%s224 + $0x58] sm:$0xff] %v3882
      %3915 = vst [vmem:[%s224 + $0x60] sm:$0xff] %v3883
      %3916 = vst [vmem:[%s224 + $0x68] sm:$0xff] %v3884
      %3917 = vst [vmem:[%s224 + $0x70] sm:$0xff] %v3885
      %3918 = vst [vmem:[%s224 + $0x78] sm:$0xff] %v3886
      %3919 = vst [vmem:[%s224 + $0x80] sm:$0xff] %v3887
      %3920 = vst [vmem:[%s224 + $0x88] sm:$0xff] %v3888
      %3921 = vst [vmem:[%s224 + $0x90] sm:$0xff] %v3889
      %3922 = vst [vmem:[%s224 + $0x98] sm:$0xff] %v3890
      %3923 = vst [vmem:[%s224 + $0xa0] sm:$0xff] %v3891
      %3924 = vst [vmem:[%s224 + $0xa8] sm:$0xff] %v3892
      %3925 = vst [vmem:[%s224 + $0xb0] sm:$0xff] %v3893
      %3926 = vst [vmem:[%s224 + $0xb8] sm:$0xff] %v3894
      %3927 = vst [vmem:[%s224 + $0xc0] sm:$0xff] %v3895
      %3928 = vst [vmem:[%s224 + $0xc8] sm:$0xff] %v3896
      %3929 = vst [vmem:[%s224 + $0xd0] sm:$0xff] %v3897
      %3930 = vst [vmem:[%s224 + $0xd8] sm:$0xff] %v3898
      %3931 = vst [vmem:[%s224 + $0xe0] sm:$0xff] %v3899
      %3932 = vst [vmem:[%s224 + $0xe8] sm:$0xff] %v3900
      %3933 = vst [vmem:[%s224 + $0xf0] sm:$0xff] %v3901
      %3934 = vst [vmem:[%s224 + $0xf8] sm:$0xff] %v3902
      %p3935 = scmp.lt.s32.totalorder %s16, 1
      %s3936 = scalar_select %p3935, %s16, 1
      %s3937 = smul.addr %s3936, 32
      %s3938 = smul.addr %s3937, 8
      %s3939 = scalar_lea.vmem %s5, %s3938
      // Predicated region
      $region41: #{residual_block.1} parent=39 // pred_check
        %p3940 = pneg %p144
      $region42: #{residual_block.1} parent=39 // pred_check_branch
        %3942 = sbr.rel (%p3940) target = $region44
      $region43: #{residual_block.1} parent=39 // pred_region
        _
      $region44: #{residual_block.1} parent=39 // pred_fallthru
        _
    $region40: #{residual_block.1} parent=5 // pred_fallthru
      _
    %p3943 = scmp.le.s32.totalorder 2, %s11
    // Predicated region
    $region45: #{residual_block.1} parent=5 // pred_check
      %p3944 = pneg %p3943
    $region46: #{residual_block.1} parent=5 // pred_check_branch
      %3946 = sbr.rel (%p3944) target = $region48
    $region47: #{residual_block.1} parent=5 // pred_region
      %s3947 = ssub.s32 %s11, 2
      // Predicated region
      $region49: #{residual_block.1} parent=47 // pred_check
        %p3948 = pneg %p150
      $region50: #{residual_block.1} parent=47 // pred_check_branch
        %3950 = sbr.rel (%p3948) target = $region52
      $region51: #{residual_block.1} parent=47 // pred_region
        %p3951 = scmp.lt.s32.totalorder %s17, 1
        %s3952 = scalar_select %p3951, %s17, 1
        %s3953 = smul.addr %s3952, 32
        %s3954 = smul.addr %s3953, 8
        %s3955 = scalar_lea.vmem %s5, %s3954
      $region52: #{residual_block.1} parent=47 // pred_fallthru
        _
    $region48: #{residual_block.1} parent=5 // pred_fallthru
      _
  $region6: #{residual_block.1} parent=0 // loop_footer
    %s15 = sadd.s32 1, %s11
  $region7: #{residual_block.1} parent=0 // loop_footer_branch
    %10 = sbr.rel target = $region3
  $region8: #{residual_block.1} parent=0 // loop_exit
    _

</llo_original>
